<compile_context>
chip_gen: v5e
topology: v5e:2x2
jax: 0.10.0
libtpu: 0.0.40
codegen_flags: <defaults>
</compile_context>

<pallas_src>
import numpy as np
import jax
import jax.numpy as jnp
from jax.experimental import pallas as pl
from jax.experimental.pallas import tpu as pltpu


# ----------------------------------------------------------------------------
# Same-padding helper (exact port of the torch helper; used by the reference)
# ----------------------------------------------------------------------------
def conv_same_padding(in_size, kernel, stride=1, dilation=1):
    effective_filter_size = (kernel - 1) * dilation + 1
    out_size = (in_size + stride - 1) // stride
    padding_needed = max(0, (out_size - 1) * stride + effective_filter_size - in_size)
    if padding_needed % 2 == 0:
        return padding_needed // 2, padding_needed // 2
    return (padding_needed - 1) // 2, (padding_needed + 1) // 2


def _round_up(x, m):
    return (x + m - 1) // m * m


def _geom(n, h):
    hp = h + 2                       # +1 zero-pad ring on each side (covers every conv here)
    img = hp * hp
    valid = n * img
    return dict(H=h, Hp=hp, Wp=hp, img=img, valid=valid, P=_round_up(valid, 128))


# ----------------------------------------------------------------------------
# Constant (numpy) builders
# ----------------------------------------------------------------------------
def _interior_mask(n, g):
    m = np.zeros((g["P"],), np.float32)
    for b in range(n):
        for i in range(1, g["H"] + 1):
            for j in range(1, g["H"] + 1):
                m[b * g["img"] + i * g["Wp"] + j] = 1.0
    return m


def _down_select(n, gi, go):
    """(P_in, P_out) 0/1: full-res conv value at padded (2+2i, 2+2j) of image b goes to
    padded (i+1, j+1) of the output resolution (stride-2 'same' sampling grid)."""
    dc = np.zeros((gi["P"], go["P"]), np.int8)
    for b in range(n):
        for i in range(go["H"]):
            for j in range(go["H"]):
                p_in = b * gi["img"] + (2 + 2 * i) * gi["Wp"] + (2 + 2 * j)
                p_out = b * go["img"] + (i + 1) * go["Wp"] + (j + 1)
                dc[p_in, p_out] = 1
    return dc


def _pool_select(n, g, out_cols):
    """(P_last, out_cols) 0/1: column b indicates the interior of image b."""
    pm = np.zeros((g["P"], out_cols), np.int8)
    for b in range(n):
        for i in range(1, g["H"] + 1):
            for j in range(1, g["H"] + 1):
                pm[b * g["img"] + i * g["Wp"] + j, b] = 1
    return pm


def _im2col_w(w_hwio, cin_pad=None):
    """HWIO weight -> (Cout, 9*Cin) im2col matrix, tap order (kh, kw)."""
    w = np.asarray(w_hwio, np.float32)
    kh, kw, ci, co = w.shape
    if cin_pad is not None and cin_pad > ci:
        w = np.pad(w, ((0, 0), (0, 0), (0, cin_pad - ci), (0, 0)))
        ci = cin_pad
    return w.reshape(kh * kw * ci, co).T


# ----------------------------------------------------------------------------
# Parameter init (deterministic, synthetic)
# ----------------------------------------------------------------------------
def init_conv(key, kh, kw, cin, cout):
    kwk, kbk = jax.random.split(key)
    fan_in = kh * kw * cin
    w = jax.random.normal(kwk, (kh, kw, cin, cout), jnp.float32) / jnp.sqrt(fan_in)
    b = 0.01 * jax.random.normal(kbk, (1, cout), jnp.float32)
    return {"w": w, "b": b}


def build_params(key, num_classes, depth, width):
    if (depth - 2) % 6 != 0:
        raise ValueError("depth must be 6n+2 (e.g. 20, 32, 44).")
    n = (depth - 2) // 6
    keys = iter(jax.random.split(key, 128))
    params = {"layer1": init_conv(next(keys), 3, 3, 3, width)}
    stacks = []
    num_filters = width
    input_nf = width
    for stack in range(3):
        for rb in range(n):
            strides = 2 if (stack > 0 and rb == 0) else 1
            blk = {
                "strides": strides,
                "res1": init_conv(next(keys), 3, 3, input_nf, num_filters),
                "res2": init_conv(next(keys), 3, 3, num_filters, num_filters),
            }
            if stack > 0 and rb == 0:
                blk["res3"] = init_conv(next(keys), 1, 1, input_nf, num_filters)
            stacks.append(blk)
            input_nf = num_filters
        num_filters *= 2
    params["stacks"] = stacks
    params["fc_w"] = jax.random.normal(next(keys), (4 * width, num_classes),
                                       jnp.float32) / jnp.sqrt(4 * width)
    params["fc_b"] = jnp.zeros((1, num_classes), jnp.float32)
    return params


# ----------------------------------------------------------------------------
# Build the fully-fused forward pass (one pallas_call for the whole network)
# ----------------------------------------------------------------------------
def build_resnet_forward(params, n_batch, h_in, num_classes):
    CIN_PAD = 8
    OUT_C = 128                                   # lane-dense output tile width
    g0 = _geom(n_batch, h_in)
    P0 = g0["P"]

    # ---------------- slab W: im2col conv weights + biases + fc ----------------
    w_blobs = []                                  # (row0, weight (co,k), bias (co,))
    row_cursor = 0
    kmax = 0

    def add_weight(wm, bias_vec):
        nonlocal row_cursor, kmax
        co, k = wm.shape
        r0 = row_cursor
        row_cursor += _round_up(co, 8)
        kmax = max(kmax, k)
        w_blobs.append((r0, np.asarray(wm, np.float32),
                        np.asarray(bias_vec, np.float32).reshape(-1)))
        return (r0, co, k)

    # ---------------- slab A mask rows ----------------
    mask_rows = {}                                # P -> row index in slab A
    masks = []                                    # (row, vec, P)
    mask_cursor = CIN_PAD

    def mask_row_for(g):
        nonlocal mask_cursor
        if g["P"] not in mask_rows:
            mask_rows[g["P"]] = mask_cursor
            masks.append((mask_cursor, _interior_mask(n_batch, g), g["P"]))
            mask_cursor += 8
        return mask_rows[g["P"]]

    # ---------------- slab S: int8 selection matrices ----------------
    s_entries = []
    s_cursor = 0
    s_width = 0

    def add_select(mat):
        nonlocal s_cursor, s_width
        r0 = s_cursor
        s_cursor += _round_up(mat.shape[0], 32)
        s_width = max(s_width, mat.shape[1])
        s_entries.append((r0, mat))
        return r0

    # ---------------- static program over the block structure ----------------
    plan = []

    # layer1: 3x3 stride 1, Identity activation
    plan.append(dict(kind="conv0",
                     w=add_weight(_im2col_w(params["layer1"]["w"], cin_pad=CIN_PAD),
                                  params["layer1"]["b"]),
                     g=g0, mask_row=mask_row_for(g0)))

    gcur = g0
    for blk in params["stacks"]:
        if blk["strides"] == 1:
            plan.append(dict(kind="block1",
                             w1=add_weight(_im2col_w(blk["res1"]["w"]), blk["res1"]["b"]),
                             w2=add_weight(_im2col_w(blk["res2"]["w"]), blk["res2"]["b"]),
                             g=gcur, mask_row=mask_row_for(gcur)))
        else:
            go = _geom(n_batch, gcur["H"] // 2)
            w1 = _im2col_w(blk["res1"]["w"])                       # (co, 9*cin)
            co, k1 = w1.shape
            cin = k1 // 9
            # Fuse the 1x1 stride-2 shortcut into the SAME im2col matmul.  Its weight
            # goes into the tap-(0,0) columns, so the matmul emits the shortcut already
            # shifted by (Wp+1); a single `dc` selector then downsamples both paths.
            w3 = np.asarray(blk["res3"]["w"], np.float32).reshape(cin, co).T
            wf = np.zeros((2 * co, k1), np.float32)
            wf[:co] = w1
            wf[co:, 0:cin] = w3
            bf = np.concatenate([np.asarray(blk["res1"]["b"]).reshape(-1),
                                 np.asarray(blk["res3"]["b"]).reshape(-1)])
            plan.append(dict(kind="block2",
                             wf=add_weight(wf, bf),
                             w2=add_weight(_im2col_w(blk["res2"]["w"]), blk["res2"]["b"]),
                             gi=gcur, go=go,
                             dc_r0=add_select(_down_select(n_batch, gcur, go)),
                             mask_row=mask_row_for(go)))
            gcur = go

    g_last = gcur
    pool_r0 = add_select(_pool_select(n_batch, g_last, OUT_C))
    pool_scale = 1.0 / float(g_last["H"] * g_last["H"])
    # fold the 1/(H*H) pooling scale into the fc weight (exact: power of 2)
    fcwt = np.asarray(params["fc_w"], np.float32).T * pool_scale   # (classes, 4*width)
    fc_r0, fc_co, fc_k = add_weight(fcwt, np.asarray(params["fc_b"], np.float32))
    OUT_R = _round_up(fc_co, 8)

    # ---------------- materialize the slabs ----------------
    KMAX = kmax
    w_slab_np = np.zeros((_round_up(row_cursor, 8), KMAX + 1), np.float32)
    for r0, wm, bv in w_blobs:
        co, k = wm.shape
        w_slab_np[r0:r0 + co, 0:k] = wm
        w_slab_np[r0:r0 + co, KMAX] = bv
    w_slab = jnp.asarray(w_slab_np)

    s_slab_np = np.zeros((_round_up(s_cursor, 32), _round_up(s_width, 128)), np.int8)
    for r0, mat in s_entries:
        s_slab_np[r0:r0 + mat.shape[0], 0:mat.shape[1]] = mat
    s_slab = jnp.asarray(s_slab_np)

    mask_block_np = np.zeros((mask_cursor - CIN_PAD, P0), np.float32)
    for row, vec, p in masks:
        mask_block_np[row - CIN_PAD, 0:p] = vec
    mask_block = jnp.asarray(mask_block_np)

    # -------------------------- the fused kernel --------------------------
    def kernel(a_ref, w_ref, s_ref, o_ref):
        f32 = jnp.float32

        def wmat(ent):
            r0, co, k = ent
            return w_ref[r0:r0 + co, 0:k]

        def bvec(ent):
            r0, co, _ = ent
            return w_ref[r0:r0 + co, KMAX:KMAX + 1]

        def sel(r0, rows, cols):
            return s_ref[r0:r0 + rows, 0:cols].astype(f32)

        def im2col(x, wp):
            # tap[:, q] = x[:, q + d] with d = (kh-1)*wp + (kw-1)
            # (pltpu.roll follows the jnp.roll convention: roll(x, s)[q] == x[q - s])
            p = x.shape[1]
            taps = []
            for kh in range(3):
                for kw in range(3):
                    d = (kh - 1) * wp + (kw - 1)
                    s = (-d) % p
                    taps.append(x if s == 0 else pltpu.roll(x, s, axis=1))
            return jnp.concatenate(taps, axis=0)               # (9*Cin, P)

        def conv3(x, wp, ent, relu):
            out = jnp.dot(wmat(ent), im2col(x, wp),
                          preferred_element_type=f32) + bvec(ent)
            return jnp.maximum(out, 0.0) if relu else out

        cur = a_ref[0:CIN_PAD, :]                              # (8, P0), zero-padded ring
        for op in plan:
            if op["kind"] == "conv0":                          # layer1: Identity act
                g = op["g"]
                im = a_ref[op["mask_row"]:op["mask_row"] + 1, 0:g["P"]]
                cur = conv3(cur, g["Wp"], op["w"], relu=False) * im
            elif op["kind"] == "block1":                       # stride-1 residual block
                g = op["g"]
                im = a_ref[op["mask_row"]:op["mask_row"] + 1, 0:g["P"]]
                y = conv3(cur, g["Wp"], op["w1"], relu=True) * im
                y = conv3(y, g["Wp"], op["w2"], relu=False) * im
                cur = jnp.maximum(cur + y, 0.0)
            else:                                              # stride-2 residual block
                gi, go = op["gi"], op["go"]
                im = a_ref[op["mask_row"]:op["mask_row"] + 1, 0:go["P"]]
                co2 = op["wf"][1]
                co = co2 // 2
                m = (jnp.dot(wmat(op["wf"]), im2col(cur, gi["Wp"]),
                             preferred_element_type=f32) + bvec(op["wf"]))
                # rows [0:co]   : full-resolution res1 conv (ReLU)
                # rows [co:2co] : 1x1 shortcut, pre-shifted via tap (0,0)
                stacked = jnp.concatenate(
                    [jnp.maximum(m[0:co], 0.0), m[co:co2]], axis=0)
                down = jnp.dot(stacked, sel(op["dc_r0"], gi["P"], go["P"]),
                               preferred_element_type=f32)     # (2*co, P_out)
                y = conv3(down[0:co], go["Wp"], op["w2"], relu=False) * im
                cur = jnp.maximum(down[co:co2] + y, 0.0)

        # global average pool (selection matmul, scale folded into fc) + fc.
        pooled = jnp.dot(cur, sel(pool_r0, g_last["P"], OUT_C),
                         preferred_element_type=f32)           # (C_last, 128)
        fcw = w_ref[fc_r0:fc_r0 + OUT_R, 0:fc_k]
        fcb = w_ref[fc_r0:fc_r0 + OUT_R, KMAX:KMAX + 1]
        o_ref[...] = jnp.dot(fcw, pooled, preferred_element_type=f32) + fcb

    pallas_fn = pl.pallas_call(
        kernel,
        out_shape=jax.ShapeDtypeStruct((OUT_R, OUT_C), jnp.float32),
        in_specs=[pl.BlockSpec(memory_space=pltpu.MemorySpace.VMEM)] * 3,
        out_specs=pl.BlockSpec(memory_space=pltpu.MemorySpace.VMEM),
        compiler_params=pltpu.CompilerParams(vmem_limit_bytes=32 * 1024 * 1024),
    )

    def forward(x_nchw):
        n, c, h, w = x_nchw.shape
        xp = jnp.pad(x_nchw.astype(jnp.float32),
                     ((0, 0), (0, CIN_PAD - c), (1, 1), (1, 1)))        # (N,8,Hp,Wp)
        xp = jnp.transpose(xp, (1, 0, 2, 3)).reshape(CIN_PAD, n * g0["img"])
        xp = jnp.pad(xp, ((0, 0), (0, P0 - n * g0["img"])))             # (8, P0)
        a_slab = jnp.concatenate([xp, mask_block], axis=0)              # (32, P0)
        out = pallas_fn(a_slab, w_slab, s_slab)                         # (OUT_R, 128)
        return out[:num_classes, :n].T                                  # (N, classes)

    return forward


# ----------------------------------------------------------------------------
# Pure-JAX reference for the correctness check
# ----------------------------------------------------------------------------
def _ref_conv(x, p, stride, relu):
    w, b = p["w"], p["b"]
    KH, KW = w.shape[0], w.shape[1]
    pw0, pw1 = conv_same_padding(x.shape[2], KW, stride)
    ph0, ph1 = conv_same_padding(x.shape[1], KH, stride)
    out = jax.lax.conv_general_dilated(
        x, w, (stride, stride), padding=((ph0, ph1), (pw0, pw1)),
        dimension_numbers=("NHWC", "HWIO", "NHWC"),
        precision=jax.lax.Precision.HIGHEST)
    out = out + b.reshape(1, 1, 1, -1)
    return jnp.maximum(out, 0.0) if relu else out


def resnet_forward_ref(params, x_nchw):
    x = jnp.transpose(x_nchw, (0, 2, 3, 1)).astype(jnp.float32)
    out = _ref_conv(x, params["layer1"], 1, False)
    for blk in params["stacks"]:
        s = blk["strides"]
        y = _ref_conv(out, blk["res1"], s, True)
        y = _ref_conv(y, blk["res2"], 1, False)
        shortcut = _ref_conv(out, blk["res3"], s, False) if "res3" in blk else out
        out = jnp.maximum(shortcut + y, 0.0)
    pooled = jnp.mean(out, axis=(1, 2))
    return jnp.dot(pooled, params["fc_w"],
                   precision=jax.lax.Precision.HIGHEST) + params["fc_b"]


# ----------------------------------------------------------------------------
if __name__ == "__main__":
    num_classes, depth, width, input_size, batch = 10, 8, 8, 16, 2

    key = jax.random.PRNGKey(0)
    k_params, k_x = jax.random.split(key)
    params = build_params(k_params, num_classes, depth, width)
    x = jax.random.normal(k_x, (batch, 3, input_size, input_size), jnp.float32)

    forward = jax.jit(build_resnet_forward(params, batch, input_size, num_classes))
    logits = jax.block_until_ready(forward(x))
    assert logits.shape == (batch, num_classes), logits.shape

    ref = jax.block_until_ready(resnet_forward_ref(params, x))
    # NOTE: in-kernel MXU matmuls use default (not HIGHEST) precision -> loose tolerance.
    assert jnp.allclose(logits, ref, rtol=2e-2, atol=2e-2), (
        float(jnp.max(jnp.abs(logits - ref))))

    print("KERNEL_OK")
</pallas_src>

<mosaic_0001>
module attributes {stable_mosaic.version = 11 : i64} {
  func.func @kernel(%arg0: memref<32x768xf32, #tpu.memory_space<vmem>>, %arg1: memref<184x289xf32, #tpu.memory_space<vmem>>, %arg2: memref<1152x256xi8, #tpu.memory_space<vmem>>, %arg3: memref<16x128xf32, #tpu.memory_space<vmem>>) attributes {dimension_semantics = [], scalar_prefetch = 0 : i64, scratch_operands = 0 : i64, tpu.core_type = #tpu.core_type<tc>} {
    %c0 = arith.constant 0 : index
    %c0_0 = arith.constant 0 : index
    %0 = vector.load %arg0[%c0, %c0_0] : memref<32x768xf32, #tpu.memory_space<vmem>>, vector<8x768xf32>
    %c8 = arith.constant 8 : index
    %c0_1 = arith.constant 0 : index
    %1 = vector.load %arg0[%c8, %c0_1] : memref<32x768xf32, #tpu.memory_space<vmem>>, vector<1x768xf32>
    %c0_2 = arith.constant 0 : index
    %c0_3 = arith.constant 0 : index
    %2 = vector.load %arg1[%c0_2, %c0_3] : memref<184x289xf32, #tpu.memory_space<vmem>>, vector<8x72xf32>
    %c19_i32 = arith.constant 19 : i32
    %3 = tpu.dynamic_rotate %0 by %c19_i32 dim 1 : vector<8x768xf32>, i32 -> vector<8x768xf32>
    %c18_i32 = arith.constant 18 : i32
    %4 = tpu.dynamic_rotate %0 by %c18_i32 dim 1 : vector<8x768xf32>, i32 -> vector<8x768xf32>
    %c17_i32 = arith.constant 17 : i32
    %5 = tpu.dynamic_rotate %0 by %c17_i32 dim 1 : vector<8x768xf32>, i32 -> vector<8x768xf32>
    %c1_i32 = arith.constant 1 : i32
    %6 = tpu.dynamic_rotate %0 by %c1_i32 dim 1 : vector<8x768xf32>, i32 -> vector<8x768xf32>
    %c767_i32 = arith.constant 767 : i32
    %7 = tpu.dynamic_rotate %0 by %c767_i32 dim 1 : vector<8x768xf32>, i32 -> vector<8x768xf32>
    %c751_i32 = arith.constant 751 : i32
    %8 = tpu.dynamic_rotate %0 by %c751_i32 dim 1 : vector<8x768xf32>, i32 -> vector<8x768xf32>
    %c750_i32 = arith.constant 750 : i32
    %9 = tpu.dynamic_rotate %0 by %c750_i32 dim 1 : vector<8x768xf32>, i32 -> vector<8x768xf32>
    %c749_i32 = arith.constant 749 : i32
    %10 = tpu.dynamic_rotate %0 by %c749_i32 dim 1 : vector<8x768xf32>, i32 -> vector<8x768xf32>
    %11 = tpu.concatenate %3, %4, %5, %6, %0, %7, %8, %9, %10 in 0 : vector<8x768xf32>, vector<8x768xf32>, vector<8x768xf32>, vector<8x768xf32>, vector<8x768xf32>, vector<8x768xf32>, vector<8x768xf32>, vector<8x768xf32>, vector<8x768xf32> -> vector<72x768xf32>
    %cst = arith.constant dense<0.000000e+00> : vector<8x768xf32>
    %12 = tpu.matmul %2, %11, %cst {dimension_numbers = #tpu.dot_dimension_numbers<[1], [0], [0], [1], [0, 0, 1, 1], [], []>} : vector<8x72xf32>, vector<72x768xf32>, vector<8x768xf32> -> vector<8x768xf32>
    %c0_4 = arith.constant 0 : index
    %c288 = arith.constant 288 : index
    %13 = vector.load %arg1[%c0_4, %c288] : memref<184x289xf32, #tpu.memory_space<vmem>>, vector<8x1xf32>
    %14 = vector.broadcast %13 : vector<8x1xf32> to vector<8x768xf32>
    %15 = arith.addf %12, %14 : vector<8x768xf32>
    %16 = vector.broadcast %1 : vector<1x768xf32> to vector<8x768xf32>
    %17 = arith.mulf %15, %16 : vector<8x768xf32>
    %c8_5 = arith.constant 8 : index
    %c0_6 = arith.constant 0 : index
    %18 = vector.load %arg0[%c8_5, %c0_6] : memref<32x768xf32, #tpu.memory_space<vmem>>, vector<1x768xf32>
    %c8_7 = arith.constant 8 : index
    %c0_8 = arith.constant 0 : index
    %19 = vector.load %arg1[%c8_7, %c0_8] : memref<184x289xf32, #tpu.memory_space<vmem>>, vector<8x72xf32>
    %c19_i32_9 = arith.constant 19 : i32
    %20 = tpu.dynamic_rotate %17 by %c19_i32_9 dim 1 : vector<8x768xf32>, i32 -> vector<8x768xf32>
    %c18_i32_10 = arith.constant 18 : i32
    %21 = tpu.dynamic_rotate %17 by %c18_i32_10 dim 1 : vector<8x768xf32>, i32 -> vector<8x768xf32>
    %c17_i32_11 = arith.constant 17 : i32
    %22 = tpu.dynamic_rotate %17 by %c17_i32_11 dim 1 : vector<8x768xf32>, i32 -> vector<8x768xf32>
    %c1_i32_12 = arith.constant 1 : i32
    %23 = tpu.dynamic_rotate %17 by %c1_i32_12 dim 1 : vector<8x768xf32>, i32 -> vector<8x768xf32>
    %c767_i32_13 = arith.constant 767 : i32
    %24 = tpu.dynamic_rotate %17 by %c767_i32_13 dim 1 : vector<8x768xf32>, i32 -> vector<8x768xf32>
    %c751_i32_14 = arith.constant 751 : i32
    %25 = tpu.dynamic_rotate %17 by %c751_i32_14 dim 1 : vector<8x768xf32>, i32 -> vector<8x768xf32>
    %c750_i32_15 = arith.constant 750 : i32
    %26 = tpu.dynamic_rotate %17 by %c750_i32_15 dim 1 : vector<8x768xf32>, i32 -> vector<8x768xf32>
    %c749_i32_16 = arith.constant 749 : i32
    %27 = tpu.dynamic_rotate %17 by %c749_i32_16 dim 1 : vector<8x768xf32>, i32 -> vector<8x768xf32>
    %28 = tpu.concatenate %20, %21, %22, %23, %17, %24, %25, %26, %27 in 0 : vector<8x768xf32>, vector<8x768xf32>, vector<8x768xf32>, vector<8x768xf32>, vector<8x768xf32>, vector<8x768xf32>, vector<8x768xf32>, vector<8x768xf32>, vector<8x768xf32> -> vector<72x768xf32>
    %cst_17 = arith.constant dense<0.000000e+00> : vector<8x768xf32>
    %29 = tpu.matmul %19, %28, %cst_17 {dimension_numbers = #tpu.dot_dimension_numbers<[1], [0], [0], [1], [0, 0, 1, 1], [], []>} : vector<8x72xf32>, vector<72x768xf32>, vector<8x768xf32> -> vector<8x768xf32>
    %c8_18 = arith.constant 8 : index
    %c288_19 = arith.constant 288 : index
    %30 = vector.load %arg1[%c8_18, %c288_19] : memref<184x289xf32, #tpu.memory_space<vmem>>, vector<8x1xf32>
    %31 = vector.broadcast %30 : vector<8x1xf32> to vector<8x768xf32>
    %32 = arith.addf %29, %31 : vector<8x768xf32>
    %cst_20 = arith.constant 0.000000e+00 : f32
    %33 = vector.broadcast %cst_20 : f32 to vector<8x768xf32>
    %34 = arith.maximumf %32, %33 : vector<8x768xf32>
    %35 = vector.broadcast %18 : vector<1x768xf32> to vector<8x768xf32>
    %36 = arith.mulf %34, %35 : vector<8x768xf32>
    %c16 = arith.constant 16 : index
    %c0_21 = arith.constant 0 : index
    %37 = vector.load %arg1[%c16, %c0_21] : memref<184x289xf32, #tpu.memory_space<vmem>>, vector<8x72xf32>
    %c19_i32_22 = arith.constant 19 : i32
    %38 = tpu.dynamic_rotate %36 by %c19_i32_22 dim 1 : vector<8x768xf32>, i32 -> vector<8x768xf32>
    %c18_i32_23 = arith.constant 18 : i32
    %39 = tpu.dynamic_rotate %36 by %c18_i32_23 dim 1 : vector<8x768xf32>, i32 -> vector<8x768xf32>
    %c17_i32_24 = arith.constant 17 : i32
    %40 = tpu.dynamic_rotate %36 by %c17_i32_24 dim 1 : vector<8x768xf32>, i32 -> vector<8x768xf32>
    %c1_i32_25 = arith.constant 1 : i32
    %41 = tpu.dynamic_rotate %36 by %c1_i32_25 dim 1 : vector<8x768xf32>, i32 -> vector<8x768xf32>
    %c767_i32_26 = arith.constant 767 : i32
    %42 = tpu.dynamic_rotate %36 by %c767_i32_26 dim 1 : vector<8x768xf32>, i32 -> vector<8x768xf32>
    %c751_i32_27 = arith.constant 751 : i32
    %43 = tpu.dynamic_rotate %36 by %c751_i32_27 dim 1 : vector<8x768xf32>, i32 -> vector<8x768xf32>
    %c750_i32_28 = arith.constant 750 : i32
    %44 = tpu.dynamic_rotate %36 by %c750_i32_28 dim 1 : vector<8x768xf32>, i32 -> vector<8x768xf32>
    %c749_i32_29 = arith.constant 749 : i32
    %45 = tpu.dynamic_rotate %36 by %c749_i32_29 dim 1 : vector<8x768xf32>, i32 -> vector<8x768xf32>
    %46 = tpu.concatenate %38, %39, %40, %41, %36, %42, %43, %44, %45 in 0 : vector<8x768xf32>, vector<8x768xf32>, vector<8x768xf32>, vector<8x768xf32>, vector<8x768xf32>, vector<8x768xf32>, vector<8x768xf32>, vector<8x768xf32>, vector<8x768xf32> -> vector<72x768xf32>
    %cst_30 = arith.constant dense<0.000000e+00> : vector<8x768xf32>
    %47 = tpu.matmul %37, %46, %cst_30 {dimension_numbers = #tpu.dot_dimension_numbers<[1], [0], [0], [1], [0, 0, 1, 1], [], []>} : vector<8x72xf32>, vector<72x768xf32>, vector<8x768xf32> -> vector<8x768xf32>
    %c16_31 = arith.constant 16 : index
    %c288_32 = arith.constant 288 : index
    %48 = vector.load %arg1[%c16_31, %c288_32] : memref<184x289xf32, #tpu.memory_space<vmem>>, vector<8x1xf32>
    %49 = vector.broadcast %48 : vector<8x1xf32> to vector<8x768xf32>
    %50 = arith.addf %47, %49 : vector<8x768xf32>
    %51 = vector.broadcast %18 : vector<1x768xf32> to vector<8x768xf32>
    %52 = arith.mulf %50, %51 : vector<8x768xf32>
    %53 = arith.addf %17, %52 : vector<8x768xf32>
    %cst_33 = arith.constant 0.000000e+00 : f32
    %54 = vector.broadcast %cst_33 : f32 to vector<8x768xf32>
    %55 = arith.maximumf %53, %54 : vector<8x768xf32>
    %c16_34 = arith.constant 16 : index
    %c0_35 = arith.constant 0 : index
    %56 = vector.load %arg0[%c16_34, %c0_35] : memref<32x768xf32, #tpu.memory_space<vmem>>, vector<1x256xf32>
    %c24 = arith.constant 24 : index
    %c0_36 = arith.constant 0 : index
    %57 = vector.load %arg1[%c24, %c0_36] : memref<184x289xf32, #tpu.memory_space<vmem>>, vector<32x72xf32>
    %c19_i32_37 = arith.constant 19 : i32
    %58 = tpu.dynamic_rotate %55 by %c19_i32_37 dim 1 : vector<8x768xf32>, i32 -> vector<8x768xf32>
    %c18_i32_38 = arith.constant 18 : i32
    %59 = tpu.dynamic_rotate %55 by %c18_i32_38 dim 1 : vector<8x768xf32>, i32 -> vector<8x768xf32>
    %c17_i32_39 = arith.constant 17 : i32
    %60 = tpu.dynamic_rotate %55 by %c17_i32_39 dim 1 : vector<8x768xf32>, i32 -> vector<8x768xf32>
    %c1_i32_40 = arith.constant 1 : i32
    %61 = tpu.dynamic_rotate %55 by %c1_i32_40 dim 1 : vector<8x768xf32>, i32 -> vector<8x768xf32>
    %c767_i32_41 = arith.constant 767 : i32
    %62 = tpu.dynamic_rotate %55 by %c767_i32_41 dim 1 : vector<8x768xf32>, i32 -> vector<8x768xf32>
    %c751_i32_42 = arith.constant 751 : i32
    %63 = tpu.dynamic_rotate %55 by %c751_i32_42 dim 1 : vector<8x768xf32>, i32 -> vector<8x768xf32>
    %c750_i32_43 = arith.constant 750 : i32
    %64 = tpu.dynamic_rotate %55 by %c750_i32_43 dim 1 : vector<8x768xf32>, i32 -> vector<8x768xf32>
    %c749_i32_44 = arith.constant 749 : i32
    %65 = tpu.dynamic_rotate %55 by %c749_i32_44 dim 1 : vector<8x768xf32>, i32 -> vector<8x768xf32>
    %66 = tpu.concatenate %58, %59, %60, %61, %55, %62, %63, %64, %65 in 0 : vector<8x768xf32>, vector<8x768xf32>, vector<8x768xf32>, vector<8x768xf32>, vector<8x768xf32>, vector<8x768xf32>, vector<8x768xf32>, vector<8x768xf32>, vector<8x768xf32> -> vector<72x768xf32>
    %cst_45 = arith.constant dense<0.000000e+00> : vector<32x768xf32>
    %67 = tpu.matmul %57, %66, %cst_45 {dimension_numbers = #tpu.dot_dimension_numbers<[1], [0], [0], [1], [0, 0, 1, 1], [], []>} : vector<32x72xf32>, vector<72x768xf32>, vector<32x768xf32> -> vector<32x768xf32>
    %c24_46 = arith.constant 24 : index
    %c288_47 = arith.constant 288 : index
    %68 = vector.load %arg1[%c24_46, %c288_47] : memref<184x289xf32, #tpu.memory_space<vmem>>, vector<32x1xf32>
    %69 = vector.broadcast %68 : vector<32x1xf32> to vector<32x768xf32>
    %70 = arith.addf %67, %69 : vector<32x768xf32>
    %71 = vector.extract_strided_slice %70 {offsets = [0, 0], sizes = [16, 768], strides = [1, 1]} : vector<32x768xf32> to vector<16x768xf32>
    %cst_48 = arith.constant 0.000000e+00 : f32
    %72 = vector.broadcast %cst_48 : f32 to vector<16x768xf32>
    %73 = arith.maximumf %71, %72 : vector<16x768xf32>
    %74 = vector.extract_strided_slice %70 {offsets = [16, 0], sizes = [16, 768], strides = [1, 1]} : vector<32x768xf32> to vector<16x768xf32>
    %75 = tpu.concatenate %73, %74 in 0 : vector<16x768xf32>, vector<16x768xf32> -> vector<32x768xf32>
    %c0_49 = arith.constant 0 : index
    %c0_50 = arith.constant 0 : index
    %76 = vector.load %arg2[%c0_49, %c0_50] : memref<1152x256xi8, #tpu.memory_space<vmem>>, vector<768x256xi8>
    %77 = arith.sitofp %76 : vector<768x256xi8> to vector<768x256xf32>
    %cst_51 = arith.constant dense<0.000000e+00> : vector<32x256xf32>
    %78 = tpu.matmul %75, %77, %cst_51 {dimension_numbers = #tpu.dot_dimension_numbers<[1], [0], [0], [1], [0, 0, 1, 1], [], []>} : vector<32x768xf32>, vector<768x256xf32>, vector<32x256xf32> -> vector<32x256xf32>
    %79 = vector.extract_strided_slice %78 {offsets = [0, 0], sizes = [16, 256], strides = [1, 1]} : vector<32x256xf32> to vector<16x256xf32>
    %c56 = arith.constant 56 : index
    %c0_52 = arith.constant 0 : index
    %80 = vector.load %arg1[%c56, %c0_52] : memref<184x289xf32, #tpu.memory_space<vmem>>, vector<16x144xf32>
    %c11_i32 = arith.constant 11 : i32
    %81 = tpu.dynamic_rotate %79 by %c11_i32 dim 1 : vector<16x256xf32>, i32 -> vector<16x256xf32>
    %c10_i32 = arith.constant 10 : i32
    %82 = tpu.dynamic_rotate %79 by %c10_i32 dim 1 : vector<16x256xf32>, i32 -> vector<16x256xf32>
    %c9_i32 = arith.constant 9 : i32
    %83 = tpu.dynamic_rotate %79 by %c9_i32 dim 1 : vector<16x256xf32>, i32 -> vector<16x256xf32>
    %c1_i32_53 = arith.constant 1 : i32
    %84 = tpu.dynamic_rotate %79 by %c1_i32_53 dim 1 : vector<16x256xf32>, i32 -> vector<16x256xf32>
    %c255_i32 = arith.constant 255 : i32
    %85 = tpu.dynamic_rotate %79 by %c255_i32 dim 1 : vector<16x256xf32>, i32 -> vector<16x256xf32>
    %c247_i32 = arith.constant 247 : i32
    %86 = tpu.dynamic_rotate %79 by %c247_i32 dim 1 : vector<16x256xf32>, i32 -> vector<16x256xf32>
    %c246_i32 = arith.constant 246 : i32
    %87 = tpu.dynamic_rotate %79 by %c246_i32 dim 1 : vector<16x256xf32>, i32 -> vector<16x256xf32>
    %c245_i32 = arith.constant 245 : i32
    %88 = tpu.dynamic_rotate %79 by %c245_i32 dim 1 : vector<16x256xf32>, i32 -> vector<16x256xf32>
    %89 = tpu.concatenate %81, %82, %83, %84, %79, %85, %86, %87, %88 in 0 : vector<16x256xf32>, vector<16x256xf32>, vector<16x256xf32>, vector<16x256xf32>, vector<16x256xf32>, vector<16x256xf32>, vector<16x256xf32>, vector<16x256xf32>, vector<16x256xf32> -> vector<144x256xf32>
    %cst_54 = arith.constant dense<0.000000e+00> : vector<16x256xf32>
    %90 = tpu.matmul %80, %89, %cst_54 {dimension_numbers = #tpu.dot_dimension_numbers<[1], [0], [0], [1], [0, 0, 1, 1], [], []>} : vector<16x144xf32>, vector<144x256xf32>, vector<16x256xf32> -> vector<16x256xf32>
    %c56_55 = arith.constant 56 : index
    %c288_56 = arith.constant 288 : index
    %91 = vector.load %arg1[%c56_55, %c288_56] : memref<184x289xf32, #tpu.memory_space<vmem>>, vector<16x1xf32>
    %92 = vector.broadcast %91 : vector<16x1xf32> to vector<16x256xf32>
    %93 = arith.addf %90, %92 : vector<16x256xf32>
    %94 = vector.broadcast %56 : vector<1x256xf32> to vector<16x256xf32>
    %95 = arith.mulf %93, %94 : vector<16x256xf32>
    %96 = vector.extract_strided_slice %78 {offsets = [16, 0], sizes = [16, 256], strides = [1, 1]} : vector<32x256xf32> to vector<16x256xf32>
    %97 = arith.addf %96, %95 : vector<16x256xf32>
    %cst_57 = arith.constant 0.000000e+00 : f32
    %98 = vector.broadcast %cst_57 : f32 to vector<16x256xf32>
    %99 = arith.maximumf %97, %98 : vector<16x256xf32>
    %c24_58 = arith.constant 24 : index
    %c0_59 = arith.constant 0 : index
    %100 = vector.load %arg0[%c24_58, %c0_59] : memref<32x768xf32, #tpu.memory_space<vmem>>, vector<1x128xf32>
    %c72 = arith.constant 72 : index
    %c0_60 = arith.constant 0 : index
    %101 = vector.load %arg1[%c72, %c0_60] : memref<184x289xf32, #tpu.memory_space<vmem>>, vector<64x144xf32>
    %c11_i32_61 = arith.constant 11 : i32
    %102 = tpu.dynamic_rotate %99 by %c11_i32_61 dim 1 : vector<16x256xf32>, i32 -> vector<16x256xf32>
    %c10_i32_62 = arith.constant 10 : i32
    %103 = tpu.dynamic_rotate %99 by %c10_i32_62 dim 1 : vector<16x256xf32>, i32 -> vector<16x256xf32>
    %c9_i32_63 = arith.constant 9 : i32
    %104 = tpu.dynamic_rotate %99 by %c9_i32_63 dim 1 : vector<16x256xf32>, i32 -> vector<16x256xf32>
    %c1_i32_64 = arith.constant 1 : i32
    %105 = tpu.dynamic_rotate %99 by %c1_i32_64 dim 1 : vector<16x256xf32>, i32 -> vector<16x256xf32>
    %c255_i32_65 = arith.constant 255 : i32
    %106 = tpu.dynamic_rotate %99 by %c255_i32_65 dim 1 : vector<16x256xf32>, i32 -> vector<16x256xf32>
    %c247_i32_66 = arith.constant 247 : i32
    %107 = tpu.dynamic_rotate %99 by %c247_i32_66 dim 1 : vector<16x256xf32>, i32 -> vector<16x256xf32>
    %c246_i32_67 = arith.constant 246 : i32
    %108 = tpu.dynamic_rotate %99 by %c246_i32_67 dim 1 : vector<16x256xf32>, i32 -> vector<16x256xf32>
    %c245_i32_68 = arith.constant 245 : i32
    %109 = tpu.dynamic_rotate %99 by %c245_i32_68 dim 1 : vector<16x256xf32>, i32 -> vector<16x256xf32>
    %110 = tpu.concatenate %102, %103, %104, %105, %99, %106, %107, %108, %109 in 0 : vector<16x256xf32>, vector<16x256xf32>, vector<16x256xf32>, vector<16x256xf32>, vector<16x256xf32>, vector<16x256xf32>, vector<16x256xf32>, vector<16x256xf32>, vector<16x256xf32> -> vector<144x256xf32>
    %cst_69 = arith.constant dense<0.000000e+00> : vector<64x256xf32>
    %111 = tpu.matmul %101, %110, %cst_69 {dimension_numbers = #tpu.dot_dimension_numbers<[1], [0], [0], [1], [0, 0, 1, 1], [], []>} : vector<64x144xf32>, vector<144x256xf32>, vector<64x256xf32> -> vector<64x256xf32>
    %c72_70 = arith.constant 72 : index
    %c288_71 = arith.constant 288 : index
    %112 = vector.load %arg1[%c72_70, %c288_71] : memref<184x289xf32, #tpu.memory_space<vmem>>, vector<64x1xf32>
    %113 = vector.broadcast %112 : vector<64x1xf32> to vector<64x256xf32>
    %114 = arith.addf %111, %113 : vector<64x256xf32>
    %115 = vector.extract_strided_slice %114 {offsets = [0, 0], sizes = [32, 256], strides = [1, 1]} : vector<64x256xf32> to vector<32x256xf32>
    %cst_72 = arith.constant 0.000000e+00 : f32
    %116 = vector.broadcast %cst_72 : f32 to vector<32x256xf32>
    %117 = arith.maximumf %115, %116 : vector<32x256xf32>
    %118 = vector.extract_strided_slice %114 {offsets = [32, 0], sizes = [32, 256], strides = [1, 1]} : vector<64x256xf32> to vector<32x256xf32>
    %119 = tpu.concatenate %117, %118 in 0 : vector<32x256xf32>, vector<32x256xf32> -> vector<64x256xf32>
    %c768 = arith.constant 768 : index
    %c0_73 = arith.constant 0 : index
    %120 = vector.load %arg2[%c768, %c0_73] : memref<1152x256xi8, #tpu.memory_space<vmem>>, vector<256x128xi8>
    %121 = arith.sitofp %120 : vector<256x128xi8> to vector<256x128xf32>
    %cst_74 = arith.constant dense<0.000000e+00> : vector<64x128xf32>
    %122 = tpu.matmul %119, %121, %cst_74 {dimension_numbers = #tpu.dot_dimension_numbers<[1], [0], [0], [1], [0, 0, 1, 1], [], []>} : vector<64x256xf32>, vector<256x128xf32>, vector<64x128xf32> -> vector<64x128xf32>
    %123 = vector.extract_strided_slice %122 {offsets = [0, 0], sizes = [32, 128], strides = [1, 1]} : vector<64x128xf32> to vector<32x128xf32>
    %c136 = arith.constant 136 : index
    %c0_75 = arith.constant 0 : index
    %124 = vector.load %arg1[%c136, %c0_75] : memref<184x289xf32, #tpu.memory_space<vmem>>, vector<32x288xf32>
    %c7_i32 = arith.constant 7 : i32
    %125 = tpu.dynamic_rotate %123 by %c7_i32 dim 1 : vector<32x128xf32>, i32 -> vector<32x128xf32>
    %c6_i32 = arith.constant 6 : i32
    %126 = tpu.dynamic_rotate %123 by %c6_i32 dim 1 : vector<32x128xf32>, i32 -> vector<32x128xf32>
    %c5_i32 = arith.constant 5 : i32
    %127 = tpu.dynamic_rotate %123 by %c5_i32 dim 1 : vector<32x128xf32>, i32 -> vector<32x128xf32>
    %c1_i32_76 = arith.constant 1 : i32
    %128 = tpu.dynamic_rotate %123 by %c1_i32_76 dim 1 : vector<32x128xf32>, i32 -> vector<32x128xf32>
    %c127_i32 = arith.constant 127 : i32
    %129 = tpu.dynamic_rotate %123 by %c127_i32 dim 1 : vector<32x128xf32>, i32 -> vector<32x128xf32>
    %c123_i32 = arith.constant 123 : i32
    %130 = tpu.dynamic_rotate %123 by %c123_i32 dim 1 : vector<32x128xf32>, i32 -> vector<32x128xf32>
    %c122_i32 = arith.constant 122 : i32
    %131 = tpu.dynamic_rotate %123 by %c122_i32 dim 1 : vector<32x128xf32>, i32 -> vector<32x128xf32>
    %c121_i32 = arith.constant 121 : i32
    %132 = tpu.dynamic_rotate %123 by %c121_i32 dim 1 : vector<32x128xf32>, i32 -> vector<32x128xf32>
    %133 = tpu.concatenate %125, %126, %127, %128, %123, %129, %130, %131, %132 in 0 : vector<32x128xf32>, vector<32x128xf32>, vector<32x128xf32>, vector<32x128xf32>, vector<32x128xf32>, vector<32x128xf32>, vector<32x128xf32>, vector<32x128xf32>, vector<32x128xf32> -> vector<288x128xf32>
    %cst_77 = arith.constant dense<0.000000e+00> : vector<32x128xf32>
    %134 = tpu.matmul %124, %133, %cst_77 {dimension_numbers = #tpu.dot_dimension_numbers<[1], [0], [0], [1], [0, 0, 1, 1], [], []>} : vector<32x288xf32>, vector<288x128xf32>, vector<32x128xf32> -> vector<32x128xf32>
    %c136_78 = arith.constant 136 : index
    %c288_79 = arith.constant 288 : index
    %135 = vector.load %arg1[%c136_78, %c288_79] : memref<184x289xf32, #tpu.memory_space<vmem>>, vector<32x1xf32>
    %136 = vector.broadcast %135 : vector<32x1xf32> to vector<32x128xf32>
    %137 = arith.addf %134, %136 : vector<32x128xf32>
    %138 = vector.broadcast %100 : vector<1x128xf32> to vector<32x128xf32>
    %139 = arith.mulf %137, %138 : vector<32x128xf32>
    %140 = vector.extract_strided_slice %122 {offsets = [32, 0], sizes = [32, 128], strides = [1, 1]} : vector<64x128xf32> to vector<32x128xf32>
    %141 = arith.addf %140, %139 : vector<32x128xf32>
    %cst_80 = arith.constant 0.000000e+00 : f32
    %142 = vector.broadcast %cst_80 : f32 to vector<32x128xf32>
    %143 = arith.maximumf %141, %142 : vector<32x128xf32>
    %c1024 = arith.constant 1024 : index
    %c0_81 = arith.constant 0 : index
    %144 = vector.load %arg2[%c1024, %c0_81] : memref<1152x256xi8, #tpu.memory_space<vmem>>, vector<128x128xi8>
    %145 = arith.sitofp %144 : vector<128x128xi8> to vector<128x128xf32>
    %cst_82 = arith.constant dense<0.000000e+00> : vector<32x128xf32>
    %146 = tpu.matmul %143, %145, %cst_82 {dimension_numbers = #tpu.dot_dimension_numbers<[1], [0], [0], [1], [0, 0, 1, 1], [], []>} : vector<32x128xf32>, vector<128x128xf32>, vector<32x128xf32> -> vector<32x128xf32>
    %c168 = arith.constant 168 : index
    %c0_83 = arith.constant 0 : index
    %147 = vector.load %arg1[%c168, %c0_83] : memref<184x289xf32, #tpu.memory_space<vmem>>, vector<16x32xf32>
    %c168_84 = arith.constant 168 : index
    %c288_85 = arith.constant 288 : index
    %148 = vector.load %arg1[%c168_84, %c288_85] : memref<184x289xf32, #tpu.memory_space<vmem>>, vector<16x1xf32>
    %cst_86 = arith.constant dense<0.000000e+00> : vector<16x128xf32>
    %149 = tpu.matmul %147, %146, %cst_86 {dimension_numbers = #tpu.dot_dimension_numbers<[1], [0], [0], [1], [0, 0, 1, 1], [], []>} : vector<16x32xf32>, vector<32x128xf32>, vector<16x128xf32> -> vector<16x128xf32>
    %150 = vector.broadcast %148 : vector<16x1xf32> to vector<16x128xf32>
    %151 = arith.addf %149, %150 : vector<16x128xf32>
    %c0_87 = arith.constant 0 : index
    %c0_88 = arith.constant 0 : index
    %152 = vector.load %arg3[%c0_87, %c0_88] : memref<16x128xf32, #tpu.memory_space<vmem>>, vector<16x128xf32>
    tpu.vector_store %arg3[%c0_87, %c0_88], %151 {strides = array<i32>} : memref<16x128xf32, #tpu.memory_space<vmem>>, vector<16x128xf32>,
    return
  }
}

</mosaic_0001>

<llo_original>
// kernel: forward.1
$region0: #{forward.1}
  #allocation0 [shape = 'u32[]', space=smem, size = 0x4, offset = 0x4, fixed_abs, tag = 'smem constant byte address 0x4 - core index']
  #allocation1 [shape = 'u32[72,128]{1,0:T(1,128)}', space=vmem, size = 0x9000, scoped, tag = 'internal scratch']
  %s0 = inlined_call_operand.vmem [shape: f32[32,768], index: 0, kind: input, shape index: {}]
  %s1 = inlined_call_operand.vmem [shape: f32[184,289], index: 1, kind: input, shape index: {}]
  %s2 = inlined_call_operand.vmem [shape: s8[1152,256], index: 2, kind: input, shape index: {}]
  %s3 = inlined_call_operand.vmem [shape: f32[16,128], index: 3, kind: output, shape index: {}]
  %s4 = sld [smem:[#allocation0]]
  $region22: #{forward.1} parent=0
    _
  %s6 = ssub.s32 1, %s4
  %s7 = scalar_select 0, %s6, %s4
  // Predicated region
  $region2: #{forward.1} parent=0 // pred_check
    _
  $region3: #{forward.1} parent=0 // pred_check_branch
    %9 = sbr.rel (0) target = $region5
  $region4: #{forward.1} parent=0 // pred_region
    _
  $region5: #{forward.1} parent=0 // pred_fallthru
    _
  // Predicated region
  $region6: #{forward.1} parent=0 // pred_check
    _
  $region7: #{forward.1} parent=0 // pred_check_branch
    %11 = sbr.rel (0) target = $region9
  $region8: #{forward.1} parent=0 // pred_region
    _
  $region9: #{forward.1} parent=0 // pred_fallthru
    _
  // Predicated region
  $region10: #{forward.1} parent=0 // pred_check
    _
  $region11: #{forward.1} parent=0 // pred_check_branch
    %13 = sbr.rel (0) target = $region13
  $region12: #{forward.1} parent=0 // pred_region
    _
  $region13: #{forward.1} parent=0 // pred_fallthru
    _
  %v14 = vld [vmem:[%s0] sm:$0xff]
  %v15 = vld [vmem:[%s0 + $0x8] sm:$0xff]
  %v16 = vld [vmem:[%s0 + $0x10] sm:$0xff]
  %v17 = vld [vmem:[%s0 + $0x18] sm:$0xff]
  %v18 = vld [vmem:[%s0 + $0x20] sm:$0xff]
  %v19 = vld [vmem:[%s0 + $0x28] sm:$0xff]
  %s20 = scalar_lea.vmem %s0, 48
  %v21 = vld [vmem:[%s20] ss:$8 sm:$0xf]
  %v22 = vld [vmem:[%s20] ss:$8 sm:$0x30]
  %v23 = vor.u32 %v21, %v22
  %v24 = vld [vmem:[%s1] sm:$0xff]
  %25 = vrot.lane.b32.xlu0 %v14, 19
  %v26 = vpop.permute.xlu0 %25
  %27 = vrot.lane.b32.xlu0 %v15, 19
  %v28 = vpop.permute.xlu0 %27
  %29 = vrot.lane.b32.xlu0 %v16, 19
  %v30 = vpop.permute.xlu0 %29
  %31 = vrot.lane.b32.xlu0 %v17, 19
  %v32 = vpop.permute.xlu0 %31
  %33 = vrot.lane.b32.xlu0 %v18, 19
  %v34 = vpop.permute.xlu0 %33
  %35 = vrot.lane.b32.xlu0 %v19, 19
  %v36 = vpop.permute.xlu0 %35
  %v37 = vlaneseq
  %v38 = vand.u32 %v37, 127
  %vm39 = vcmp.lt.s32.totalorder %v38, 19
  %v40 = vsel %vm39, %v34, %v36
  %v41 = vsel %vm39, %v32, %v34
  %v42 = vsel %vm39, %v30, %v32
  %v43 = vsel %vm39, %v28, %v30
  %v44 = vsel %vm39, %v26, %v28
  %v45 = vsel %vm39, %v36, %v26
  %46 = vrot.lane.b32.xlu0 %v14, 18
  %v47 = vpop.permute.xlu0 %46
  %48 = vrot.lane.b32.xlu0 %v15, 18
  %v49 = vpop.permute.xlu0 %48
  %50 = vrot.lane.b32.xlu0 %v16, 18
  %v51 = vpop.permute.xlu0 %50
  %52 = vrot.lane.b32.xlu0 %v17, 18
  %v53 = vpop.permute.xlu0 %52
  %54 = vrot.lane.b32.xlu0 %v18, 18
  %v55 = vpop.permute.xlu0 %54
  %56 = vrot.lane.b32.xlu0 %v19, 18
  %v57 = vpop.permute.xlu0 %56
  %vm58 = vcmp.lt.s32.totalorder %v38, 18
  %v59 = vsel %vm58, %v55, %v57
  %v60 = vsel %vm58, %v53, %v55
  %v61 = vsel %vm58, %v51, %v53
  %v62 = vsel %vm58, %v49, %v51
  %v63 = vsel %vm58, %v47, %v49
  %v64 = vsel %vm58, %v57, %v47
  %65 = vrot.lane.b32.xlu0 %v14, 17
  %v66 = vpop.permute.xlu0 %65
  %67 = vrot.lane.b32.xlu0 %v15, 17
  %v68 = vpop.permute.xlu0 %67
  %69 = vrot.lane.b32.xlu0 %v16, 17
  %v70 = vpop.permute.xlu0 %69
  %71 = vrot.lane.b32.xlu0 %v17, 17
  %v72 = vpop.permute.xlu0 %71
  %73 = vrot.lane.b32.xlu0 %v18, 17
  %v74 = vpop.permute.xlu0 %73
  %75 = vrot.lane.b32.xlu0 %v19, 17
  %v76 = vpop.permute.xlu0 %75
  %vm77 = vcmp.lt.s32.totalorder %v38, 17
  %v78 = vsel %vm77, %v74, %v76
  %v79 = vsel %vm77, %v72, %v74
  %v80 = vsel %vm77, %v70, %v72
  %v81 = vsel %vm77, %v68, %v70
  %v82 = vsel %vm77, %v66, %v68
  %v83 = vsel %vm77, %v76, %v66
  %84 = vrot.lane.b32.xlu0 %v14, 1
  %v85 = vpop.permute.xlu0 %84
  %86 = vrot.lane.b32.xlu0 %v15, 1
  %v87 = vpop.permute.xlu0 %86
  %88 = vrot.lane.b32.xlu0 %v16, 1
  %v89 = vpop.permute.xlu0 %88
  %90 = vrot.lane.b32.xlu0 %v17, 1
  %v91 = vpop.permute.xlu0 %90
  %92 = vrot.lane.b32.xlu0 %v18, 1
  %v93 = vpop.permute.xlu0 %92
  %94 = vrot.lane.b32.xlu0 %v19, 1
  %v95 = vpop.permute.xlu0 %94
  %vm96 = vcmp.lt.s32.totalorder %v38, 1
  %v97 = vsel %vm96, %v93, %v95
  %v98 = vsel %vm96, %v91, %v93
  %v99 = vsel %vm96, %v89, %v91
  %v100 = vsel %vm96, %v87, %v89
  %v101 = vsel %vm96, %v85, %v87
  %v102 = vsel %vm96, %v95, %v85
  %103 = vrot.lane.b32.xlu0 %v14, 127
  %v104 = vpop.permute.xlu0 %103
  %105 = vrot.lane.b32.xlu0 %v15, 127
  %v106 = vpop.permute.xlu0 %105
  %107 = vrot.lane.b32.xlu0 %v16, 127
  %v108 = vpop.permute.xlu0 %107
  %109 = vrot.lane.b32.xlu0 %v17, 127
  %v110 = vpop.permute.xlu0 %109
  %111 = vrot.lane.b32.xlu0 %v18, 127
  %v112 = vpop.permute.xlu0 %111
  %113 = vrot.lane.b32.xlu0 %v19, 127
  %v114 = vpop.permute.xlu0 %113
  %vm115 = vcmp.lt.s32.totalorder %v38, 127
  %v116 = vsel %vm115, %v112, %v114
  %v117 = vsel %vm115, %v110, %v112
  %v118 = vsel %vm115, %v108, %v110
  %v119 = vsel %vm115, %v106, %v108
  %v120 = vsel %vm115, %v104, %v106
  %v121 = vsel %vm115, %v114, %v104
  %122 = vrot.lane.b32.xlu0 %v14, 111
  %v123 = vpop.permute.xlu0 %122
  %124 = vrot.lane.b32.xlu0 %v15, 111
  %v125 = vpop.permute.xlu0 %124
  %126 = vrot.lane.b32.xlu0 %v16, 111
  %v127 = vpop.permute.xlu0 %126
  %128 = vrot.lane.b32.xlu0 %v17, 111
  %v129 = vpop.permute.xlu0 %128
  %130 = vrot.lane.b32.xlu0 %v18, 111
  %v131 = vpop.permute.xlu0 %130
  %132 = vrot.lane.b32.xlu0 %v19, 111
  %v133 = vpop.permute.xlu0 %132
  %vm134 = vcmp.lt.s32.totalorder %v38, 111
  %v135 = vsel %vm134, %v131, %v133
  %v136 = vsel %vm134, %v129, %v131
  %v137 = vsel %vm134, %v127, %v129
  %v138 = vsel %vm134, %v125, %v127
  %v139 = vsel %vm134, %v123, %v125
  %v140 = vsel %vm134, %v133, %v123
  %141 = vrot.lane.b32.xlu0 %v14, 110
  %v142 = vpop.permute.xlu0 %141
  %143 = vrot.lane.b32.xlu0 %v15, 110
  %v144 = vpop.permute.xlu0 %143
  %145 = vrot.lane.b32.xlu0 %v16, 110
  %v146 = vpop.permute.xlu0 %145
  %147 = vrot.lane.b32.xlu0 %v17, 110
  %v148 = vpop.permute.xlu0 %147
  %149 = vrot.lane.b32.xlu0 %v18, 110
  %v150 = vpop.permute.xlu0 %149
  %151 = vrot.lane.b32.xlu0 %v19, 110
  %v152 = vpop.permute.xlu0 %151
  %vm153 = vcmp.lt.s32.totalorder %v38, 110
  %v154 = vsel %vm153, %v150, %v152
  %v155 = vsel %vm153, %v148, %v150
  %v156 = vsel %vm153, %v146, %v148
  %v157 = vsel %vm153, %v144, %v146
  %v158 = vsel %vm153, %v142, %v144
  %v159 = vsel %vm153, %v152, %v142
  %160 = vrot.lane.b32.xlu0 %v14, 109
  %v161 = vpop.permute.xlu0 %160
  %162 = vrot.lane.b32.xlu0 %v15, 109
  %v163 = vpop.permute.xlu0 %162
  %164 = vrot.lane.b32.xlu0 %v16, 109
  %v165 = vpop.permute.xlu0 %164
  %166 = vrot.lane.b32.xlu0 %v17, 109
  %v167 = vpop.permute.xlu0 %166
  %168 = vrot.lane.b32.xlu0 %v18, 109
  %v169 = vpop.permute.xlu0 %168
  %170 = vrot.lane.b32.xlu0 %v19, 109
  %v171 = vpop.permute.xlu0 %170
  %vm172 = vcmp.lt.s32.totalorder %v38, 109
  %v173 = vsel %vm172, %v169, %v171
  %v174 = vsel %vm172, %v167, %v169
  %v175 = vsel %vm172, %v165, %v167
  %v176 = vsel %vm172, %v163, %v165
  %v177 = vsel %vm172, %v161, %v163
  %v178 = vsel %vm172, %v171, %v161
  %v179 = vld [vmem:[%s1 + $0x10] sm:$0xff]
  %181 = vset.pattern.permute.xlu0 32
  %182 = vperm.xlu0 %181, %v179
  %v183 = vpop.permute.xlu0 %182
  %vm185 = vcmask 588800
  %v187 = vsel %vm185, %v24, 0
  %189 = vmatpush.msra.mxu0 0.0
  %190 = vmatpush.msra.mxu0 0.0
  %191 = vmatpush.msra.mxu0 0.0
  %192 = vmatpush.msra.mxu0 0.0
  %193 = vmatpush.msra.mxu0 0.0
  %194 = vmatpush.msra.mxu0 0.0
  %195 = vmatpush.msra.mxu0 0.0
  %196 = vmatpush.msra.mxu0 %v177
  %197 = vmatpush.msra.mxu0 %v158
  %198 = vmatpush.msra.mxu0 %v139
  %199 = vmatpush.msra.mxu0 %v120
  %200 = vmatpush.msra.mxu0 %v14
  %201 = vmatpush.msra.mxu0 %v102
  %202 = vmatpush.msra.mxu0 %v83
  %203 = vmatpush.msra.mxu0 %v64
  %204 = vmatpush.msra.mxu0 %v45
  %205 = vmatmul.f32.gmra.mxu0 %v187
  %v206 = vpop.f32.mrf.mxu0
  %v207 = vadd.f32 %v183, %v206
  %208 = vdwg.mxu0
  %209 = vmatpush.msra.mxu0 0.0
  %210 = vmatpush.msra.mxu0 0.0
  %211 = vmatpush.msra.mxu0 0.0
  %212 = vmatpush.msra.mxu0 0.0
  %213 = vmatpush.msra.mxu0 0.0
  %214 = vmatpush.msra.mxu0 0.0
  %215 = vmatpush.msra.mxu0 0.0
  %216 = vmatpush.msra.mxu0 %v176
  %217 = vmatpush.msra.mxu0 %v157
  %218 = vmatpush.msra.mxu0 %v138
  %219 = vmatpush.msra.mxu0 %v119
  %220 = vmatpush.msra.mxu0 %v15
  %221 = vmatpush.msra.mxu0 %v101
  %222 = vmatpush.msra.mxu0 %v82
  %223 = vmatpush.msra.mxu0 %v63
  %224 = vmatpush.msra.mxu0 %v44
  %225 = vmatmul.f32.gmra.mxu0 %v187
  %v226 = vpop.f32.mrf.mxu0
  %v227 = vadd.f32 %v183, %v226
  %228 = vdwg.mxu0
  %229 = vmatpush.msra.mxu0 0.0
  %230 = vmatpush.msra.mxu0 0.0
  %231 = vmatpush.msra.mxu0 0.0
  %232 = vmatpush.msra.mxu0 0.0
  %233 = vmatpush.msra.mxu0 0.0
  %234 = vmatpush.msra.mxu0 0.0
  %235 = vmatpush.msra.mxu0 0.0
  %236 = vmatpush.msra.mxu0 %v175
  %237 = vmatpush.msra.mxu0 %v156
  %238 = vmatpush.msra.mxu0 %v137
  %239 = vmatpush.msra.mxu0 %v118
  %240 = vmatpush.msra.mxu0 %v16
  %241 = vmatpush.msra.mxu0 %v100
  %242 = vmatpush.msra.mxu0 %v81
  %243 = vmatpush.msra.mxu0 %v62
  %244 = vmatpush.msra.mxu0 %v43
  %245 = vmatmul.f32.gmra.mxu0 %v187
  %v246 = vpop.f32.mrf.mxu0
  %v247 = vadd.f32 %v183, %v246
  %248 = vdwg.mxu0
  %249 = vmatpush.msra.mxu0 0.0
  %250 = vmatpush.msra.mxu0 0.0
  %251 = vmatpush.msra.mxu0 0.0
  %252 = vmatpush.msra.mxu0 0.0
  %253 = vmatpush.msra.mxu0 0.0
  %254 = vmatpush.msra.mxu0 0.0
  %255 = vmatpush.msra.mxu0 0.0
  %256 = vmatpush.msra.mxu0 %v174
  %257 = vmatpush.msra.mxu0 %v155
  %258 = vmatpush.msra.mxu0 %v136
  %259 = vmatpush.msra.mxu0 %v117
  %260 = vmatpush.msra.mxu0 %v17
  %261 = vmatpush.msra.mxu0 %v99
  %262 = vmatpush.msra.mxu0 %v80
  %263 = vmatpush.msra.mxu0 %v61
  %264 = vmatpush.msra.mxu0 %v42
  %265 = vmatmul.f32.gmra.mxu0 %v187
  %v266 = vpop.f32.mrf.mxu0
  %v267 = vadd.f32 %v183, %v266
  %268 = vdwg.mxu0
  %269 = vmatpush.msra.mxu0 0.0
  %270 = vmatpush.msra.mxu0 0.0
  %271 = vmatpush.msra.mxu0 0.0
  %272 = vmatpush.msra.mxu0 0.0
  %273 = vmatpush.msra.mxu0 0.0
  %274 = vmatpush.msra.mxu0 0.0
  %275 = vmatpush.msra.mxu0 0.0
  %276 = vmatpush.msra.mxu0 %v173
  %277 = vmatpush.msra.mxu0 %v154
  %278 = vmatpush.msra.mxu0 %v135
  %279 = vmatpush.msra.mxu0 %v116
  %280 = vmatpush.msra.mxu0 %v18
  %281 = vmatpush.msra.mxu0 %v98
  %282 = vmatpush.msra.mxu0 %v79
  %283 = vmatpush.msra.mxu0 %v60
  %284 = vmatpush.msra.mxu0 %v41
  %285 = vmatmul.f32.gmra.mxu0 %v187
  %v286 = vpop.f32.mrf.mxu0
  %v287 = vadd.f32 %v183, %v286
  %288 = vdwg.mxu0
  %289 = vmatpush.msra.mxu0 0.0
  %290 = vmatpush.msra.mxu0 0.0
  %291 = vmatpush.msra.mxu0 0.0
  %292 = vmatpush.msra.mxu0 0.0
  %293 = vmatpush.msra.mxu0 0.0
  %294 = vmatpush.msra.mxu0 0.0
  %295 = vmatpush.msra.mxu0 0.0
  %296 = vmatpush.msra.mxu0 %v178
  %297 = vmatpush.msra.mxu0 %v159
  %298 = vmatpush.msra.mxu0 %v140
  %299 = vmatpush.msra.mxu0 %v121
  %300 = vmatpush.msra.mxu0 %v19
  %301 = vmatpush.msra.mxu0 %v97
  %302 = vmatpush.msra.mxu0 %v78
  %303 = vmatpush.msra.mxu0 %v59
  %304 = vmatpush.msra.mxu0 %v40
  %305 = vmatmul.f32.gmra.mxu0 %v187
  %v306 = vpop.f32.mrf.mxu0
  %v307 = vadd.f32 %v183, %v306
  %308 = vdwg.mxu0
  %v310 = vperm.slane %v23, 0
  %v311 = vperm.slane %v23, 1
  %v312 = vperm.slane %v23, 2
  %v313 = vperm.slane %v23, 3
  %v314 = vperm.slane %v23, 4
  %v315 = vperm.slane %v23, 5
  %v322 = vmul.f32 %v207, %v310
  %v323 = vmul.f32 %v227, %v311
  %v324 = vmul.f32 %v247, %v312
  %v325 = vmul.f32 %v267, %v313
  %v326 = vmul.f32 %v287, %v314
  %v327 = vmul.f32 %v307, %v315
  %v328 = vld [vmem:[%s1 + $0x18] sm:$0xff]
  %329 = vrot.lane.b32.xlu0 %v322, 19
  %v330 = vpop.permute.xlu0 %329
  %331 = vrot.lane.b32.xlu0 %v323, 19
  %v332 = vpop.permute.xlu0 %331
  %333 = vrot.lane.b32.xlu0 %v324, 19
  %v334 = vpop.permute.xlu0 %333
  %335 = vrot.lane.b32.xlu0 %v325, 19
  %v336 = vpop.permute.xlu0 %335
  %337 = vrot.lane.b32.xlu0 %v326, 19
  %v338 = vpop.permute.xlu0 %337
  %339 = vrot.lane.b32.xlu0 %v327, 19
  %v340 = vpop.permute.xlu0 %339
  %v341 = vsel %vm39, %v338, %v340
  %v342 = vsel %vm39, %v336, %v338
  %v343 = vsel %vm39, %v334, %v336
  %v344 = vsel %vm39, %v332, %v334
  %v345 = vsel %vm39, %v330, %v332
  %v346 = vsel %vm39, %v340, %v330
  %347 = vrot.lane.b32.xlu0 %v322, 18
  %v348 = vpop.permute.xlu0 %347
  %349 = vrot.lane.b32.xlu0 %v323, 18
  %v350 = vpop.permute.xlu0 %349
  %351 = vrot.lane.b32.xlu0 %v324, 18
  %v352 = vpop.permute.xlu0 %351
  %353 = vrot.lane.b32.xlu0 %v325, 18
  %v354 = vpop.permute.xlu0 %353
  %355 = vrot.lane.b32.xlu0 %v326, 18
  %v356 = vpop.permute.xlu0 %355
  %357 = vrot.lane.b32.xlu0 %v327, 18
  %v358 = vpop.permute.xlu0 %357
  %v359 = vsel %vm58, %v356, %v358
  %v360 = vsel %vm58, %v354, %v356
  %v361 = vsel %vm58, %v352, %v354
  %v362 = vsel %vm58, %v350, %v352
  %v363 = vsel %vm58, %v348, %v350
  %v364 = vsel %vm58, %v358, %v348
  %365 = vrot.lane.b32.xlu0 %v322, 17
  %v366 = vpop.permute.xlu0 %365
  %367 = vrot.lane.b32.xlu0 %v323, 17
  %v368 = vpop.permute.xlu0 %367
  %369 = vrot.lane.b32.xlu0 %v324, 17
  %v370 = vpop.permute.xlu0 %369
  %371 = vrot.lane.b32.xlu0 %v325, 17
  %v372 = vpop.permute.xlu0 %371
  %373 = vrot.lane.b32.xlu0 %v326, 17
  %v374 = vpop.permute.xlu0 %373
  %375 = vrot.lane.b32.xlu0 %v327, 17
  %v376 = vpop.permute.xlu0 %375
  %v377 = vsel %vm77, %v374, %v376
  %v378 = vsel %vm77, %v372, %v374
  %v379 = vsel %vm77, %v370, %v372
  %v380 = vsel %vm77, %v368, %v370
  %v381 = vsel %vm77, %v366, %v368
  %v382 = vsel %vm77, %v376, %v366
  %383 = vrot.lane.b32.xlu0 %v322, 1
  %v384 = vpop.permute.xlu0 %383
  %385 = vrot.lane.b32.xlu0 %v323, 1
  %v386 = vpop.permute.xlu0 %385
  %387 = vrot.lane.b32.xlu0 %v324, 1
  %v388 = vpop.permute.xlu0 %387
  %389 = vrot.lane.b32.xlu0 %v325, 1
  %v390 = vpop.permute.xlu0 %389
  %391 = vrot.lane.b32.xlu0 %v326, 1
  %v392 = vpop.permute.xlu0 %391
  %393 = vrot.lane.b32.xlu0 %v327, 1
  %v394 = vpop.permute.xlu0 %393
  %v395 = vsel %vm96, %v392, %v394
  %v396 = vsel %vm96, %v390, %v392
  %v397 = vsel %vm96, %v388, %v390
  %v398 = vsel %vm96, %v386, %v388
  %v399 = vsel %vm96, %v384, %v386
  %v400 = vsel %vm96, %v394, %v384
  %401 = vrot.lane.b32.xlu0 %v322, 127
  %v402 = vpop.permute.xlu0 %401
  %403 = vrot.lane.b32.xlu0 %v323, 127
  %v404 = vpop.permute.xlu0 %403
  %405 = vrot.lane.b32.xlu0 %v324, 127
  %v406 = vpop.permute.xlu0 %405
  %407 = vrot.lane.b32.xlu0 %v325, 127
  %v408 = vpop.permute.xlu0 %407
  %409 = vrot.lane.b32.xlu0 %v326, 127
  %v410 = vpop.permute.xlu0 %409
  %411 = vrot.lane.b32.xlu0 %v327, 127
  %v412 = vpop.permute.xlu0 %411
  %v413 = vsel %vm115, %v410, %v412
  %v414 = vsel %vm115, %v408, %v410
  %v415 = vsel %vm115, %v406, %v408
  %v416 = vsel %vm115, %v404, %v406
  %v417 = vsel %vm115, %v402, %v404
  %v418 = vsel %vm115, %v412, %v402
  %419 = vrot.lane.b32.xlu0 %v322, 111
  %v420 = vpop.permute.xlu0 %419
  %421 = vrot.lane.b32.xlu0 %v323, 111
  %v422 = vpop.permute.xlu0 %421
  %423 = vrot.lane.b32.xlu0 %v324, 111
  %v424 = vpop.permute.xlu0 %423
  %425 = vrot.lane.b32.xlu0 %v325, 111
  %v426 = vpop.permute.xlu0 %425
  %427 = vrot.lane.b32.xlu0 %v326, 111
  %v428 = vpop.permute.xlu0 %427
  %429 = vrot.lane.b32.xlu0 %v327, 111
  %v430 = vpop.permute.xlu0 %429
  %v431 = vsel %vm134, %v428, %v430
  %v432 = vsel %vm134, %v426, %v428
  %v433 = vsel %vm134, %v424, %v426
  %v434 = vsel %vm134, %v422, %v424
  %v435 = vsel %vm134, %v420, %v422
  %v436 = vsel %vm134, %v430, %v420
  %437 = vrot.lane.b32.xlu0 %v322, 110
  %v438 = vpop.permute.xlu0 %437
  %439 = vrot.lane.b32.xlu0 %v323, 110
  %v440 = vpop.permute.xlu0 %439
  %441 = vrot.lane.b32.xlu0 %v324, 110
  %v442 = vpop.permute.xlu0 %441
  %443 = vrot.lane.b32.xlu0 %v325, 110
  %v444 = vpop.permute.xlu0 %443
  %445 = vrot.lane.b32.xlu0 %v326, 110
  %v446 = vpop.permute.xlu0 %445
  %447 = vrot.lane.b32.xlu0 %v327, 110
  %v448 = vpop.permute.xlu0 %447
  %v449 = vsel %vm153, %v446, %v448
  %v450 = vsel %vm153, %v444, %v446
  %v451 = vsel %vm153, %v442, %v444
  %v452 = vsel %vm153, %v440, %v442
  %v453 = vsel %vm153, %v438, %v440
  %v454 = vsel %vm153, %v448, %v438
  %455 = vrot.lane.b32.xlu0 %v322, 109
  %v456 = vpop.permute.xlu0 %455
  %457 = vrot.lane.b32.xlu0 %v323, 109
  %v458 = vpop.permute.xlu0 %457
  %459 = vrot.lane.b32.xlu0 %v324, 109
  %v460 = vpop.permute.xlu0 %459
  %461 = vrot.lane.b32.xlu0 %v325, 109
  %v462 = vpop.permute.xlu0 %461
  %463 = vrot.lane.b32.xlu0 %v326, 109
  %v464 = vpop.permute.xlu0 %463
  %465 = vrot.lane.b32.xlu0 %v327, 109
  %v466 = vpop.permute.xlu0 %465
  %v467 = vsel %vm172, %v464, %v466
  %v468 = vsel %vm172, %v462, %v464
  %v469 = vsel %vm172, %v460, %v462
  %v470 = vsel %vm172, %v458, %v460
  %v471 = vsel %vm172, %v456, %v458
  %v472 = vsel %vm172, %v466, %v456
  %v473 = vld [vmem:[%s1 + $0x28] sm:$0xff]
  %475 = vset.pattern.permute.xlu0 32
  %476 = vperm.xlu0 %475, %v473
  %v477 = vpop.permute.xlu0 %476
  %v480 = vsel %vm185, %v328, 0
  %482 = vmatpush.msra.mxu0 0.0
  %483 = vmatpush.msra.mxu0 0.0
  %484 = vmatpush.msra.mxu0 0.0
  %485 = vmatpush.msra.mxu0 0.0
  %486 = vmatpush.msra.mxu0 0.0
  %487 = vmatpush.msra.mxu0 0.0
  %488 = vmatpush.msra.mxu0 0.0
  %489 = vmatpush.msra.mxu0 %v471
  %490 = vmatpush.msra.mxu0 %v453
  %491 = vmatpush.msra.mxu0 %v435
  %492 = vmatpush.msra.mxu0 %v417
  %493 = vmatpush.msra.mxu0 %v322
  %494 = vmatpush.msra.mxu0 %v400
  %495 = vmatpush.msra.mxu0 %v382
  %496 = vmatpush.msra.mxu0 %v364
  %497 = vmatpush.msra.mxu0 %v346
  %498 = vmatmul.f32.gmra.mxu0 %v480
  %v499 = vpop.f32.mrf.mxu0
  %v500 = vadd.f32 %v477, %v499
  %501 = vdwg.mxu0
  %502 = vmatpush.msra.mxu0 0.0
  %503 = vmatpush.msra.mxu0 0.0
  %504 = vmatpush.msra.mxu0 0.0
  %505 = vmatpush.msra.mxu0 0.0
  %506 = vmatpush.msra.mxu0 0.0
  %507 = vmatpush.msra.mxu0 0.0
  %508 = vmatpush.msra.mxu0 0.0
  %509 = vmatpush.msra.mxu0 %v470
  %510 = vmatpush.msra.mxu0 %v452
  %511 = vmatpush.msra.mxu0 %v434
  %512 = vmatpush.msra.mxu0 %v416
  %513 = vmatpush.msra.mxu0 %v323
  %514 = vmatpush.msra.mxu0 %v399
  %515 = vmatpush.msra.mxu0 %v381
  %516 = vmatpush.msra.mxu0 %v363
  %517 = vmatpush.msra.mxu0 %v345
  %518 = vmatmul.f32.gmra.mxu0 %v480
  %v519 = vpop.f32.mrf.mxu0
  %v520 = vadd.f32 %v477, %v519
  %521 = vdwg.mxu0
  %522 = vmatpush.msra.mxu0 0.0
  %523 = vmatpush.msra.mxu0 0.0
  %524 = vmatpush.msra.mxu0 0.0
  %525 = vmatpush.msra.mxu0 0.0
  %526 = vmatpush.msra.mxu0 0.0
  %527 = vmatpush.msra.mxu0 0.0
  %528 = vmatpush.msra.mxu0 0.0
  %529 = vmatpush.msra.mxu0 %v469
  %530 = vmatpush.msra.mxu0 %v451
  %531 = vmatpush.msra.mxu0 %v433
  %532 = vmatpush.msra.mxu0 %v415
  %533 = vmatpush.msra.mxu0 %v324
  %534 = vmatpush.msra.mxu0 %v398
  %535 = vmatpush.msra.mxu0 %v380
  %536 = vmatpush.msra.mxu0 %v362
  %537 = vmatpush.msra.mxu0 %v344
  %538 = vmatmul.f32.gmra.mxu0 %v480
  %v539 = vpop.f32.mrf.mxu0
  %v540 = vadd.f32 %v477, %v539
  %541 = vdwg.mxu0
  %542 = vmatpush.msra.mxu0 0.0
  %543 = vmatpush.msra.mxu0 0.0
  %544 = vmatpush.msra.mxu0 0.0
  %545 = vmatpush.msra.mxu0 0.0
  %546 = vmatpush.msra.mxu0 0.0
  %547 = vmatpush.msra.mxu0 0.0
  %548 = vmatpush.msra.mxu0 0.0
  %549 = vmatpush.msra.mxu0 %v468
  %550 = vmatpush.msra.mxu0 %v450
  %551 = vmatpush.msra.mxu0 %v432
  %552 = vmatpush.msra.mxu0 %v414
  %553 = vmatpush.msra.mxu0 %v325
  %554 = vmatpush.msra.mxu0 %v397
  %555 = vmatpush.msra.mxu0 %v379
  %556 = vmatpush.msra.mxu0 %v361
  %557 = vmatpush.msra.mxu0 %v343
  %558 = vmatmul.f32.gmra.mxu0 %v480
  %v559 = vpop.f32.mrf.mxu0
  %v560 = vadd.f32 %v477, %v559
  %561 = vdwg.mxu0
  %562 = vmatpush.msra.mxu0 0.0
  %563 = vmatpush.msra.mxu0 0.0
  %564 = vmatpush.msra.mxu0 0.0
  %565 = vmatpush.msra.mxu0 0.0
  %566 = vmatpush.msra.mxu0 0.0
  %567 = vmatpush.msra.mxu0 0.0
  %568 = vmatpush.msra.mxu0 0.0
  %569 = vmatpush.msra.mxu0 %v467
  %570 = vmatpush.msra.mxu0 %v449
  %571 = vmatpush.msra.mxu0 %v431
  %572 = vmatpush.msra.mxu0 %v413
  %573 = vmatpush.msra.mxu0 %v326
  %574 = vmatpush.msra.mxu0 %v396
  %575 = vmatpush.msra.mxu0 %v378
  %576 = vmatpush.msra.mxu0 %v360
  %577 = vmatpush.msra.mxu0 %v342
  %578 = vmatmul.f32.gmra.mxu0 %v480
  %v579 = vpop.f32.mrf.mxu0
  %v580 = vadd.f32 %v477, %v579
  %581 = vdwg.mxu0
  %582 = vmatpush.msra.mxu0 0.0
  %583 = vmatpush.msra.mxu0 0.0
  %584 = vmatpush.msra.mxu0 0.0
  %585 = vmatpush.msra.mxu0 0.0
  %586 = vmatpush.msra.mxu0 0.0
  %587 = vmatpush.msra.mxu0 0.0
  %588 = vmatpush.msra.mxu0 0.0
  %589 = vmatpush.msra.mxu0 %v472
  %590 = vmatpush.msra.mxu0 %v454
  %591 = vmatpush.msra.mxu0 %v436
  %592 = vmatpush.msra.mxu0 %v418
  %593 = vmatpush.msra.mxu0 %v327
  %594 = vmatpush.msra.mxu0 %v395
  %595 = vmatpush.msra.mxu0 %v377
  %596 = vmatpush.msra.mxu0 %v359
  %597 = vmatpush.msra.mxu0 %v341
  %598 = vmatmul.f32.gmra.mxu0 %v480
  %v599 = vpop.f32.mrf.mxu0
  %v600 = vadd.f32 %v477, %v599
  %601 = vdwg.mxu0
  %v602 = vmax.f32 %v500, 0.0
  %v603 = vmax.f32 %v520, 0.0
  %v604 = vmax.f32 %v540, 0.0
  %v605 = vmax.f32 %v560, 0.0
  %v606 = vmax.f32 %v580, 0.0
  %v607 = vmax.f32 %v600, 0.0
  %v608 = vmul.f32 %v602, %v310
  %v609 = vmul.f32 %v603, %v311
  %v610 = vmul.f32 %v604, %v312
  %v611 = vmul.f32 %v605, %v313
  %v612 = vmul.f32 %v606, %v314
  %v613 = vmul.f32 %v607, %v315
  %v614 = vld [vmem:[%s1 + $0x30] sm:$0xff]
  %615 = vrot.lane.b32.xlu0 %v608, 19
  %v616 = vpop.permute.xlu0 %615
  %617 = vrot.lane.b32.xlu0 %v609, 19
  %v618 = vpop.permute.xlu0 %617
  %619 = vrot.lane.b32.xlu0 %v610, 19
  %v620 = vpop.permute.xlu0 %619
  %621 = vrot.lane.b32.xlu0 %v611, 19
  %v622 = vpop.permute.xlu0 %621
  %623 = vrot.lane.b32.xlu0 %v612, 19
  %v624 = vpop.permute.xlu0 %623
  %625 = vrot.lane.b32.xlu0 %v613, 19
  %v626 = vpop.permute.xlu0 %625
  %v627 = vsel %vm39, %v624, %v626
  %v628 = vsel %vm39, %v622, %v624
  %v629 = vsel %vm39, %v620, %v622
  %v630 = vsel %vm39, %v618, %v620
  %v631 = vsel %vm39, %v616, %v618
  %v632 = vsel %vm39, %v626, %v616
  %633 = vrot.lane.b32.xlu0 %v608, 18
  %v634 = vpop.permute.xlu0 %633
  %635 = vrot.lane.b32.xlu0 %v609, 18
  %v636 = vpop.permute.xlu0 %635
  %637 = vrot.lane.b32.xlu0 %v610, 18
  %v638 = vpop.permute.xlu0 %637
  %639 = vrot.lane.b32.xlu0 %v611, 18
  %v640 = vpop.permute.xlu0 %639
  %641 = vrot.lane.b32.xlu0 %v612, 18
  %v642 = vpop.permute.xlu0 %641
  %643 = vrot.lane.b32.xlu0 %v613, 18
  %v644 = vpop.permute.xlu0 %643
  %v645 = vsel %vm58, %v642, %v644
  %v646 = vsel %vm58, %v640, %v642
  %v647 = vsel %vm58, %v638, %v640
  %v648 = vsel %vm58, %v636, %v638
  %v649 = vsel %vm58, %v634, %v636
  %v650 = vsel %vm58, %v644, %v634
  %651 = vrot.lane.b32.xlu0 %v608, 17
  %v652 = vpop.permute.xlu0 %651
  %653 = vrot.lane.b32.xlu0 %v609, 17
  %v654 = vpop.permute.xlu0 %653
  %655 = vrot.lane.b32.xlu0 %v610, 17
  %v656 = vpop.permute.xlu0 %655
  %657 = vrot.lane.b32.xlu0 %v611, 17
  %v658 = vpop.permute.xlu0 %657
  %659 = vrot.lane.b32.xlu0 %v612, 17
  %v660 = vpop.permute.xlu0 %659
  %661 = vrot.lane.b32.xlu0 %v613, 17
  %v662 = vpop.permute.xlu0 %661
  %v663 = vsel %vm77, %v660, %v662
  %v664 = vsel %vm77, %v658, %v660
  %v665 = vsel %vm77, %v656, %v658
  %v666 = vsel %vm77, %v654, %v656
  %v667 = vsel %vm77, %v652, %v654
  %v668 = vsel %vm77, %v662, %v652
  %669 = vrot.lane.b32.xlu0 %v608, 1
  %v670 = vpop.permute.xlu0 %669
  %671 = vrot.lane.b32.xlu0 %v609, 1
  %v672 = vpop.permute.xlu0 %671
  %673 = vrot.lane.b32.xlu0 %v610, 1
  %v674 = vpop.permute.xlu0 %673
  %675 = vrot.lane.b32.xlu0 %v611, 1
  %v676 = vpop.permute.xlu0 %675
  %677 = vrot.lane.b32.xlu0 %v612, 1
  %v678 = vpop.permute.xlu0 %677
  %679 = vrot.lane.b32.xlu0 %v613, 1
  %v680 = vpop.permute.xlu0 %679
  %v681 = vsel %vm96, %v678, %v680
  %v682 = vsel %vm96, %v676, %v678
  %v683 = vsel %vm96, %v674, %v676
  %v684 = vsel %vm96, %v672, %v674
  %v685 = vsel %vm96, %v670, %v672
  %v686 = vsel %vm96, %v680, %v670
  %687 = vrot.lane.b32.xlu0 %v608, 127
  %v688 = vpop.permute.xlu0 %687
  %689 = vrot.lane.b32.xlu0 %v609, 127
  %v690 = vpop.permute.xlu0 %689
  %691 = vrot.lane.b32.xlu0 %v610, 127
  %v692 = vpop.permute.xlu0 %691
  %693 = vrot.lane.b32.xlu0 %v611, 127
  %v694 = vpop.permute.xlu0 %693
  %695 = vrot.lane.b32.xlu0 %v612, 127
  %v696 = vpop.permute.xlu0 %695
  %697 = vrot.lane.b32.xlu0 %v613, 127
  %v698 = vpop.permute.xlu0 %697
  %v699 = vsel %vm115, %v696, %v698
  %v700 = vsel %vm115, %v694, %v696
  %v701 = vsel %vm115, %v692, %v694
  %v702 = vsel %vm115, %v690, %v692
  %v703 = vsel %vm115, %v688, %v690
  %v704 = vsel %vm115, %v698, %v688
  %705 = vrot.lane.b32.xlu0 %v608, 111
  %v706 = vpop.permute.xlu0 %705
  %707 = vrot.lane.b32.xlu0 %v609, 111
  %v708 = vpop.permute.xlu0 %707
  %709 = vrot.lane.b32.xlu0 %v610, 111
  %v710 = vpop.permute.xlu0 %709
  %711 = vrot.lane.b32.xlu0 %v611, 111
  %v712 = vpop.permute.xlu0 %711
  %713 = vrot.lane.b32.xlu0 %v612, 111
  %v714 = vpop.permute.xlu0 %713
  %715 = vrot.lane.b32.xlu0 %v613, 111
  %v716 = vpop.permute.xlu0 %715
  %v717 = vsel %vm134, %v714, %v716
  %v718 = vsel %vm134, %v712, %v714
  %v719 = vsel %vm134, %v710, %v712
  %v720 = vsel %vm134, %v708, %v710
  %v721 = vsel %vm134, %v706, %v708
  %v722 = vsel %vm134, %v716, %v706
  %723 = vrot.lane.b32.xlu0 %v608, 110
  %v724 = vpop.permute.xlu0 %723
  %725 = vrot.lane.b32.xlu0 %v609, 110
  %v726 = vpop.permute.xlu0 %725
  %727 = vrot.lane.b32.xlu0 %v610, 110
  %v728 = vpop.permute.xlu0 %727
  %729 = vrot.lane.b32.xlu0 %v611, 110
  %v730 = vpop.permute.xlu0 %729
  %731 = vrot.lane.b32.xlu0 %v612, 110
  %v732 = vpop.permute.xlu0 %731
  %733 = vrot.lane.b32.xlu0 %v613, 110
  %v734 = vpop.permute.xlu0 %733
  %v735 = vsel %vm153, %v732, %v734
  %v736 = vsel %vm153, %v730, %v732
  %v737 = vsel %vm153, %v728, %v730
  %v738 = vsel %vm153, %v726, %v728
  %v739 = vsel %vm153, %v724, %v726
  %v740 = vsel %vm153, %v734, %v724
  %741 = vrot.lane.b32.xlu0 %v608, 109
  %v742 = vpop.permute.xlu0 %741
  %743 = vrot.lane.b32.xlu0 %v609, 109
  %v744 = vpop.permute.xlu0 %743
  %745 = vrot.lane.b32.xlu0 %v610, 109
  %v746 = vpop.permute.xlu0 %745
  %747 = vrot.lane.b32.xlu0 %v611, 109
  %v748 = vpop.permute.xlu0 %747
  %749 = vrot.lane.b32.xlu0 %v612, 109
  %v750 = vpop.permute.xlu0 %749
  %751 = vrot.lane.b32.xlu0 %v613, 109
  %v752 = vpop.permute.xlu0 %751
  %v753 = vsel %vm172, %v750, %v752
  %v754 = vsel %vm172, %v748, %v750
  %v755 = vsel %vm172, %v746, %v748
  %v756 = vsel %vm172, %v744, %v746
  %v757 = vsel %vm172, %v742, %v744
  %v758 = vsel %vm172, %v752, %v742
  %v759 = vld [vmem:[%s1 + $0x40] sm:$0xff]
  %761 = vset.pattern.permute.xlu0 32
  %762 = vperm.xlu0 %761, %v759
  %v763 = vpop.permute.xlu0 %762
  %v766 = vsel %vm185, %v614, 0
  %768 = vmatpush.msra.mxu0 0.0
  %769 = vmatpush.msra.mxu0 0.0
  %770 = vmatpush.msra.mxu0 0.0
  %771 = vmatpush.msra.mxu0 0.0
  %772 = vmatpush.msra.mxu0 0.0
  %773 = vmatpush.msra.mxu0 0.0
  %774 = vmatpush.msra.mxu0 0.0
  %775 = vmatpush.msra.mxu0 %v757
  %776 = vmatpush.msra.mxu0 %v739
  %777 = vmatpush.msra.mxu0 %v721
  %778 = vmatpush.msra.mxu0 %v703
  %779 = vmatpush.msra.mxu0 %v608
  %780 = vmatpush.msra.mxu0 %v686
  %781 = vmatpush.msra.mxu0 %v668
  %782 = vmatpush.msra.mxu0 %v650
  %783 = vmatpush.msra.mxu0 %v632
  %784 = vmatmul.f32.gmra.mxu0 %v766
  %v785 = vpop.f32.mrf.mxu0
  %v786 = vadd.f32 %v763, %v785
  %787 = vdwg.mxu0
  %788 = vmatpush.msra.mxu0 0.0
  %789 = vmatpush.msra.mxu0 0.0
  %790 = vmatpush.msra.mxu0 0.0
  %791 = vmatpush.msra.mxu0 0.0
  %792 = vmatpush.msra.mxu0 0.0
  %793 = vmatpush.msra.mxu0 0.0
  %794 = vmatpush.msra.mxu0 0.0
  %795 = vmatpush.msra.mxu0 %v756
  %796 = vmatpush.msra.mxu0 %v738
  %797 = vmatpush.msra.mxu0 %v720
  %798 = vmatpush.msra.mxu0 %v702
  %799 = vmatpush.msra.mxu0 %v609
  %800 = vmatpush.msra.mxu0 %v685
  %801 = vmatpush.msra.mxu0 %v667
  %802 = vmatpush.msra.mxu0 %v649
  %803 = vmatpush.msra.mxu0 %v631
  %804 = vmatmul.f32.gmra.mxu0 %v766
  %v805 = vpop.f32.mrf.mxu0
  %v806 = vadd.f32 %v763, %v805
  %807 = vdwg.mxu0
  %808 = vmatpush.msra.mxu0 0.0
  %809 = vmatpush.msra.mxu0 0.0
  %810 = vmatpush.msra.mxu0 0.0
  %811 = vmatpush.msra.mxu0 0.0
  %812 = vmatpush.msra.mxu0 0.0
  %813 = vmatpush.msra.mxu0 0.0
  %814 = vmatpush.msra.mxu0 0.0
  %815 = vmatpush.msra.mxu0 %v755
  %816 = vmatpush.msra.mxu0 %v737
  %817 = vmatpush.msra.mxu0 %v719
  %818 = vmatpush.msra.mxu0 %v701
  %819 = vmatpush.msra.mxu0 %v610
  %820 = vmatpush.msra.mxu0 %v684
  %821 = vmatpush.msra.mxu0 %v666
  %822 = vmatpush.msra.mxu0 %v648
  %823 = vmatpush.msra.mxu0 %v630
  %824 = vmatmul.f32.gmra.mxu0 %v766
  %v825 = vpop.f32.mrf.mxu0
  %v826 = vadd.f32 %v763, %v825
  %827 = vdwg.mxu0
  %828 = vmatpush.msra.mxu0 0.0
  %829 = vmatpush.msra.mxu0 0.0
  %830 = vmatpush.msra.mxu0 0.0
  %831 = vmatpush.msra.mxu0 0.0
  %832 = vmatpush.msra.mxu0 0.0
  %833 = vmatpush.msra.mxu0 0.0
  %834 = vmatpush.msra.mxu0 0.0
  %835 = vmatpush.msra.mxu0 %v754
  %836 = vmatpush.msra.mxu0 %v736
  %837 = vmatpush.msra.mxu0 %v718
  %838 = vmatpush.msra.mxu0 %v700
  %839 = vmatpush.msra.mxu0 %v611
  %840 = vmatpush.msra.mxu0 %v683
  %841 = vmatpush.msra.mxu0 %v665
  %842 = vmatpush.msra.mxu0 %v647
  %843 = vmatpush.msra.mxu0 %v629
  %844 = vmatmul.f32.gmra.mxu0 %v766
  %v845 = vpop.f32.mrf.mxu0
  %v846 = vadd.f32 %v763, %v845
  %847 = vdwg.mxu0
  %848 = vmatpush.msra.mxu0 0.0
  %849 = vmatpush.msra.mxu0 0.0
  %850 = vmatpush.msra.mxu0 0.0
  %851 = vmatpush.msra.mxu0 0.0
  %852 = vmatpush.msra.mxu0 0.0
  %853 = vmatpush.msra.mxu0 0.0
  %854 = vmatpush.msra.mxu0 0.0
  %855 = vmatpush.msra.mxu0 %v753
  %856 = vmatpush.msra.mxu0 %v735
  %857 = vmatpush.msra.mxu0 %v717
  %858 = vmatpush.msra.mxu0 %v699
  %859 = vmatpush.msra.mxu0 %v612
  %860 = vmatpush.msra.mxu0 %v682
  %861 = vmatpush.msra.mxu0 %v664
  %862 = vmatpush.msra.mxu0 %v646
  %863 = vmatpush.msra.mxu0 %v628
  %864 = vmatmul.f32.gmra.mxu0 %v766
  %v865 = vpop.f32.mrf.mxu0
  %v866 = vadd.f32 %v763, %v865
  %867 = vdwg.mxu0
  %868 = vmatpush.msra.mxu0 0.0
  %869 = vmatpush.msra.mxu0 0.0
  %870 = vmatpush.msra.mxu0 0.0
  %871 = vmatpush.msra.mxu0 0.0
  %872 = vmatpush.msra.mxu0 0.0
  %873 = vmatpush.msra.mxu0 0.0
  %874 = vmatpush.msra.mxu0 0.0
  %875 = vmatpush.msra.mxu0 %v758
  %876 = vmatpush.msra.mxu0 %v740
  %877 = vmatpush.msra.mxu0 %v722
  %878 = vmatpush.msra.mxu0 %v704
  %879 = vmatpush.msra.mxu0 %v613
  %880 = vmatpush.msra.mxu0 %v681
  %881 = vmatpush.msra.mxu0 %v663
  %882 = vmatpush.msra.mxu0 %v645
  %883 = vmatpush.msra.mxu0 %v627
  %884 = vmatmul.f32.gmra.mxu0 %v766
  %v885 = vpop.f32.mrf.mxu0
  %v886 = vadd.f32 %v763, %v885
  %887 = vdwg.mxu0
  %v888 = vmul.f32 %v786, %v310
  %v889 = vmul.f32 %v806, %v311
  %v890 = vmul.f32 %v826, %v312
  %v891 = vmul.f32 %v846, %v313
  %v892 = vmul.f32 %v866, %v314
  %v893 = vmul.f32 %v886, %v315
  %v894 = vadd.f32 %v322, %v888
  %v895 = vadd.f32 %v323, %v889
  %v896 = vadd.f32 %v324, %v890
  %v897 = vadd.f32 %v325, %v891
  %v898 = vadd.f32 %v326, %v892
  %v899 = vadd.f32 %v327, %v893
  %v900 = vmax.f32 %v894, 0.0
  %v901 = vmax.f32 %v895, 0.0
  %v902 = vmax.f32 %v896, 0.0
  %v903 = vmax.f32 %v897, 0.0
  %v904 = vmax.f32 %v898, 0.0
  %v905 = vmax.f32 %v899, 0.0
  %s906 = scalar_lea.vmem %s0, 96
  %v907 = vld [vmem:[%s906] ss:$8 sm:$0x3]
  %v908 = vld [vmem:[%s1 + $0x48] sm:$0xff]
  %v909 = vld [vmem:[%s1 + $0x60] sm:$0xff]
  %v910 = vld [vmem:[%s1 + $0x78] sm:$0xff]
  %v911 = vld [vmem:[%s1 + $0x90] sm:$0xff]
  %912 = vrot.lane.b32.xlu0 %v900, 19
  %v913 = vpop.permute.xlu0 %912
  %914 = vrot.lane.b32.xlu0 %v901, 19
  %v915 = vpop.permute.xlu0 %914
  %916 = vrot.lane.b32.xlu0 %v902, 19
  %v917 = vpop.permute.xlu0 %916
  %918 = vrot.lane.b32.xlu0 %v903, 19
  %v919 = vpop.permute.xlu0 %918
  %920 = vrot.lane.b32.xlu0 %v904, 19
  %v921 = vpop.permute.xlu0 %920
  %922 = vrot.lane.b32.xlu0 %v905, 19
  %v923 = vpop.permute.xlu0 %922
  %v924 = vsel %vm39, %v921, %v923
  %v925 = vsel %vm39, %v919, %v921
  %v926 = vsel %vm39, %v917, %v919
  %v927 = vsel %vm39, %v915, %v917
  %v928 = vsel %vm39, %v913, %v915
  %v929 = vsel %vm39, %v923, %v913
  %930 = vrot.lane.b32.xlu0 %v900, 18
  %v931 = vpop.permute.xlu0 %930
  %932 = vrot.lane.b32.xlu0 %v901, 18
  %v933 = vpop.permute.xlu0 %932
  %934 = vrot.lane.b32.xlu0 %v902, 18
  %v935 = vpop.permute.xlu0 %934
  %936 = vrot.lane.b32.xlu0 %v903, 18
  %v937 = vpop.permute.xlu0 %936
  %938 = vrot.lane.b32.xlu0 %v904, 18
  %v939 = vpop.permute.xlu0 %938
  %940 = vrot.lane.b32.xlu0 %v905, 18
  %v941 = vpop.permute.xlu0 %940
  %v942 = vsel %vm58, %v939, %v941
  %v943 = vsel %vm58, %v937, %v939
  %v944 = vsel %vm58, %v935, %v937
  %v945 = vsel %vm58, %v933, %v935
  %v946 = vsel %vm58, %v931, %v933
  %v947 = vsel %vm58, %v941, %v931
  %948 = vrot.lane.b32.xlu0 %v900, 17
  %v949 = vpop.permute.xlu0 %948
  %950 = vrot.lane.b32.xlu0 %v901, 17
  %v951 = vpop.permute.xlu0 %950
  %952 = vrot.lane.b32.xlu0 %v902, 17
  %v953 = vpop.permute.xlu0 %952
  %954 = vrot.lane.b32.xlu0 %v903, 17
  %v955 = vpop.permute.xlu0 %954
  %956 = vrot.lane.b32.xlu0 %v904, 17
  %v957 = vpop.permute.xlu0 %956
  %958 = vrot.lane.b32.xlu0 %v905, 17
  %v959 = vpop.permute.xlu0 %958
  %v960 = vsel %vm77, %v957, %v959
  %v961 = vsel %vm77, %v955, %v957
  %v962 = vsel %vm77, %v953, %v955
  %v963 = vsel %vm77, %v951, %v953
  %v964 = vsel %vm77, %v949, %v951
  %v965 = vsel %vm77, %v959, %v949
  %966 = vrot.lane.b32.xlu0 %v900, 1
  %v967 = vpop.permute.xlu0 %966
  %968 = vrot.lane.b32.xlu0 %v901, 1
  %v969 = vpop.permute.xlu0 %968
  %970 = vrot.lane.b32.xlu0 %v902, 1
  %v971 = vpop.permute.xlu0 %970
  %972 = vrot.lane.b32.xlu0 %v903, 1
  %v973 = vpop.permute.xlu0 %972
  %974 = vrot.lane.b32.xlu0 %v904, 1
  %v975 = vpop.permute.xlu0 %974
  %976 = vrot.lane.b32.xlu0 %v905, 1
  %v977 = vpop.permute.xlu0 %976
  %v978 = vsel %vm96, %v975, %v977
  %v979 = vsel %vm96, %v973, %v975
  %v980 = vsel %vm96, %v971, %v973
  %v981 = vsel %vm96, %v969, %v971
  %v982 = vsel %vm96, %v967, %v969
  %v983 = vsel %vm96, %v977, %v967
  %984 = vrot.lane.b32.xlu0 %v900, 127
  %v985 = vpop.permute.xlu0 %984
  %986 = vrot.lane.b32.xlu0 %v901, 127
  %v987 = vpop.permute.xlu0 %986
  %988 = vrot.lane.b32.xlu0 %v902, 127
  %v989 = vpop.permute.xlu0 %988
  %990 = vrot.lane.b32.xlu0 %v903, 127
  %v991 = vpop.permute.xlu0 %990
  %992 = vrot.lane.b32.xlu0 %v904, 127
  %v993 = vpop.permute.xlu0 %992
  %994 = vrot.lane.b32.xlu0 %v905, 127
  %v995 = vpop.permute.xlu0 %994
  %v996 = vsel %vm115, %v993, %v995
  %v997 = vsel %vm115, %v991, %v993
  %v998 = vsel %vm115, %v989, %v991
  %v999 = vsel %vm115, %v987, %v989
  %v1000 = vsel %vm115, %v985, %v987
  %v1001 = vsel %vm115, %v995, %v985
  %1002 = vrot.lane.b32.xlu0 %v900, 111
  %v1003 = vpop.permute.xlu0 %1002
  %1004 = vrot.lane.b32.xlu0 %v901, 111
  %v1005 = vpop.permute.xlu0 %1004
  %1006 = vrot.lane.b32.xlu0 %v902, 111
  %v1007 = vpop.permute.xlu0 %1006
  %1008 = vrot.lane.b32.xlu0 %v903, 111
  %v1009 = vpop.permute.xlu0 %1008
  %1010 = vrot.lane.b32.xlu0 %v904, 111
  %v1011 = vpop.permute.xlu0 %1010
  %1012 = vrot.lane.b32.xlu0 %v905, 111
  %v1013 = vpop.permute.xlu0 %1012
  %v1014 = vsel %vm134, %v1011, %v1013
  %v1015 = vsel %vm134, %v1009, %v1011
  %v1016 = vsel %vm134, %v1007, %v1009
  %v1017 = vsel %vm134, %v1005, %v1007
  %v1018 = vsel %vm134, %v1003, %v1005
  %v1019 = vsel %vm134, %v1013, %v1003
  %1020 = vrot.lane.b32.xlu0 %v900, 110
  %v1021 = vpop.permute.xlu0 %1020
  %1022 = vrot.lane.b32.xlu0 %v901, 110
  %v1023 = vpop.permute.xlu0 %1022
  %1024 = vrot.lane.b32.xlu0 %v902, 110
  %v1025 = vpop.permute.xlu0 %1024
  %1026 = vrot.lane.b32.xlu0 %v903, 110
  %v1027 = vpop.permute.xlu0 %1026
  %1028 = vrot.lane.b32.xlu0 %v904, 110
  %v1029 = vpop.permute.xlu0 %1028
  %1030 = vrot.lane.b32.xlu0 %v905, 110
  %v1031 = vpop.permute.xlu0 %1030
  %v1032 = vsel %vm153, %v1029, %v1031
  %v1033 = vsel %vm153, %v1027, %v1029
  %v1034 = vsel %vm153, %v1025, %v1027
  %v1035 = vsel %vm153, %v1023, %v1025
  %v1036 = vsel %vm153, %v1021, %v1023
  %v1037 = vsel %vm153, %v1031, %v1021
  %1038 = vrot.lane.b32.xlu0 %v900, 109
  %v1039 = vpop.permute.xlu0 %1038
  %1040 = vrot.lane.b32.xlu0 %v901, 109
  %v1041 = vpop.permute.xlu0 %1040
  %1042 = vrot.lane.b32.xlu0 %v902, 109
  %v1043 = vpop.permute.xlu0 %1042
  %1044 = vrot.lane.b32.xlu0 %v903, 109
  %v1045 = vpop.permute.xlu0 %1044
  %1046 = vrot.lane.b32.xlu0 %v904, 109
  %v1047 = vpop.permute.xlu0 %1046
  %1048 = vrot.lane.b32.xlu0 %v905, 109
  %v1049 = vpop.permute.xlu0 %1048
  %v1050 = vsel %vm172, %v1047, %v1049
  %v1051 = vsel %vm172, %v1045, %v1047
  %v1052 = vsel %vm172, %v1043, %v1045
  %v1053 = vsel %vm172, %v1041, %v1043
  %v1054 = vsel %vm172, %v1039, %v1041
  %v1055 = vsel %vm172, %v1049, %v1039
  %v1056 = vld [vmem:[%s1 + $0x58] sm:$0xff]
  %v1057 = vld [vmem:[%s1 + $0x70] sm:$0xff]
  %v1058 = vld [vmem:[%s1 + $0x88] sm:$0xff]
  %v1059 = vld [vmem:[%s1 + $0xa0] sm:$0xff]
  %1061 = vset.pattern.permute.xlu0 32
  %1062 = vperm.xlu0 %1061, %v1056
  %v1063 = vpop.permute.xlu0 %1062
  %1066 = vset.pattern.permute.xlu0 32
  %1067 = vperm.xlu0 %1066, %v1057
  %v1068 = vpop.permute.xlu0 %1067
  %1071 = vset.pattern.permute.xlu0 32
  %1072 = vperm.xlu0 %1071, %v1058
  %v1073 = vpop.permute.xlu0 %1072
  %1076 = vset.pattern.permute.xlu0 32
  %1077 = vperm.xlu0 %1076, %v1059
  %v1078 = vpop.permute.xlu0 %1077
  %v1081 = vsel %vm185, %v908, 0
  %v1084 = vsel %vm185, %v909, 0
  %v1087 = vsel %vm185, %v910, 0
  %v1090 = vsel %vm185, %v911, 0
  %1092 = vmatpush.msra.mxu0 0.0
  %1093 = vmatpush.msra.mxu0 0.0
  %1094 = vmatpush.msra.mxu0 0.0
  %1095 = vmatpush.msra.mxu0 0.0
  %1096 = vmatpush.msra.mxu0 0.0
  %1097 = vmatpush.msra.mxu0 0.0
  %1098 = vmatpush.msra.mxu0 0.0
  %1099 = vmatpush.msra.mxu0 %v1054
  %1100 = vmatpush.msra.mxu0 %v1036
  %1101 = vmatpush.msra.mxu0 %v1018
  %1102 = vmatpush.msra.mxu0 %v1000
  %1103 = vmatpush.msra.mxu0 %v900
  %1104 = vmatpush.msra.mxu0 %v983
  %1105 = vmatpush.msra.mxu0 %v965
  %1106 = vmatpush.msra.mxu0 %v947
  %1107 = vmatpush.msra.mxu0 %v929
  %1108 = vmatmul.f32.gmra.mxu0 %v1081
  %v1109 = vpop.f32.mrf.mxu0
  %v1110 = vadd.f32 %v1063, %v1109
  %1111 = vmatmul.f32.gmra.mxu0 %v1084
  %v1112 = vpop.f32.mrf.mxu0
  %v1113 = vadd.f32 %v1068, %v1112
  %1114 = vmatmul.f32.gmra.mxu0 %v1087
  %v1115 = vpop.f32.mrf.mxu0
  %v1116 = vadd.f32 %v1073, %v1115
  %1117 = vmatmul.f32.gmra.mxu0 %v1090
  %v1118 = vpop.f32.mrf.mxu0
  %v1119 = vadd.f32 %v1078, %v1118
  %1120 = vdwg.mxu0
  %1121 = vmatpush.msra.mxu0 0.0
  %1122 = vmatpush.msra.mxu0 0.0
  %1123 = vmatpush.msra.mxu0 0.0
  %1124 = vmatpush.msra.mxu0 0.0
  %1125 = vmatpush.msra.mxu0 0.0
  %1126 = vmatpush.msra.mxu0 0.0
  %1127 = vmatpush.msra.mxu0 0.0
  %1128 = vmatpush.msra.mxu0 %v1053
  %1129 = vmatpush.msra.mxu0 %v1035
  %1130 = vmatpush.msra.mxu0 %v1017
  %1131 = vmatpush.msra.mxu0 %v999
  %1132 = vmatpush.msra.mxu0 %v901
  %1133 = vmatpush.msra.mxu0 %v982
  %1134 = vmatpush.msra.mxu0 %v964
  %1135 = vmatpush.msra.mxu0 %v946
  %1136 = vmatpush.msra.mxu0 %v928
  %1137 = vmatmul.f32.gmra.mxu0 %v1081
  %v1138 = vpop.f32.mrf.mxu0
  %v1139 = vadd.f32 %v1063, %v1138
  %1140 = vmatmul.f32.gmra.mxu0 %v1084
  %v1141 = vpop.f32.mrf.mxu0
  %v1142 = vadd.f32 %v1068, %v1141
  %1143 = vmatmul.f32.gmra.mxu0 %v1087
  %v1144 = vpop.f32.mrf.mxu0
  %v1145 = vadd.f32 %v1073, %v1144
  %1146 = vmatmul.f32.gmra.mxu0 %v1090
  %v1147 = vpop.f32.mrf.mxu0
  %v1148 = vadd.f32 %v1078, %v1147
  %1149 = vdwg.mxu0
  %1150 = vmatpush.msra.mxu0 0.0
  %1151 = vmatpush.msra.mxu0 0.0
  %1152 = vmatpush.msra.mxu0 0.0
  %1153 = vmatpush.msra.mxu0 0.0
  %1154 = vmatpush.msra.mxu0 0.0
  %1155 = vmatpush.msra.mxu0 0.0
  %1156 = vmatpush.msra.mxu0 0.0
  %1157 = vmatpush.msra.mxu0 %v1052
  %1158 = vmatpush.msra.mxu0 %v1034
  %1159 = vmatpush.msra.mxu0 %v1016
  %1160 = vmatpush.msra.mxu0 %v998
  %1161 = vmatpush.msra.mxu0 %v902
  %1162 = vmatpush.msra.mxu0 %v981
  %1163 = vmatpush.msra.mxu0 %v963
  %1164 = vmatpush.msra.mxu0 %v945
  %1165 = vmatpush.msra.mxu0 %v927
  %1166 = vmatmul.f32.gmra.mxu0 %v1081
  %v1167 = vpop.f32.mrf.mxu0
  %v1168 = vadd.f32 %v1063, %v1167
  %1169 = vmatmul.f32.gmra.mxu0 %v1084
  %v1170 = vpop.f32.mrf.mxu0
  %v1171 = vadd.f32 %v1068, %v1170
  %1172 = vmatmul.f32.gmra.mxu0 %v1087
  %v1173 = vpop.f32.mrf.mxu0
  %v1174 = vadd.f32 %v1073, %v1173
  %1175 = vmatmul.f32.gmra.mxu0 %v1090
  %v1176 = vpop.f32.mrf.mxu0
  %v1177 = vadd.f32 %v1078, %v1176
  %1178 = vdwg.mxu0
  %1179 = vmatpush.msra.mxu0 0.0
  %1180 = vmatpush.msra.mxu0 0.0
  %1181 = vmatpush.msra.mxu0 0.0
  %1182 = vmatpush.msra.mxu0 0.0
  %1183 = vmatpush.msra.mxu0 0.0
  %1184 = vmatpush.msra.mxu0 0.0
  %1185 = vmatpush.msra.mxu0 0.0
  %1186 = vmatpush.msra.mxu0 %v1051
  %1187 = vmatpush.msra.mxu0 %v1033
  %1188 = vmatpush.msra.mxu0 %v1015
  %1189 = vmatpush.msra.mxu0 %v997
  %1190 = vmatpush.msra.mxu0 %v903
  %1191 = vmatpush.msra.mxu0 %v980
  %1192 = vmatpush.msra.mxu0 %v962
  %1193 = vmatpush.msra.mxu0 %v944
  %1194 = vmatpush.msra.mxu0 %v926
  %1195 = vmatmul.f32.gmra.mxu0 %v1081
  %v1196 = vpop.f32.mrf.mxu0
  %v1197 = vadd.f32 %v1063, %v1196
  %1198 = vmatmul.f32.gmra.mxu0 %v1084
  %v1199 = vpop.f32.mrf.mxu0
  %v1200 = vadd.f32 %v1068, %v1199
  %1201 = vmatmul.f32.gmra.mxu0 %v1087
  %v1202 = vpop.f32.mrf.mxu0
  %v1203 = vadd.f32 %v1073, %v1202
  %1204 = vmatmul.f32.gmra.mxu0 %v1090
  %v1205 = vpop.f32.mrf.mxu0
  %v1206 = vadd.f32 %v1078, %v1205
  %1207 = vdwg.mxu0
  %1208 = vmatpush.msra.mxu0 0.0
  %1209 = vmatpush.msra.mxu0 0.0
  %1210 = vmatpush.msra.mxu0 0.0
  %1211 = vmatpush.msra.mxu0 0.0
  %1212 = vmatpush.msra.mxu0 0.0
  %1213 = vmatpush.msra.mxu0 0.0
  %1214 = vmatpush.msra.mxu0 0.0
  %1215 = vmatpush.msra.mxu0 %v1050
  %1216 = vmatpush.msra.mxu0 %v1032
  %1217 = vmatpush.msra.mxu0 %v1014
  %1218 = vmatpush.msra.mxu0 %v996
  %1219 = vmatpush.msra.mxu0 %v904
  %1220 = vmatpush.msra.mxu0 %v979
  %1221 = vmatpush.msra.mxu0 %v961
  %1222 = vmatpush.msra.mxu0 %v943
  %1223 = vmatpush.msra.mxu0 %v925
  %1224 = vmatmul.f32.gmra.mxu0 %v1081
  %v1225 = vpop.f32.mrf.mxu0
  %v1226 = vadd.f32 %v1063, %v1225
  %1227 = vmatmul.f32.gmra.mxu0 %v1084
  %v1228 = vpop.f32.mrf.mxu0
  %v1229 = vadd.f32 %v1068, %v1228
  %1230 = vmatmul.f32.gmra.mxu0 %v1087
  %v1231 = vpop.f32.mrf.mxu0
  %v1232 = vadd.f32 %v1073, %v1231
  %1233 = vmatmul.f32.gmra.mxu0 %v1090
  %v1234 = vpop.f32.mrf.mxu0
  %v1235 = vadd.f32 %v1078, %v1234
  %1236 = vdwg.mxu0
  %1237 = vmatpush.msra.mxu0 0.0
  %1238 = vmatpush.msra.mxu0 0.0
  %1239 = vmatpush.msra.mxu0 0.0
  %1240 = vmatpush.msra.mxu0 0.0
  %1241 = vmatpush.msra.mxu0 0.0
  %1242 = vmatpush.msra.mxu0 0.0
  %1243 = vmatpush.msra.mxu0 0.0
  %1244 = vmatpush.msra.mxu0 %v1055
  %1245 = vmatpush.msra.mxu0 %v1037
  %1246 = vmatpush.msra.mxu0 %v1019
  %1247 = vmatpush.msra.mxu0 %v1001
  %1248 = vmatpush.msra.mxu0 %v905
  %1249 = vmatpush.msra.mxu0 %v978
  %1250 = vmatpush.msra.mxu0 %v960
  %1251 = vmatpush.msra.mxu0 %v942
  %1252 = vmatpush.msra.mxu0 %v924
  %1253 = vmatmul.f32.gmra.mxu0 %v1081
  %v1254 = vpop.f32.mrf.mxu0
  %v1255 = vadd.f32 %v1063, %v1254
  %1256 = vmatmul.f32.gmra.mxu0 %v1084
  %v1257 = vpop.f32.mrf.mxu0
  %v1258 = vadd.f32 %v1068, %v1257
  %1259 = vmatmul.f32.gmra.mxu0 %v1087
  %v1260 = vpop.f32.mrf.mxu0
  %v1261 = vadd.f32 %v1073, %v1260
  %1262 = vmatmul.f32.gmra.mxu0 %v1090
  %v1263 = vpop.f32.mrf.mxu0
  %v1264 = vadd.f32 %v1078, %v1263
  %1265 = vdwg.mxu0
  %v1266 = vmax.f32 %v1110, 0.0
  %v1267 = vmax.f32 %v1139, 0.0
  %v1268 = vmax.f32 %v1168, 0.0
  %v1269 = vmax.f32 %v1197, 0.0
  %v1270 = vmax.f32 %v1226, 0.0
  %v1271 = vmax.f32 %v1255, 0.0
  %v1272 = vmax.f32 %v1113, 0.0
  %v1273 = vmax.f32 %v1142, 0.0
  %v1274 = vmax.f32 %v1171, 0.0
  %v1275 = vmax.f32 %v1200, 0.0
  %v1276 = vmax.f32 %v1229, 0.0
  %v1277 = vmax.f32 %v1258, 0.0
  %v1278 = vld [vmem:[%s2] sm:$0xff]
  %v1279 = vld [vmem:[%s2 + $0x8] sm:$0xff]
  %v1280 = vld [vmem:[%s2 + $0x10] sm:$0xff]
  %v1281 = vld [vmem:[%s2 + $0x18] sm:$0xff]
  %v1282 = vld [vmem:[%s2 + $0x20] sm:$0xff]
  %v1283 = vld [vmem:[%s2 + $0x28] sm:$0xff]
  %v1284 = vld [vmem:[%s2 + $0x30] sm:$0xff]
  %v1285 = vld [vmem:[%s2 + $0x38] sm:$0xff]
  %v1286 = vld [vmem:[%s2 + $0x40] sm:$0xff]
  %v1287 = vld [vmem:[%s2 + $0x48] sm:$0xff]
  %v1288 = vld [vmem:[%s2 + $0x50] sm:$0xff]
  %v1289 = vld [vmem:[%s2 + $0x58] sm:$0xff]
  %v1290 = vld [vmem:[%s2 + $0x60] sm:$0xff]
  %v1291 = vld [vmem:[%s2 + $0x68] sm:$0xff]
  %v1292 = vld [vmem:[%s2 + $0x70] sm:$0xff]
  %v1293 = vld [vmem:[%s2 + $0x78] sm:$0xff]
  %v1294 = vld [vmem:[%s2 + $0x80] sm:$0xff]
  %v1295 = vld [vmem:[%s2 + $0x88] sm:$0xff]
  %v1296 = vld [vmem:[%s2 + $0x90] sm:$0xff]
  %v1297 = vld [vmem:[%s2 + $0x98] sm:$0xff]
  %v1298 = vld [vmem:[%s2 + $0xa0] sm:$0xff]
  %v1299 = vld [vmem:[%s2 + $0xa8] sm:$0xff]
  %v1300 = vld [vmem:[%s2 + $0xb0] sm:$0xff]
  %v1301 = vld [vmem:[%s2 + $0xb8] sm:$0xff]
  %v1302 = vld [vmem:[%s2 + $0xc0] sm:$0xff]
  %v1303 = vld [vmem:[%s2 + $0xc8] sm:$0xff]
  %v1304 = vld [vmem:[%s2 + $0xd0] sm:$0xff]
  %v1305 = vld [vmem:[%s2 + $0xd8] sm:$0xff]
  %v1306 = vld [vmem:[%s2 + $0xe0] sm:$0xff]
  %v1307 = vld [vmem:[%s2 + $0xe8] sm:$0xff]
  %v1308 = vld [vmem:[%s2 + $0xf0] sm:$0xff]
  %v1309 = vld [vmem:[%s2 + $0xf8] sm:$0xff]
  %v1310 = vld [vmem:[%s2 + $0x100] sm:$0xff]
  %v1311 = vld [vmem:[%s2 + $0x108] sm:$0xff]
  %v1312 = vld [vmem:[%s2 + $0x110] sm:$0xff]
  %v1313 = vld [vmem:[%s2 + $0x118] sm:$0xff]
  %v1314 = vld [vmem:[%s2 + $0x120] sm:$0xff]
  %v1315 = vld [vmem:[%s2 + $0x128] sm:$0xff]
  %v1316 = vld [vmem:[%s2 + $0x130] sm:$0xff]
  %v1317 = vld [vmem:[%s2 + $0x138] sm:$0xff]
  %v1318 = vld [vmem:[%s2 + $0x140] sm:$0xff]
  %v1319 = vld [vmem:[%s2 + $0x148] sm:$0xff]
  %v1320 = vld [vmem:[%s2 + $0x150] sm:$0xff]
  %v1321 = vld [vmem:[%s2 + $0x158] sm:$0xff]
  %v1322 = vld [vmem:[%s2 + $0x160] sm:$0xff]
  %v1323 = vld [vmem:[%s2 + $0x168] sm:$0xff]
  %v1324 = vld [vmem:[%s2 + $0x170] sm:$0xff]
  %v1325 = vld [vmem:[%s2 + $0x178] sm:$0xff]
  %v1326 = vunpack.c.0.s8 %v1278
  %v1327 = vunpack.c.0.s8 %v1279
  %v1328 = vunpack.c.1.s8 %v1278
  %v1329 = vunpack.c.1.s8 %v1279
  %v1330 = vunpack.c.2.s8 %v1278
  %v1331 = vunpack.c.2.s8 %v1279
  %v1332 = vunpack.c.3.s8 %v1278
  %v1333 = vunpack.c.3.s8 %v1279
  %v1334 = vunpack.c.0.s8 %v1280
  %v1335 = vunpack.c.0.s8 %v1281
  %v1336 = vunpack.c.1.s8 %v1280
  %v1337 = vunpack.c.1.s8 %v1281
  %v1338 = vunpack.c.2.s8 %v1280
  %v1339 = vunpack.c.2.s8 %v1281
  %v1340 = vunpack.c.3.s8 %v1280
  %v1341 = vunpack.c.3.s8 %v1281
  %v1342 = vunpack.c.0.s8 %v1282
  %v1343 = vunpack.c.0.s8 %v1283
  %v1344 = vunpack.c.1.s8 %v1282
  %v1345 = vunpack.c.1.s8 %v1283
  %v1346 = vunpack.c.2.s8 %v1282
  %v1347 = vunpack.c.2.s8 %v1283
  %v1348 = vunpack.c.3.s8 %v1282
  %v1349 = vunpack.c.3.s8 %v1283
  %v1350 = vunpack.c.0.s8 %v1284
  %v1351 = vunpack.c.0.s8 %v1285
  %v1352 = vunpack.c.1.s8 %v1284
  %v1353 = vunpack.c.1.s8 %v1285
  %v1354 = vunpack.c.2.s8 %v1284
  %v1355 = vunpack.c.2.s8 %v1285
  %v1356 = vunpack.c.3.s8 %v1284
  %v1357 = vunpack.c.3.s8 %v1285
  %v1358 = vunpack.c.0.s8 %v1286
  %v1359 = vunpack.c.0.s8 %v1287
  %v1360 = vunpack.c.1.s8 %v1286
  %v1361 = vunpack.c.1.s8 %v1287
  %v1362 = vunpack.c.2.s8 %v1286
  %v1363 = vunpack.c.2.s8 %v1287
  %v1364 = vunpack.c.3.s8 %v1286
  %v1365 = vunpack.c.3.s8 %v1287
  %v1366 = vunpack.c.0.s8 %v1288
  %v1367 = vunpack.c.0.s8 %v1289
  %v1368 = vunpack.c.1.s8 %v1288
  %v1369 = vunpack.c.1.s8 %v1289
  %v1370 = vunpack.c.2.s8 %v1288
  %v1371 = vunpack.c.2.s8 %v1289
  %v1372 = vunpack.c.3.s8 %v1288
  %v1373 = vunpack.c.3.s8 %v1289
  %v1374 = vunpack.c.0.s8 %v1290
  %v1375 = vunpack.c.0.s8 %v1291
  %v1376 = vunpack.c.1.s8 %v1290
  %v1377 = vunpack.c.1.s8 %v1291
  %v1378 = vunpack.c.2.s8 %v1290
  %v1379 = vunpack.c.2.s8 %v1291
  %v1380 = vunpack.c.3.s8 %v1290
  %v1381 = vunpack.c.3.s8 %v1291
  %v1382 = vunpack.c.0.s8 %v1292
  %v1383 = vunpack.c.0.s8 %v1293
  %v1384 = vunpack.c.1.s8 %v1292
  %v1385 = vunpack.c.1.s8 %v1293
  %v1386 = vunpack.c.2.s8 %v1292
  %v1387 = vunpack.c.2.s8 %v1293
  %v1388 = vunpack.c.3.s8 %v1292
  %v1389 = vunpack.c.3.s8 %v1293
  %v1390 = vunpack.c.0.s8 %v1294
  %v1391 = vunpack.c.0.s8 %v1295
  %v1392 = vunpack.c.1.s8 %v1294
  %v1393 = vunpack.c.1.s8 %v1295
  %v1394 = vunpack.c.2.s8 %v1294
  %v1395 = vunpack.c.2.s8 %v1295
  %v1396 = vunpack.c.3.s8 %v1294
  %v1397 = vunpack.c.3.s8 %v1295
  %v1398 = vunpack.c.0.s8 %v1296
  %v1399 = vunpack.c.0.s8 %v1297
  %v1400 = vunpack.c.1.s8 %v1296
  %v1401 = vunpack.c.1.s8 %v1297
  %v1402 = vunpack.c.2.s8 %v1296
  %v1403 = vunpack.c.2.s8 %v1297
  %v1404 = vunpack.c.3.s8 %v1296
  %v1405 = vunpack.c.3.s8 %v1297
  %v1406 = vunpack.c.0.s8 %v1298
  %v1407 = vunpack.c.0.s8 %v1299
  %v1408 = vunpack.c.1.s8 %v1298
  %v1409 = vunpack.c.1.s8 %v1299
  %v1410 = vunpack.c.2.s8 %v1298
  %v1411 = vunpack.c.2.s8 %v1299
  %v1412 = vunpack.c.3.s8 %v1298
  %v1413 = vunpack.c.3.s8 %v1299
  %v1414 = vunpack.c.0.s8 %v1300
  %v1415 = vunpack.c.0.s8 %v1301
  %v1416 = vunpack.c.1.s8 %v1300
  %v1417 = vunpack.c.1.s8 %v1301
  %v1418 = vunpack.c.2.s8 %v1300
  %v1419 = vunpack.c.2.s8 %v1301
  %v1420 = vunpack.c.3.s8 %v1300
  %v1421 = vunpack.c.3.s8 %v1301
  %v1422 = vunpack.c.0.s8 %v1302
  %v1423 = vunpack.c.0.s8 %v1303
  %v1424 = vunpack.c.1.s8 %v1302
  %v1425 = vunpack.c.1.s8 %v1303
  %v1426 = vunpack.c.2.s8 %v1302
  %v1427 = vunpack.c.2.s8 %v1303
  %v1428 = vunpack.c.3.s8 %v1302
  %v1429 = vunpack.c.3.s8 %v1303
  %v1430 = vunpack.c.0.s8 %v1304
  %v1431 = vunpack.c.0.s8 %v1305
  %v1432 = vunpack.c.1.s8 %v1304
  %v1433 = vunpack.c.1.s8 %v1305
  %v1434 = vunpack.c.2.s8 %v1304
  %v1435 = vunpack.c.2.s8 %v1305
  %v1436 = vunpack.c.3.s8 %v1304
  %v1437 = vunpack.c.3.s8 %v1305
  %v1438 = vunpack.c.0.s8 %v1306
  %v1439 = vunpack.c.0.s8 %v1307
  %v1440 = vunpack.c.1.s8 %v1306
  %v1441 = vunpack.c.1.s8 %v1307
  %v1442 = vunpack.c.2.s8 %v1306
  %v1443 = vunpack.c.2.s8 %v1307
  %v1444 = vunpack.c.3.s8 %v1306
  %v1445 = vunpack.c.3.s8 %v1307
  %v1446 = vunpack.c.0.s8 %v1308
  %v1447 = vunpack.c.0.s8 %v1309
  %v1448 = vunpack.c.1.s8 %v1308
  %v1449 = vunpack.c.1.s8 %v1309
  %v1450 = vunpack.c.2.s8 %v1308
  %v1451 = vunpack.c.2.s8 %v1309
  %v1452 = vunpack.c.3.s8 %v1308
  %v1453 = vunpack.c.3.s8 %v1309
  %v1454 = vunpack.c.0.s8 %v1310
  %v1455 = vunpack.c.0.s8 %v1311
  %v1456 = vunpack.c.1.s8 %v1310
  %v1457 = vunpack.c.1.s8 %v1311
  %v1458 = vunpack.c.2.s8 %v1310
  %v1459 = vunpack.c.2.s8 %v1311
  %v1460 = vunpack.c.3.s8 %v1310
  %v1461 = vunpack.c.3.s8 %v1311
  %v1462 = vunpack.c.0.s8 %v1312
  %v1463 = vunpack.c.0.s8 %v1313
  %v1464 = vunpack.c.1.s8 %v1312
  %v1465 = vunpack.c.1.s8 %v1313
  %v1466 = vunpack.c.2.s8 %v1312
  %v1467 = vunpack.c.2.s8 %v1313
  %v1468 = vunpack.c.3.s8 %v1312
  %v1469 = vunpack.c.3.s8 %v1313
  %v1470 = vunpack.c.0.s8 %v1314
  %v1471 = vunpack.c.0.s8 %v1315
  %v1472 = vunpack.c.1.s8 %v1314
  %v1473 = vunpack.c.1.s8 %v1315
  %v1474 = vunpack.c.2.s8 %v1314
  %v1475 = vunpack.c.2.s8 %v1315
  %v1476 = vunpack.c.3.s8 %v1314
  %v1477 = vunpack.c.3.s8 %v1315
  %v1478 = vunpack.c.0.s8 %v1316
  %v1479 = vunpack.c.0.s8 %v1317
  %v1480 = vunpack.c.1.s8 %v1316
  %v1481 = vunpack.c.1.s8 %v1317
  %v1482 = vunpack.c.2.s8 %v1316
  %v1483 = vunpack.c.2.s8 %v1317
  %v1484 = vunpack.c.3.s8 %v1316
  %v1485 = vunpack.c.3.s8 %v1317
  %v1486 = vunpack.c.0.s8 %v1318
  %v1487 = vunpack.c.0.s8 %v1319
  %v1488 = vunpack.c.1.s8 %v1318
  %v1489 = vunpack.c.1.s8 %v1319
  %v1490 = vunpack.c.2.s8 %v1318
  %v1491 = vunpack.c.2.s8 %v1319
  %v1492 = vunpack.c.3.s8 %v1318
  %v1493 = vunpack.c.3.s8 %v1319
  %v1494 = vunpack.c.0.s8 %v1320
  %v1495 = vunpack.c.0.s8 %v1321
  %v1496 = vunpack.c.1.s8 %v1320
  %v1497 = vunpack.c.1.s8 %v1321
  %v1498 = vunpack.c.2.s8 %v1320
  %v1499 = vunpack.c.2.s8 %v1321
  %v1500 = vunpack.c.3.s8 %v1320
  %v1501 = vunpack.c.3.s8 %v1321
  %v1502 = vunpack.c.0.s8 %v1322
  %v1503 = vunpack.c.0.s8 %v1323
  %v1504 = vunpack.c.1.s8 %v1322
  %v1505 = vunpack.c.1.s8 %v1323
  %v1506 = vunpack.c.2.s8 %v1322
  %v1507 = vunpack.c.2.s8 %v1323
  %v1508 = vunpack.c.3.s8 %v1322
  %v1509 = vunpack.c.3.s8 %v1323
  %v1510 = vunpack.c.0.s8 %v1324
  %v1511 = vunpack.c.0.s8 %v1325
  %v1512 = vunpack.c.1.s8 %v1324
  %v1513 = vunpack.c.1.s8 %v1325
  %v1514 = vunpack.c.2.s8 %v1324
  %v1515 = vunpack.c.2.s8 %v1325
  %v1516 = vunpack.c.3.s8 %v1324
  %v1517 = vunpack.c.3.s8 %v1325
  %v1518 = vcvt.s32.f32 %v1326
  %v1519 = vcvt.s32.f32 %v1327
  %v1520 = vcvt.s32.f32 %v1328
  %v1521 = vcvt.s32.f32 %v1329
  %v1522 = vcvt.s32.f32 %v1330
  %v1523 = vcvt.s32.f32 %v1331
  %v1524 = vcvt.s32.f32 %v1332
  %v1525 = vcvt.s32.f32 %v1333
  %v1526 = vcvt.s32.f32 %v1334
  %v1527 = vcvt.s32.f32 %v1335
  %v1528 = vcvt.s32.f32 %v1336
  %v1529 = vcvt.s32.f32 %v1337
  %v1530 = vcvt.s32.f32 %v1338
  %v1531 = vcvt.s32.f32 %v1339
  %v1532 = vcvt.s32.f32 %v1340
  %v1533 = vcvt.s32.f32 %v1341
  %v1534 = vcvt.s32.f32 %v1342
  %v1535 = vcvt.s32.f32 %v1343
  %v1536 = vcvt.s32.f32 %v1344
  %v1537 = vcvt.s32.f32 %v1345
  %v1538 = vcvt.s32.f32 %v1346
  %v1539 = vcvt.s32.f32 %v1347
  %v1540 = vcvt.s32.f32 %v1348
  %v1541 = vcvt.s32.f32 %v1349
  %v1542 = vcvt.s32.f32 %v1350
  %v1543 = vcvt.s32.f32 %v1351
  %v1544 = vcvt.s32.f32 %v1352
  %v1545 = vcvt.s32.f32 %v1353
  %v1546 = vcvt.s32.f32 %v1354
  %v1547 = vcvt.s32.f32 %v1355
  %v1548 = vcvt.s32.f32 %v1356
  %v1549 = vcvt.s32.f32 %v1357
  %v1550 = vcvt.s32.f32 %v1358
  %v1551 = vcvt.s32.f32 %v1359
  %v1552 = vcvt.s32.f32 %v1360
  %v1553 = vcvt.s32.f32 %v1361
  %v1554 = vcvt.s32.f32 %v1362
  %v1555 = vcvt.s32.f32 %v1363
  %v1556 = vcvt.s32.f32 %v1364
  %v1557 = vcvt.s32.f32 %v1365
  %v1558 = vcvt.s32.f32 %v1366
  %v1559 = vcvt.s32.f32 %v1367
  %v1560 = vcvt.s32.f32 %v1368
  %v1561 = vcvt.s32.f32 %v1369
  %v1562 = vcvt.s32.f32 %v1370
  %v1563 = vcvt.s32.f32 %v1371
  %v1564 = vcvt.s32.f32 %v1372
  %v1565 = vcvt.s32.f32 %v1373
  %v1566 = vcvt.s32.f32 %v1374
  %v1567 = vcvt.s32.f32 %v1375
  %v1568 = vcvt.s32.f32 %v1376
  %v1569 = vcvt.s32.f32 %v1377
  %v1570 = vcvt.s32.f32 %v1378
  %v1571 = vcvt.s32.f32 %v1379
  %v1572 = vcvt.s32.f32 %v1380
  %v1573 = vcvt.s32.f32 %v1381
  %v1574 = vcvt.s32.f32 %v1382
  %v1575 = vcvt.s32.f32 %v1383
  %v1576 = vcvt.s32.f32 %v1384
  %v1577 = vcvt.s32.f32 %v1385
  %v1578 = vcvt.s32.f32 %v1386
  %v1579 = vcvt.s32.f32 %v1387
  %v1580 = vcvt.s32.f32 %v1388
  %v1581 = vcvt.s32.f32 %v1389
  %v1582 = vcvt.s32.f32 %v1390
  %v1583 = vcvt.s32.f32 %v1391
  %v1584 = vcvt.s32.f32 %v1392
  %v1585 = vcvt.s32.f32 %v1393
  %v1586 = vcvt.s32.f32 %v1394
  %v1587 = vcvt.s32.f32 %v1395
  %v1588 = vcvt.s32.f32 %v1396
  %v1589 = vcvt.s32.f32 %v1397
  %v1590 = vcvt.s32.f32 %v1398
  %v1591 = vcvt.s32.f32 %v1399
  %v1592 = vcvt.s32.f32 %v1400
  %v1593 = vcvt.s32.f32 %v1401
  %v1594 = vcvt.s32.f32 %v1402
  %v1595 = vcvt.s32.f32 %v1403
  %v1596 = vcvt.s32.f32 %v1404
  %v1597 = vcvt.s32.f32 %v1405
  %v1598 = vcvt.s32.f32 %v1406
  %v1599 = vcvt.s32.f32 %v1407
  %v1600 = vcvt.s32.f32 %v1408
  %v1601 = vcvt.s32.f32 %v1409
  %v1602 = vcvt.s32.f32 %v1410
  %v1603 = vcvt.s32.f32 %v1411
  %v1604 = vcvt.s32.f32 %v1412
  %v1605 = vcvt.s32.f32 %v1413
  %v1606 = vcvt.s32.f32 %v1414
  %v1607 = vcvt.s32.f32 %v1415
  %v1608 = vcvt.s32.f32 %v1416
  %v1609 = vcvt.s32.f32 %v1417
  %v1610 = vcvt.s32.f32 %v1418
  %v1611 = vcvt.s32.f32 %v1419
  %v1612 = vcvt.s32.f32 %v1420
  %v1613 = vcvt.s32.f32 %v1421
  %v1614 = vcvt.s32.f32 %v1422
  %v1615 = vcvt.s32.f32 %v1423
  %v1616 = vcvt.s32.f32 %v1424
  %v1617 = vcvt.s32.f32 %v1425
  %v1618 = vcvt.s32.f32 %v1426
  %v1619 = vcvt.s32.f32 %v1427
  %v1620 = vcvt.s32.f32 %v1428
  %v1621 = vcvt.s32.f32 %v1429
  %v1622 = vcvt.s32.f32 %v1430
  %v1623 = vcvt.s32.f32 %v1431
  %v1624 = vcvt.s32.f32 %v1432
  %v1625 = vcvt.s32.f32 %v1433
  %v1626 = vcvt.s32.f32 %v1434
  %v1627 = vcvt.s32.f32 %v1435
  %v1628 = vcvt.s32.f32 %v1436
  %v1629 = vcvt.s32.f32 %v1437
  %v1630 = vcvt.s32.f32 %v1438
  %v1631 = vcvt.s32.f32 %v1439
  %v1632 = vcvt.s32.f32 %v1440
  %v1633 = vcvt.s32.f32 %v1441
  %v1634 = vcvt.s32.f32 %v1442
  %v1635 = vcvt.s32.f32 %v1443
  %v1636 = vcvt.s32.f32 %v1444
  %v1637 = vcvt.s32.f32 %v1445
  %v1638 = vcvt.s32.f32 %v1446
  %v1639 = vcvt.s32.f32 %v1447
  %v1640 = vcvt.s32.f32 %v1448
  %v1641 = vcvt.s32.f32 %v1449
  %v1642 = vcvt.s32.f32 %v1450
  %v1643 = vcvt.s32.f32 %v1451
  %v1644 = vcvt.s32.f32 %v1452
  %v1645 = vcvt.s32.f32 %v1453
  %v1646 = vcvt.s32.f32 %v1454
  %v1647 = vcvt.s32.f32 %v1455
  %v1648 = vcvt.s32.f32 %v1456
  %v1649 = vcvt.s32.f32 %v1457
  %v1650 = vcvt.s32.f32 %v1458
  %v1651 = vcvt.s32.f32 %v1459
  %v1652 = vcvt.s32.f32 %v1460
  %v1653 = vcvt.s32.f32 %v1461
  %v1654 = vcvt.s32.f32 %v1462
  %v1655 = vcvt.s32.f32 %v1463
  %v1656 = vcvt.s32.f32 %v1464
  %v1657 = vcvt.s32.f32 %v1465
  %v1658 = vcvt.s32.f32 %v1466
  %v1659 = vcvt.s32.f32 %v1467
  %v1660 = vcvt.s32.f32 %v1468
  %v1661 = vcvt.s32.f32 %v1469
  %v1662 = vcvt.s32.f32 %v1470
  %v1663 = vcvt.s32.f32 %v1471
  %v1664 = vcvt.s32.f32 %v1472
  %v1665 = vcvt.s32.f32 %v1473
  %v1666 = vcvt.s32.f32 %v1474
  %v1667 = vcvt.s32.f32 %v1475
  %v1668 = vcvt.s32.f32 %v1476
  %v1669 = vcvt.s32.f32 %v1477
  %v1670 = vcvt.s32.f32 %v1478
  %v1671 = vcvt.s32.f32 %v1479
  %v1672 = vcvt.s32.f32 %v1480
  %v1673 = vcvt.s32.f32 %v1481
  %v1674 = vcvt.s32.f32 %v1482
  %v1675 = vcvt.s32.f32 %v1483
  %v1676 = vcvt.s32.f32 %v1484
  %v1677 = vcvt.s32.f32 %v1485
  %v1678 = vcvt.s32.f32 %v1486
  %v1679 = vcvt.s32.f32 %v1487
  %v1680 = vcvt.s32.f32 %v1488
  %v1681 = vcvt.s32.f32 %v1489
  %v1682 = vcvt.s32.f32 %v1490
  %v1683 = vcvt.s32.f32 %v1491
  %v1684 = vcvt.s32.f32 %v1492
  %v1685 = vcvt.s32.f32 %v1493
  %v1686 = vcvt.s32.f32 %v1494
  %v1687 = vcvt.s32.f32 %v1495
  %v1688 = vcvt.s32.f32 %v1496
  %v1689 = vcvt.s32.f32 %v1497
  %v1690 = vcvt.s32.f32 %v1498
  %v1691 = vcvt.s32.f32 %v1499
  %v1692 = vcvt.s32.f32 %v1500
  %v1693 = vcvt.s32.f32 %v1501
  %v1694 = vcvt.s32.f32 %v1502
  %v1695 = vcvt.s32.f32 %v1503
  %v1696 = vcvt.s32.f32 %v1504
  %v1697 = vcvt.s32.f32 %v1505
  %v1698 = vcvt.s32.f32 %v1506
  %v1699 = vcvt.s32.f32 %v1507
  %v1700 = vcvt.s32.f32 %v1508
  %v1701 = vcvt.s32.f32 %v1509
  %v1702 = vcvt.s32.f32 %v1510
  %v1703 = vcvt.s32.f32 %v1511
  %v1704 = vcvt.s32.f32 %v1512
  %v1705 = vcvt.s32.f32 %v1513
  %v1706 = vcvt.s32.f32 %v1514
  %v1707 = vcvt.s32.f32 %v1515
  %v1708 = vcvt.s32.f32 %v1516
  %v1709 = vcvt.s32.f32 %v1517
  %1710 = vmatpush.msra.mxu0 %v1548
  %1711 = vmatpush.msra.mxu0 %v1546
  %1712 = vmatpush.msra.mxu0 %v1544
  %1713 = vmatpush.msra.mxu0 %v1542
  %1714 = vmatpush.msra.mxu0 %v1540
  %1715 = vmatpush.msra.mxu0 %v1538
  %1716 = vmatpush.msra.mxu0 %v1536
  %1717 = vmatpush.msra.mxu0 %v1534
  %1718 = vmatpush.msra.mxu0 %v1532
  %1719 = vmatpush.msra.mxu0 %v1530
  %1720 = vmatpush.msra.mxu0 %v1528
  %1721 = vmatpush.msra.mxu0 %v1526
  %1722 = vmatpush.msra.mxu0 %v1524
  %1723 = vmatpush.msra.mxu0 %v1522
  %1724 = vmatpush.msra.mxu0 %v1520
  %1725 = vmatpush.msra.mxu0 %v1518
  %1726 = vmatmul.f32.gmra.mxu0 %v1266
  %v1727 = vpop.f32.mrf.mxu0
  %v1728 = vadd.f32 0.0, %v1727
  %1729 = vmatmul.f32.gmra.mxu0 %v1272
  %v1730 = vpop.f32.mrf.mxu0
  %v1731 = vadd.f32 0.0, %v1730
  %1732 = vmatmul.f32.gmra.mxu0 %v1116
  %v1733 = vpop.f32.mrf.mxu0
  %v1734 = vadd.f32 0.0, %v1733
  %1735 = vmatmul.f32.gmra.mxu0 %v1119
  %v1736 = vpop.f32.mrf.mxu0
  %v1737 = vadd.f32 0.0, %v1736
  %1738 = vdwg.mxu0
  %1739 = vmatpush.msra.mxu0 %v1580
  %1740 = vmatpush.msra.mxu0 %v1578
  %1741 = vmatpush.msra.mxu0 %v1576
  %1742 = vmatpush.msra.mxu0 %v1574
  %1743 = vmatpush.msra.mxu0 %v1572
  %1744 = vmatpush.msra.mxu0 %v1570
  %1745 = vmatpush.msra.mxu0 %v1568
  %1746 = vmatpush.msra.mxu0 %v1566
  %1747 = vmatpush.msra.mxu0 %v1564
  %1748 = vmatpush.msra.mxu0 %v1562
  %1749 = vmatpush.msra.mxu0 %v1560
  %1750 = vmatpush.msra.mxu0 %v1558
  %1751 = vmatpush.msra.mxu0 %v1556
  %1752 = vmatpush.msra.mxu0 %v1554
  %1753 = vmatpush.msra.mxu0 %v1552
  %1754 = vmatpush.msra.mxu0 %v1550
  %1755 = vmatmul.f32.gmra.mxu0 %v1267
  %v1756 = vpop.f32.mrf.mxu0
  %v1757 = vadd.f32 %v1728, %v1756
  %1758 = vmatmul.f32.gmra.mxu0 %v1273
  %v1759 = vpop.f32.mrf.mxu0
  %v1760 = vadd.f32 %v1731, %v1759
  %1761 = vmatmul.f32.gmra.mxu0 %v1145
  %v1762 = vpop.f32.mrf.mxu0
  %v1763 = vadd.f32 %v1734, %v1762
  %1764 = vmatmul.f32.gmra.mxu0 %v1148
  %v1765 = vpop.f32.mrf.mxu0
  %v1766 = vadd.f32 %v1737, %v1765
  %1767 = vdwg.mxu0
  %1768 = vmatpush.msra.mxu0 %v1612
  %1769 = vmatpush.msra.mxu0 %v1610
  %1770 = vmatpush.msra.mxu0 %v1608
  %1771 = vmatpush.msra.mxu0 %v1606
  %1772 = vmatpush.msra.mxu0 %v1604
  %1773 = vmatpush.msra.mxu0 %v1602
  %1774 = vmatpush.msra.mxu0 %v1600
  %1775 = vmatpush.msra.mxu0 %v1598
  %1776 = vmatpush.msra.mxu0 %v1596
  %1777 = vmatpush.msra.mxu0 %v1594
  %1778 = vmatpush.msra.mxu0 %v1592
  %1779 = vmatpush.msra.mxu0 %v1590
  %1780 = vmatpush.msra.mxu0 %v1588
  %1781 = vmatpush.msra.mxu0 %v1586
  %1782 = vmatpush.msra.mxu0 %v1584
  %1783 = vmatpush.msra.mxu0 %v1582
  %1784 = vmatmul.f32.gmra.mxu0 %v1268
  %v1785 = vpop.f32.mrf.mxu0
  %v1786 = vadd.f32 %v1757, %v1785
  %1787 = vmatmul.f32.gmra.mxu0 %v1274
  %v1788 = vpop.f32.mrf.mxu0
  %v1789 = vadd.f32 %v1760, %v1788
  %1790 = vmatmul.f32.gmra.mxu0 %v1174
  %v1791 = vpop.f32.mrf.mxu0
  %v1792 = vadd.f32 %v1763, %v1791
  %1793 = vmatmul.f32.gmra.mxu0 %v1177
  %v1794 = vpop.f32.mrf.mxu0
  %v1795 = vadd.f32 %v1766, %v1794
  %1796 = vdwg.mxu0
  %1797 = vmatpush.msra.mxu0 %v1644
  %1798 = vmatpush.msra.mxu0 %v1642
  %1799 = vmatpush.msra.mxu0 %v1640
  %1800 = vmatpush.msra.mxu0 %v1638
  %1801 = vmatpush.msra.mxu0 %v1636
  %1802 = vmatpush.msra.mxu0 %v1634
  %1803 = vmatpush.msra.mxu0 %v1632
  %1804 = vmatpush.msra.mxu0 %v1630
  %1805 = vmatpush.msra.mxu0 %v1628
  %1806 = vmatpush.msra.mxu0 %v1626
  %1807 = vmatpush.msra.mxu0 %v1624
  %1808 = vmatpush.msra.mxu0 %v1622
  %1809 = vmatpush.msra.mxu0 %v1620
  %1810 = vmatpush.msra.mxu0 %v1618
  %1811 = vmatpush.msra.mxu0 %v1616
  %1812 = vmatpush.msra.mxu0 %v1614
  %1813 = vmatmul.f32.gmra.mxu0 %v1269
  %v1814 = vpop.f32.mrf.mxu0
  %v1815 = vadd.f32 %v1786, %v1814
  %1816 = vmatmul.f32.gmra.mxu0 %v1275
  %v1817 = vpop.f32.mrf.mxu0
  %v1818 = vadd.f32 %v1789, %v1817
  %1819 = vmatmul.f32.gmra.mxu0 %v1203
  %v1820 = vpop.f32.mrf.mxu0
  %v1821 = vadd.f32 %v1792, %v1820
  %1822 = vmatmul.f32.gmra.mxu0 %v1206
  %v1823 = vpop.f32.mrf.mxu0
  %v1824 = vadd.f32 %v1795, %v1823
  %1825 = vdwg.mxu0
  %1826 = vmatpush.msra.mxu0 %v1676
  %1827 = vmatpush.msra.mxu0 %v1674
  %1828 = vmatpush.msra.mxu0 %v1672
  %1829 = vmatpush.msra.mxu0 %v1670
  %1830 = vmatpush.msra.mxu0 %v1668
  %1831 = vmatpush.msra.mxu0 %v1666
  %1832 = vmatpush.msra.mxu0 %v1664
  %1833 = vmatpush.msra.mxu0 %v1662
  %1834 = vmatpush.msra.mxu0 %v1660
  %1835 = vmatpush.msra.mxu0 %v1658
  %1836 = vmatpush.msra.mxu0 %v1656
  %1837 = vmatpush.msra.mxu0 %v1654
  %1838 = vmatpush.msra.mxu0 %v1652
  %1839 = vmatpush.msra.mxu0 %v1650
  %1840 = vmatpush.msra.mxu0 %v1648
  %1841 = vmatpush.msra.mxu0 %v1646
  %1842 = vmatmul.f32.gmra.mxu0 %v1270
  %v1843 = vpop.f32.mrf.mxu0
  %v1844 = vadd.f32 %v1815, %v1843
  %1845 = vmatmul.f32.gmra.mxu0 %v1276
  %v1846 = vpop.f32.mrf.mxu0
  %v1847 = vadd.f32 %v1818, %v1846
  %1848 = vmatmul.f32.gmra.mxu0 %v1232
  %v1849 = vpop.f32.mrf.mxu0
  %v1850 = vadd.f32 %v1821, %v1849
  %1851 = vmatmul.f32.gmra.mxu0 %v1235
  %v1852 = vpop.f32.mrf.mxu0
  %v1853 = vadd.f32 %v1824, %v1852
  %1854 = vdwg.mxu0
  %1855 = vmatpush.msra.mxu0 %v1708
  %1856 = vmatpush.msra.mxu0 %v1706
  %1857 = vmatpush.msra.mxu0 %v1704
  %1858 = vmatpush.msra.mxu0 %v1702
  %1859 = vmatpush.msra.mxu0 %v1700
  %1860 = vmatpush.msra.mxu0 %v1698
  %1861 = vmatpush.msra.mxu0 %v1696
  %1862 = vmatpush.msra.mxu0 %v1694
  %1863 = vmatpush.msra.mxu0 %v1692
  %1864 = vmatpush.msra.mxu0 %v1690
  %1865 = vmatpush.msra.mxu0 %v1688
  %1866 = vmatpush.msra.mxu0 %v1686
  %1867 = vmatpush.msra.mxu0 %v1684
  %1868 = vmatpush.msra.mxu0 %v1682
  %1869 = vmatpush.msra.mxu0 %v1680
  %1870 = vmatpush.msra.mxu0 %v1678
  %1871 = vmatmul.f32.gmra.mxu0 %v1271
  %v1872 = vpop.f32.mrf.mxu0
  %v1873 = vadd.f32 %v1844, %v1872
  %1874 = vmatmul.f32.gmra.mxu0 %v1277
  %v1875 = vpop.f32.mrf.mxu0
  %v1876 = vadd.f32 %v1847, %v1875
  %1877 = vmatmul.f32.gmra.mxu0 %v1261
  %v1878 = vpop.f32.mrf.mxu0
  %v1879 = vadd.f32 %v1850, %v1878
  %1880 = vmatmul.f32.gmra.mxu0 %v1264
  %v1881 = vpop.f32.mrf.mxu0
  %v1882 = vadd.f32 %v1853, %v1881
  %1883 = vdwg.mxu0
  %1884 = vmatpush.msra.mxu0 %v1549
  %1885 = vmatpush.msra.mxu0 %v1547
  %1886 = vmatpush.msra.mxu0 %v1545
  %1887 = vmatpush.msra.mxu0 %v1543
  %1888 = vmatpush.msra.mxu0 %v1541
  %1889 = vmatpush.msra.mxu0 %v1539
  %1890 = vmatpush.msra.mxu0 %v1537
  %1891 = vmatpush.msra.mxu0 %v1535
  %1892 = vmatpush.msra.mxu0 %v1533
  %1893 = vmatpush.msra.mxu0 %v1531
  %1894 = vmatpush.msra.mxu0 %v1529
  %1895 = vmatpush.msra.mxu0 %v1527
  %1896 = vmatpush.msra.mxu0 %v1525
  %1897 = vmatpush.msra.mxu0 %v1523
  %1898 = vmatpush.msra.mxu0 %v1521
  %1899 = vmatpush.msra.mxu0 %v1519
  %1900 = vmatmul.f32.gmra.mxu0 %v1266
  %v1901 = vpop.f32.mrf.mxu0
  %v1902 = vadd.f32 0.0, %v1901
  %1903 = vmatmul.f32.gmra.mxu0 %v1272
  %v1904 = vpop.f32.mrf.mxu0
  %v1905 = vadd.f32 0.0, %v1904
  %1906 = vmatmul.f32.gmra.mxu0 %v1116
  %v1907 = vpop.f32.mrf.mxu0
  %v1908 = vadd.f32 0.0, %v1907
  %1909 = vmatmul.f32.gmra.mxu0 %v1119
  %v1910 = vpop.f32.mrf.mxu0
  %v1911 = vadd.f32 0.0, %v1910
  %1912 = vdwg.mxu0
  %1913 = vmatpush.msra.mxu0 %v1581
  %1914 = vmatpush.msra.mxu0 %v1579
  %1915 = vmatpush.msra.mxu0 %v1577
  %1916 = vmatpush.msra.mxu0 %v1575
  %1917 = vmatpush.msra.mxu0 %v1573
  %1918 = vmatpush.msra.mxu0 %v1571
  %1919 = vmatpush.msra.mxu0 %v1569
  %1920 = vmatpush.msra.mxu0 %v1567
  %1921 = vmatpush.msra.mxu0 %v1565
  %1922 = vmatpush.msra.mxu0 %v1563
  %1923 = vmatpush.msra.mxu0 %v1561
  %1924 = vmatpush.msra.mxu0 %v1559
  %1925 = vmatpush.msra.mxu0 %v1557
  %1926 = vmatpush.msra.mxu0 %v1555
  %1927 = vmatpush.msra.mxu0 %v1553
  %1928 = vmatpush.msra.mxu0 %v1551
  %1929 = vmatmul.f32.gmra.mxu0 %v1267
  %v1930 = vpop.f32.mrf.mxu0
  %v1931 = vadd.f32 %v1902, %v1930
  %1932 = vmatmul.f32.gmra.mxu0 %v1273
  %v1933 = vpop.f32.mrf.mxu0
  %v1934 = vadd.f32 %v1905, %v1933
  %1935 = vmatmul.f32.gmra.mxu0 %v1145
  %v1936 = vpop.f32.mrf.mxu0
  %v1937 = vadd.f32 %v1908, %v1936
  %1938 = vmatmul.f32.gmra.mxu0 %v1148
  %v1939 = vpop.f32.mrf.mxu0
  %v1940 = vadd.f32 %v1911, %v1939
  %1941 = vdwg.mxu0
  %1942 = vmatpush.msra.mxu0 %v1613
  %1943 = vmatpush.msra.mxu0 %v1611
  %1944 = vmatpush.msra.mxu0 %v1609
  %1945 = vmatpush.msra.mxu0 %v1607
  %1946 = vmatpush.msra.mxu0 %v1605
  %1947 = vmatpush.msra.mxu0 %v1603
  %1948 = vmatpush.msra.mxu0 %v1601
  %1949 = vmatpush.msra.mxu0 %v1599
  %1950 = vmatpush.msra.mxu0 %v1597
  %1951 = vmatpush.msra.mxu0 %v1595
  %1952 = vmatpush.msra.mxu0 %v1593
  %1953 = vmatpush.msra.mxu0 %v1591
  %1954 = vmatpush.msra.mxu0 %v1589
  %1955 = vmatpush.msra.mxu0 %v1587
  %1956 = vmatpush.msra.mxu0 %v1585
  %1957 = vmatpush.msra.mxu0 %v1583
  %1958 = vmatmul.f32.gmra.mxu0 %v1268
  %v1959 = vpop.f32.mrf.mxu0
  %v1960 = vadd.f32 %v1931, %v1959
  %1961 = vmatmul.f32.gmra.mxu0 %v1274
  %v1962 = vpop.f32.mrf.mxu0
  %v1963 = vadd.f32 %v1934, %v1962
  %1964 = vmatmul.f32.gmra.mxu0 %v1174
  %v1965 = vpop.f32.mrf.mxu0
  %v1966 = vadd.f32 %v1937, %v1965
  %1967 = vmatmul.f32.gmra.mxu0 %v1177
  %v1968 = vpop.f32.mrf.mxu0
  %v1969 = vadd.f32 %v1940, %v1968
  %1970 = vdwg.mxu0
  %1971 = vmatpush.msra.mxu0 %v1645
  %1972 = vmatpush.msra.mxu0 %v1643
  %1973 = vmatpush.msra.mxu0 %v1641
  %1974 = vmatpush.msra.mxu0 %v1639
  %1975 = vmatpush.msra.mxu0 %v1637
  %1976 = vmatpush.msra.mxu0 %v1635
  %1977 = vmatpush.msra.mxu0 %v1633
  %1978 = vmatpush.msra.mxu0 %v1631
  %1979 = vmatpush.msra.mxu0 %v1629
  %1980 = vmatpush.msra.mxu0 %v1627
  %1981 = vmatpush.msra.mxu0 %v1625
  %1982 = vmatpush.msra.mxu0 %v1623
  %1983 = vmatpush.msra.mxu0 %v1621
  %1984 = vmatpush.msra.mxu0 %v1619
  %1985 = vmatpush.msra.mxu0 %v1617
  %1986 = vmatpush.msra.mxu0 %v1615
  %1987 = vmatmul.f32.gmra.mxu0 %v1269
  %v1988 = vpop.f32.mrf.mxu0
  %v1989 = vadd.f32 %v1960, %v1988
  %1990 = vmatmul.f32.gmra.mxu0 %v1275
  %v1991 = vpop.f32.mrf.mxu0
  %v1992 = vadd.f32 %v1963, %v1991
  %1993 = vmatmul.f32.gmra.mxu0 %v1203
  %v1994 = vpop.f32.mrf.mxu0
  %v1995 = vadd.f32 %v1966, %v1994
  %1996 = vmatmul.f32.gmra.mxu0 %v1206
  %v1997 = vpop.f32.mrf.mxu0
  %v1998 = vadd.f32 %v1969, %v1997
  %1999 = vdwg.mxu0
  %2000 = vmatpush.msra.mxu0 %v1677
  %2001 = vmatpush.msra.mxu0 %v1675
  %2002 = vmatpush.msra.mxu0 %v1673
  %2003 = vmatpush.msra.mxu0 %v1671
  %2004 = vmatpush.msra.mxu0 %v1669
  %2005 = vmatpush.msra.mxu0 %v1667
  %2006 = vmatpush.msra.mxu0 %v1665
  %2007 = vmatpush.msra.mxu0 %v1663
  %2008 = vmatpush.msra.mxu0 %v1661
  %2009 = vmatpush.msra.mxu0 %v1659
  %2010 = vmatpush.msra.mxu0 %v1657
  %2011 = vmatpush.msra.mxu0 %v1655
  %2012 = vmatpush.msra.mxu0 %v1653
  %2013 = vmatpush.msra.mxu0 %v1651
  %2014 = vmatpush.msra.mxu0 %v1649
  %2015 = vmatpush.msra.mxu0 %v1647
  %2016 = vmatmul.f32.gmra.mxu0 %v1270
  %v2017 = vpop.f32.mrf.mxu0
  %v2018 = vadd.f32 %v1989, %v2017
  %2019 = vmatmul.f32.gmra.mxu0 %v1276
  %v2020 = vpop.f32.mrf.mxu0
  %v2021 = vadd.f32 %v1992, %v2020
  %2022 = vmatmul.f32.gmra.mxu0 %v1232
  %v2023 = vpop.f32.mrf.mxu0
  %v2024 = vadd.f32 %v1995, %v2023
  %2025 = vmatmul.f32.gmra.mxu0 %v1235
  %v2026 = vpop.f32.mrf.mxu0
  %v2027 = vadd.f32 %v1998, %v2026
  %2028 = vdwg.mxu0
  %2029 = vmatpush.msra.mxu0 %v1709
  %2030 = vmatpush.msra.mxu0 %v1707
  %2031 = vmatpush.msra.mxu0 %v1705
  %2032 = vmatpush.msra.mxu0 %v1703
  %2033 = vmatpush.msra.mxu0 %v1701
  %2034 = vmatpush.msra.mxu0 %v1699
  %2035 = vmatpush.msra.mxu0 %v1697
  %2036 = vmatpush.msra.mxu0 %v1695
  %2037 = vmatpush.msra.mxu0 %v1693
  %2038 = vmatpush.msra.mxu0 %v1691
  %2039 = vmatpush.msra.mxu0 %v1689
  %2040 = vmatpush.msra.mxu0 %v1687
  %2041 = vmatpush.msra.mxu0 %v1685
  %2042 = vmatpush.msra.mxu0 %v1683
  %2043 = vmatpush.msra.mxu0 %v1681
  %2044 = vmatpush.msra.mxu0 %v1679
  %2045 = vmatmul.f32.gmra.mxu0 %v1271
  %v2046 = vpop.f32.mrf.mxu0
  %v2047 = vadd.f32 %v2018, %v2046
  %2048 = vmatmul.f32.gmra.mxu0 %v1277
  %v2049 = vpop.f32.mrf.mxu0
  %v2050 = vadd.f32 %v2021, %v2049
  %2051 = vmatmul.f32.gmra.mxu0 %v1261
  %v2052 = vpop.f32.mrf.mxu0
  %v2053 = vadd.f32 %v2024, %v2052
  %2054 = vmatmul.f32.gmra.mxu0 %v1264
  %v2055 = vpop.f32.mrf.mxu0
  %v2056 = vadd.f32 %v2027, %v2055
  %2057 = vdwg.mxu0
  %v2058 = vld [vmem:[%s1 + $0xa8] sm:$0xff]
  %v2059 = vld [vmem:[%s1 + $0xb0] sm:$0xff]
  %v2060 = vld [vmem:[%s1 + $0xc0] sm:$0xff]
  %v2061 = vld [vmem:[%s1 + $0xc8] sm:$0xff]
  %2062 = vrot.lane.b32.xlu0 %v1873, 11
  %v2063 = vpop.permute.xlu0 %2062
  %2064 = vrot.lane.b32.xlu0 %v1876, 11
  %v2065 = vpop.permute.xlu0 %2064
  %2066 = vrot.lane.b32.xlu0 %v2047, 11
  %v2067 = vpop.permute.xlu0 %2066
  %2068 = vrot.lane.b32.xlu0 %v2050, 11
  %v2069 = vpop.permute.xlu0 %2068
  %vm2070 = vcmp.lt.s32.totalorder %v38, 11
  %v2071 = vsel %vm2070, %v2063, %v2067
  %v2072 = vsel %vm2070, %v2065, %v2069
  %v2073 = vsel %vm2070, %v2067, %v2063
  %v2074 = vsel %vm2070, %v2069, %v2065
  %2075 = vrot.lane.b32.xlu0 %v1873, 10
  %v2076 = vpop.permute.xlu0 %2075
  %2077 = vrot.lane.b32.xlu0 %v1876, 10
  %v2078 = vpop.permute.xlu0 %2077
  %2079 = vrot.lane.b32.xlu0 %v2047, 10
  %v2080 = vpop.permute.xlu0 %2079
  %2081 = vrot.lane.b32.xlu0 %v2050, 10
  %v2082 = vpop.permute.xlu0 %2081
  %vm2083 = vcmp.lt.s32.totalorder %v38, 10
  %v2084 = vsel %vm2083, %v2076, %v2080
  %v2085 = vsel %vm2083, %v2078, %v2082
  %v2086 = vsel %vm2083, %v2080, %v2076
  %v2087 = vsel %vm2083, %v2082, %v2078
  %2088 = vrot.lane.b32.xlu0 %v1873, 9
  %v2089 = vpop.permute.xlu0 %2088
  %2090 = vrot.lane.b32.xlu0 %v1876, 9
  %v2091 = vpop.permute.xlu0 %2090
  %2092 = vrot.lane.b32.xlu0 %v2047, 9
  %v2093 = vpop.permute.xlu0 %2092
  %2094 = vrot.lane.b32.xlu0 %v2050, 9
  %v2095 = vpop.permute.xlu0 %2094
  %vm2096 = vcmp.lt.s32.totalorder %v38, 9
  %v2097 = vsel %vm2096, %v2089, %v2093
  %v2098 = vsel %vm2096, %v2091, %v2095
  %v2099 = vsel %vm2096, %v2093, %v2089
  %v2100 = vsel %vm2096, %v2095, %v2091
  %2101 = vrot.lane.b32.xlu0 %v1873, 1
  %v2102 = vpop.permute.xlu0 %2101
  %2103 = vrot.lane.b32.xlu0 %v1876, 1
  %v2104 = vpop.permute.xlu0 %2103
  %2105 = vrot.lane.b32.xlu0 %v2047, 1
  %v2106 = vpop.permute.xlu0 %2105
  %2107 = vrot.lane.b32.xlu0 %v2050, 1
  %v2108 = vpop.permute.xlu0 %2107
  %v2109 = vsel %vm96, %v2102, %v2106
  %v2110 = vsel %vm96, %v2104, %v2108
  %v2111 = vsel %vm96, %v2106, %v2102
  %v2112 = vsel %vm96, %v2108, %v2104
  %2113 = vrot.lane.b32.xlu0 %v1873, 127
  %v2114 = vpop.permute.xlu0 %2113
  %2115 = vrot.lane.b32.xlu0 %v1876, 127
  %v2116 = vpop.permute.xlu0 %2115
  %2117 = vrot.lane.b32.xlu0 %v2047, 127
  %v2118 = vpop.permute.xlu0 %2117
  %2119 = vrot.lane.b32.xlu0 %v2050, 127
  %v2120 = vpop.permute.xlu0 %2119
  %v2121 = vsel %vm115, %v2114, %v2118
  %v2122 = vsel %vm115, %v2116, %v2120
  %v2123 = vsel %vm115, %v2118, %v2114
  %v2124 = vsel %vm115, %v2120, %v2116
  %2125 = vrot.lane.b32.xlu0 %v1873, 119
  %v2126 = vpop.permute.xlu0 %2125
  %2127 = vrot.lane.b32.xlu0 %v1876, 119
  %v2128 = vpop.permute.xlu0 %2127
  %2129 = vrot.lane.b32.xlu0 %v2047, 119
  %v2130 = vpop.permute.xlu0 %2129
  %2131 = vrot.lane.b32.xlu0 %v2050, 119
  %v2132 = vpop.permute.xlu0 %2131
  %vm2133 = vcmp.lt.s32.totalorder %v38, 119
  %v2134 = vsel %vm2133, %v2126, %v2130
  %v2135 = vsel %vm2133, %v2128, %v2132
  %v2136 = vsel %vm2133, %v2130, %v2126
  %v2137 = vsel %vm2133, %v2132, %v2128
  %2138 = vrot.lane.b32.xlu0 %v1873, 118
  %v2139 = vpop.permute.xlu0 %2138
  %2140 = vrot.lane.b32.xlu0 %v1876, 118
  %v2141 = vpop.permute.xlu0 %2140
  %2142 = vrot.lane.b32.xlu0 %v2047, 118
  %v2143 = vpop.permute.xlu0 %2142
  %2144 = vrot.lane.b32.xlu0 %v2050, 118
  %v2145 = vpop.permute.xlu0 %2144
  %vm2146 = vcmp.lt.s32.totalorder %v38, 118
  %v2147 = vsel %vm2146, %v2139, %v2143
  %v2148 = vsel %vm2146, %v2141, %v2145
  %v2149 = vsel %vm2146, %v2143, %v2139
  %v2150 = vsel %vm2146, %v2145, %v2141
  %2151 = vrot.lane.b32.xlu0 %v1873, 117
  %v2152 = vpop.permute.xlu0 %2151
  %2153 = vrot.lane.b32.xlu0 %v1876, 117
  %v2154 = vpop.permute.xlu0 %2153
  %2155 = vrot.lane.b32.xlu0 %v2047, 117
  %v2156 = vpop.permute.xlu0 %2155
  %2157 = vrot.lane.b32.xlu0 %v2050, 117
  %v2158 = vpop.permute.xlu0 %2157
  %vm2159 = vcmp.lt.s32.totalorder %v38, 117
  %v2160 = vsel %vm2159, %v2152, %v2156
  %v2161 = vsel %vm2159, %v2154, %v2158
  %v2162 = vsel %vm2159, %v2156, %v2152
  %v2163 = vsel %vm2159, %v2158, %v2154
  %v2164 = vld [vmem:[%s1 + $0xb8] sm:$0xff]
  %v2165 = vld [vmem:[%s1 + $0xd0] sm:$0xff]
  %2167 = vset.pattern.permute.xlu0 32
  %2168 = vperm.xlu0 %2167, %v2164
  %v2169 = vpop.permute.xlu0 %2168
  %2172 = vset.pattern.permute.xlu0 32
  %2173 = vperm.xlu0 %2172, %v2165
  %v2174 = vpop.permute.xlu0 %2173
  %vm2176 = vcmask 130048
  %v2178 = vsel %vm2176, %v2059, 0
  %v2181 = vsel %vm2176, %v2061, 0
  %2183 = vmatpush.msra.mxu0 %v2148
  %2184 = vmatpush.msra.mxu0 %v2147
  %2185 = vmatpush.msra.mxu0 %v2135
  %2186 = vmatpush.msra.mxu0 %v2134
  %2187 = vmatpush.msra.mxu0 %v2122
  %2188 = vmatpush.msra.mxu0 %v2121
  %2189 = vmatpush.msra.mxu0 %v1876
  %2190 = vmatpush.msra.mxu0 %v1873
  %2191 = vmatpush.msra.mxu0 %v2112
  %2192 = vmatpush.msra.mxu0 %v2111
  %2193 = vmatpush.msra.mxu0 %v2100
  %2194 = vmatpush.msra.mxu0 %v2099
  %2195 = vmatpush.msra.mxu0 %v2087
  %2196 = vmatpush.msra.mxu0 %v2086
  %2197 = vmatpush.msra.mxu0 %v2074
  %2198 = vmatpush.msra.mxu0 %v2073
  %2199 = vmatmul.f32.gmra.mxu0 %v2058
  %v2200 = vpop.f32.mrf.mxu0
  %v2201 = vadd.f32 %v2169, %v2200
  %2202 = vmatmul.f32.gmra.mxu0 %v2060
  %v2203 = vpop.f32.mrf.mxu0
  %v2204 = vadd.f32 %v2174, %v2203
  %2205 = vdwg.mxu0
  %2206 = vmatpush.msra.mxu0 0.0
  %2207 = vmatpush.msra.mxu0 0.0
  %2208 = vmatpush.msra.mxu0 0.0
  %2209 = vmatpush.msra.mxu0 0.0
  %2210 = vmatpush.msra.mxu0 0.0
  %2211 = vmatpush.msra.mxu0 0.0
  %2212 = vmatpush.msra.mxu0 0.0
  %2213 = vmatpush.msra.mxu0 0.0
  %2214 = vmatpush.msra.mxu0 0.0
  %2215 = vmatpush.msra.mxu0 0.0
  %2216 = vmatpush.msra.mxu0 0.0
  %2217 = vmatpush.msra.mxu0 0.0
  %2218 = vmatpush.msra.mxu0 0.0
  %2219 = vmatpush.msra.mxu0 0.0
  %2220 = vmatpush.msra.mxu0 %v2161
  %2221 = vmatpush.msra.mxu0 %v2160
  %2222 = vmatmul.f32.gmra.mxu0 %v2178
  %v2223 = vpop.f32.mrf.mxu0
  %v2224 = vadd.f32 %v2201, %v2223
  %2225 = vmatmul.f32.gmra.mxu0 %v2181
  %v2226 = vpop.f32.mrf.mxu0
  %v2227 = vadd.f32 %v2204, %v2226
  %2228 = vdwg.mxu0
  %2229 = vmatpush.msra.mxu0 %v2150
  %2230 = vmatpush.msra.mxu0 %v2149
  %2231 = vmatpush.msra.mxu0 %v2137
  %2232 = vmatpush.msra.mxu0 %v2136
  %2233 = vmatpush.msra.mxu0 %v2124
  %2234 = vmatpush.msra.mxu0 %v2123
  %2235 = vmatpush.msra.mxu0 %v2050
  %2236 = vmatpush.msra.mxu0 %v2047
  %2237 = vmatpush.msra.mxu0 %v2110
  %2238 = vmatpush.msra.mxu0 %v2109
  %2239 = vmatpush.msra.mxu0 %v2098
  %2240 = vmatpush.msra.mxu0 %v2097
  %2241 = vmatpush.msra.mxu0 %v2085
  %2242 = vmatpush.msra.mxu0 %v2084
  %2243 = vmatpush.msra.mxu0 %v2072
  %2244 = vmatpush.msra.mxu0 %v2071
  %2245 = vmatmul.f32.gmra.mxu0 %v2058
  %v2246 = vpop.f32.mrf.mxu0
  %v2247 = vadd.f32 %v2169, %v2246
  %2248 = vmatmul.f32.gmra.mxu0 %v2060
  %v2249 = vpop.f32.mrf.mxu0
  %v2250 = vadd.f32 %v2174, %v2249
  %2251 = vdwg.mxu0
  %2252 = vmatpush.msra.mxu0 0.0
  %2253 = vmatpush.msra.mxu0 0.0
  %2254 = vmatpush.msra.mxu0 0.0
  %2255 = vmatpush.msra.mxu0 0.0
  %2256 = vmatpush.msra.mxu0 0.0
  %2257 = vmatpush.msra.mxu0 0.0
  %2258 = vmatpush.msra.mxu0 0.0
  %2259 = vmatpush.msra.mxu0 0.0
  %2260 = vmatpush.msra.mxu0 0.0
  %2261 = vmatpush.msra.mxu0 0.0
  %2262 = vmatpush.msra.mxu0 0.0
  %2263 = vmatpush.msra.mxu0 0.0
  %2264 = vmatpush.msra.mxu0 0.0
  %2265 = vmatpush.msra.mxu0 0.0
  %2266 = vmatpush.msra.mxu0 %v2163
  %2267 = vmatpush.msra.mxu0 %v2162
  %2268 = vmatmul.f32.gmra.mxu0 %v2178
  %v2269 = vpop.f32.mrf.mxu0
  %v2270 = vadd.f32 %v2247, %v2269
  %2271 = vmatmul.f32.gmra.mxu0 %v2181
  %v2272 = vpop.f32.mrf.mxu0
  %v2273 = vadd.f32 %v2250, %v2272
  %2274 = vdwg.mxu0
  %v2276 = vperm.slane %v907, 0
  %v2277 = vperm.slane %v907, 1
  %v2280 = vmul.f32 %v2224, %v2276
  %v2281 = vmul.f32 %v2270, %v2277
  %v2282 = vmul.f32 %v2227, %v2276
  %v2283 = vmul.f32 %v2273, %v2277
  %v2284 = vadd.f32 %v1879, %v2280
  %v2285 = vadd.f32 %v2053, %v2281
  %v2286 = vadd.f32 %v1882, %v2282
  %v2287 = vadd.f32 %v2056, %v2283
  %v2288 = vmax.f32 %v2284, 0.0
  %v2289 = vmax.f32 %v2285, 0.0
  %v2290 = vmax.f32 %v2286, 0.0
  %v2291 = vmax.f32 %v2287, 0.0
  %v2292 = vld [vmem:[%s0 + $0x90] ss:$0 sm:$0xff]
  %v2293 = vld [vmem:[%s1 + $0xd8] sm:$0xff]
  %v2294 = vld [vmem:[%s1 + $0xe0] sm:$0xff]
  %v2295 = vld [vmem:[%s1 + $0xf0] sm:$0xff]
  %v2296 = vld [vmem:[%s1 + $0xf8] sm:$0xff]
  %v2297 = vld [vmem:[%s1 + $0x108] sm:$0xff]
  %v2298 = vld [vmem:[%s1 + $0x110] sm:$0xff]
  %v2299 = vld [vmem:[%s1 + $0x120] sm:$0xff]
  %v2300 = vld [vmem:[%s1 + $0x128] sm:$0xff]
  %v2301 = vld [vmem:[%s1 + $0x138] sm:$0xff]
  %v2302 = vld [vmem:[%s1 + $0x140] sm:$0xff]
  %v2303 = vld [vmem:[%s1 + $0x150] sm:$0xff]
  %v2304 = vld [vmem:[%s1 + $0x158] sm:$0xff]
  %v2305 = vld [vmem:[%s1 + $0x168] sm:$0xff]
  %v2306 = vld [vmem:[%s1 + $0x170] sm:$0xff]
  %v2307 = vld [vmem:[%s1 + $0x180] sm:$0xff]
  %v2308 = vld [vmem:[%s1 + $0x188] sm:$0xff]
  %2309 = vrot.lane.b32.xlu0 %v2288, 11
  %v2310 = vpop.permute.xlu0 %2309
  %2311 = vrot.lane.b32.xlu0 %v2290, 11
  %v2312 = vpop.permute.xlu0 %2311
  %2313 = vrot.lane.b32.xlu0 %v2289, 11
  %v2314 = vpop.permute.xlu0 %2313
  %2315 = vrot.lane.b32.xlu0 %v2291, 11
  %v2316 = vpop.permute.xlu0 %2315
  %v2317 = vsel %vm2070, %v2310, %v2314
  %v2318 = vsel %vm2070, %v2312, %v2316
  %v2319 = vsel %vm2070, %v2314, %v2310
  %v2320 = vsel %vm2070, %v2316, %v2312
  %2321 = vrot.lane.b32.xlu0 %v2288, 10
  %v2322 = vpop.permute.xlu0 %2321
  %2323 = vrot.lane.b32.xlu0 %v2290, 10
  %v2324 = vpop.permute.xlu0 %2323
  %2325 = vrot.lane.b32.xlu0 %v2289, 10
  %v2326 = vpop.permute.xlu0 %2325
  %2327 = vrot.lane.b32.xlu0 %v2291, 10
  %v2328 = vpop.permute.xlu0 %2327
  %v2329 = vsel %vm2083, %v2322, %v2326
  %v2330 = vsel %vm2083, %v2324, %v2328
  %v2331 = vsel %vm2083, %v2326, %v2322
  %v2332 = vsel %vm2083, %v2328, %v2324
  %2333 = vrot.lane.b32.xlu0 %v2288, 9
  %v2334 = vpop.permute.xlu0 %2333
  %2335 = vrot.lane.b32.xlu0 %v2290, 9
  %v2336 = vpop.permute.xlu0 %2335
  %2337 = vrot.lane.b32.xlu0 %v2289, 9
  %v2338 = vpop.permute.xlu0 %2337
  %2339 = vrot.lane.b32.xlu0 %v2291, 9
  %v2340 = vpop.permute.xlu0 %2339
  %v2341 = vsel %vm2096, %v2334, %v2338
  %v2342 = vsel %vm2096, %v2336, %v2340
  %v2343 = vsel %vm2096, %v2338, %v2334
  %v2344 = vsel %vm2096, %v2340, %v2336
  %2345 = vrot.lane.b32.xlu0 %v2288, 1
  %v2346 = vpop.permute.xlu0 %2345
  %2347 = vrot.lane.b32.xlu0 %v2290, 1
  %v2348 = vpop.permute.xlu0 %2347
  %2349 = vrot.lane.b32.xlu0 %v2289, 1
  %v2350 = vpop.permute.xlu0 %2349
  %2351 = vrot.lane.b32.xlu0 %v2291, 1
  %v2352 = vpop.permute.xlu0 %2351
  %v2353 = vsel %vm96, %v2346, %v2350
  %v2354 = vsel %vm96, %v2348, %v2352
  %v2355 = vsel %vm96, %v2350, %v2346
  %v2356 = vsel %vm96, %v2352, %v2348
  %2357 = vrot.lane.b32.xlu0 %v2288, 127
  %v2358 = vpop.permute.xlu0 %2357
  %2359 = vrot.lane.b32.xlu0 %v2290, 127
  %v2360 = vpop.permute.xlu0 %2359
  %2361 = vrot.lane.b32.xlu0 %v2289, 127
  %v2362 = vpop.permute.xlu0 %2361
  %2363 = vrot.lane.b32.xlu0 %v2291, 127
  %v2364 = vpop.permute.xlu0 %2363
  %v2365 = vsel %vm115, %v2358, %v2362
  %v2366 = vsel %vm115, %v2360, %v2364
  %v2367 = vsel %vm115, %v2362, %v2358
  %v2368 = vsel %vm115, %v2364, %v2360
  %2369 = vrot.lane.b32.xlu0 %v2288, 119
  %v2370 = vpop.permute.xlu0 %2369
  %2371 = vrot.lane.b32.xlu0 %v2290, 119
  %v2372 = vpop.permute.xlu0 %2371
  %2373 = vrot.lane.b32.xlu0 %v2289, 119
  %v2374 = vpop.permute.xlu0 %2373
  %2375 = vrot.lane.b32.xlu0 %v2291, 119
  %v2376 = vpop.permute.xlu0 %2375
  %v2377 = vsel %vm2133, %v2370, %v2374
  %v2378 = vsel %vm2133, %v2372, %v2376
  %v2379 = vsel %vm2133, %v2374, %v2370
  %v2380 = vsel %vm2133, %v2376, %v2372
  %2381 = vrot.lane.b32.xlu0 %v2288, 118
  %v2382 = vpop.permute.xlu0 %2381
  %2383 = vrot.lane.b32.xlu0 %v2290, 118
  %v2384 = vpop.permute.xlu0 %2383
  %2385 = vrot.lane.b32.xlu0 %v2289, 118
  %v2386 = vpop.permute.xlu0 %2385
  %2387 = vrot.lane.b32.xlu0 %v2291, 118
  %v2388 = vpop.permute.xlu0 %2387
  %v2389 = vsel %vm2146, %v2382, %v2386
  %v2390 = vsel %vm2146, %v2384, %v2388
  %v2391 = vsel %vm2146, %v2386, %v2382
  %v2392 = vsel %vm2146, %v2388, %v2384
  %2393 = vrot.lane.b32.xlu0 %v2288, 117
  %v2394 = vpop.permute.xlu0 %2393
  %2395 = vrot.lane.b32.xlu0 %v2290, 117
  %v2396 = vpop.permute.xlu0 %2395
  %2397 = vrot.lane.b32.xlu0 %v2289, 117
  %v2398 = vpop.permute.xlu0 %2397
  %2399 = vrot.lane.b32.xlu0 %v2291, 117
  %v2400 = vpop.permute.xlu0 %2399
  %v2401 = vsel %vm2159, %v2394, %v2398
  %v2402 = vsel %vm2159, %v2396, %v2400
  %v2403 = vsel %vm2159, %v2398, %v2394
  %v2404 = vsel %vm2159, %v2400, %v2396
  %v2405 = vld [vmem:[%s1 + $0xe8] sm:$0xff]
  %v2406 = vld [vmem:[%s1 + $0x100] sm:$0xff]
  %v2407 = vld [vmem:[%s1 + $0x118] sm:$0xff]
  %v2408 = vld [vmem:[%s1 + $0x130] sm:$0xff]
  %v2409 = vld [vmem:[%s1 + $0x148] sm:$0xff]
  %v2410 = vld [vmem:[%s1 + $0x160] sm:$0xff]
  %v2411 = vld [vmem:[%s1 + $0x178] sm:$0xff]
  %v2412 = vld [vmem:[%s1 + $0x190] sm:$0xff]
  %2414 = vset.pattern.permute.xlu0 32
  %2415 = vperm.xlu0 %2414, %v2405
  %v2416 = vpop.permute.xlu0 %2415
  %2419 = vset.pattern.permute.xlu0 32
  %2420 = vperm.xlu0 %2419, %v2406
  %v2421 = vpop.permute.xlu0 %2420
  %2424 = vset.pattern.permute.xlu0 32
  %2425 = vperm.xlu0 %2424, %v2407
  %v2426 = vpop.permute.xlu0 %2425
  %2429 = vset.pattern.permute.xlu0 32
  %2430 = vperm.xlu0 %2429, %v2408
  %v2431 = vpop.permute.xlu0 %2430
  %2434 = vset.pattern.permute.xlu0 32
  %2435 = vperm.xlu0 %2434, %v2409
  %v2436 = vpop.permute.xlu0 %2435
  %2439 = vset.pattern.permute.xlu0 32
  %2440 = vperm.xlu0 %2439, %v2410
  %v2441 = vpop.permute.xlu0 %2440
  %2444 = vset.pattern.permute.xlu0 32
  %2445 = vperm.xlu0 %2444, %v2411
  %v2446 = vpop.permute.xlu0 %2445
  %2449 = vset.pattern.permute.xlu0 32
  %2450 = vperm.xlu0 %2449, %v2412
  %v2451 = vpop.permute.xlu0 %2450
  %v2454 = vsel %vm2176, %v2294, 0
  %v2457 = vsel %vm2176, %v2296, 0
  %v2460 = vsel %vm2176, %v2298, 0
  %v2463 = vsel %vm2176, %v2300, 0
  %v2466 = vsel %vm2176, %v2302, 0
  %v2469 = vsel %vm2176, %v2304, 0
  %v2472 = vsel %vm2176, %v2306, 0
  %v2475 = vsel %vm2176, %v2308, 0
  %2477 = vmatpush.msra.mxu0 %v2390
  %2478 = vmatpush.msra.mxu0 %v2389
  %2479 = vmatpush.msra.mxu0 %v2378
  %2480 = vmatpush.msra.mxu0 %v2377
  %2481 = vmatpush.msra.mxu0 %v2366
  %2482 = vmatpush.msra.mxu0 %v2365
  %2483 = vmatpush.msra.mxu0 %v2290
  %2484 = vmatpush.msra.mxu0 %v2288
  %2485 = vmatpush.msra.mxu0 %v2356
  %2486 = vmatpush.msra.mxu0 %v2355
  %2487 = vmatpush.msra.mxu0 %v2344
  %2488 = vmatpush.msra.mxu0 %v2343
  %2489 = vmatpush.msra.mxu0 %v2332
  %2490 = vmatpush.msra.mxu0 %v2331
  %2491 = vmatpush.msra.mxu0 %v2320
  %2492 = vmatpush.msra.mxu0 %v2319
  %2493 = vmatmul.f32.gmra.mxu0 %v2293
  %v2494 = vpop.f32.mrf.mxu0
  %v2495 = vadd.f32 %v2416, %v2494
  %2496 = vmatmul.f32.gmra.mxu0 %v2295
  %v2497 = vpop.f32.mrf.mxu0
  %v2498 = vadd.f32 %v2421, %v2497
  %2499 = vmatmul.f32.gmra.mxu0 %v2297
  %v2500 = vpop.f32.mrf.mxu0
  %v2501 = vadd.f32 %v2426, %v2500
  %2502 = vmatmul.f32.gmra.mxu0 %v2299
  %v2503 = vpop.f32.mrf.mxu0
  %v2504 = vadd.f32 %v2431, %v2503
  %2505 = vmatmul.f32.gmra.mxu0 %v2301
  %v2506 = vpop.f32.mrf.mxu0
  %v2507 = vadd.f32 %v2436, %v2506
  %2508 = vmatmul.f32.gmra.mxu0 %v2303
  %v2509 = vpop.f32.mrf.mxu0
  %v2510 = vadd.f32 %v2441, %v2509
  %2511 = vmatmul.f32.gmra.mxu0 %v2305
  %v2512 = vpop.f32.mrf.mxu0
  %v2513 = vadd.f32 %v2446, %v2512
  %2514 = vmatmul.f32.gmra.mxu0 %v2307
  %v2515 = vpop.f32.mrf.mxu0
  %v2516 = vadd.f32 %v2451, %v2515
  %2517 = vdwg.mxu0
  %2518 = vmatpush.msra.mxu0 0.0
  %2519 = vmatpush.msra.mxu0 0.0
  %2520 = vmatpush.msra.mxu0 0.0
  %2521 = vmatpush.msra.mxu0 0.0
  %2522 = vmatpush.msra.mxu0 0.0
  %2523 = vmatpush.msra.mxu0 0.0
  %2524 = vmatpush.msra.mxu0 0.0
  %2525 = vmatpush.msra.mxu0 0.0
  %2526 = vmatpush.msra.mxu0 0.0
  %2527 = vmatpush.msra.mxu0 0.0
  %2528 = vmatpush.msra.mxu0 0.0
  %2529 = vmatpush.msra.mxu0 0.0
  %2530 = vmatpush.msra.mxu0 0.0
  %2531 = vmatpush.msra.mxu0 0.0
  %2532 = vmatpush.msra.mxu0 %v2402
  %2533 = vmatpush.msra.mxu0 %v2401
  %2534 = vmatmul.f32.gmra.mxu0 %v2454
  %v2535 = vpop.f32.mrf.mxu0
  %v2536 = vadd.f32 %v2495, %v2535
  %2537 = vmatmul.f32.gmra.mxu0 %v2457
  %v2538 = vpop.f32.mrf.mxu0
  %v2539 = vadd.f32 %v2498, %v2538
  %2540 = vmatmul.f32.gmra.mxu0 %v2460
  %v2541 = vpop.f32.mrf.mxu0
  %v2542 = vadd.f32 %v2501, %v2541
  %2543 = vmatmul.f32.gmra.mxu0 %v2463
  %v2544 = vpop.f32.mrf.mxu0
  %v2545 = vadd.f32 %v2504, %v2544
  %2546 = vmatmul.f32.gmra.mxu0 %v2466
  %v2547 = vpop.f32.mrf.mxu0
  %v2548 = vadd.f32 %v2507, %v2547
  %2549 = vmatmul.f32.gmra.mxu0 %v2469
  %v2550 = vpop.f32.mrf.mxu0
  %v2551 = vadd.f32 %v2510, %v2550
  %2552 = vmatmul.f32.gmra.mxu0 %v2472
  %v2553 = vpop.f32.mrf.mxu0
  %v2554 = vadd.f32 %v2513, %v2553
  %2555 = vmatmul.f32.gmra.mxu0 %v2475
  %v2556 = vpop.f32.mrf.mxu0
  %v2557 = vadd.f32 %v2516, %v2556
  %2558 = vdwg.mxu0
  %2559 = vmatpush.msra.mxu0 %v2392
  %2560 = vmatpush.msra.mxu0 %v2391
  %2561 = vmatpush.msra.mxu0 %v2380
  %2562 = vmatpush.msra.mxu0 %v2379
  %2563 = vmatpush.msra.mxu0 %v2368
  %2564 = vmatpush.msra.mxu0 %v2367
  %2565 = vmatpush.msra.mxu0 %v2291
  %2566 = vmatpush.msra.mxu0 %v2289
  %2567 = vmatpush.msra.mxu0 %v2354
  %2568 = vmatpush.msra.mxu0 %v2353
  %2569 = vmatpush.msra.mxu0 %v2342
  %2570 = vmatpush.msra.mxu0 %v2341
  %2571 = vmatpush.msra.mxu0 %v2330
  %2572 = vmatpush.msra.mxu0 %v2329
  %2573 = vmatpush.msra.mxu0 %v2318
  %2574 = vmatpush.msra.mxu0 %v2317
  %2575 = vmatmul.f32.gmra.mxu0 %v2293
  %v2576 = vpop.f32.mrf.mxu0
  %v2577 = vadd.f32 %v2416, %v2576
  %2578 = vmatmul.f32.gmra.mxu0 %v2295
  %v2579 = vpop.f32.mrf.mxu0
  %v2580 = vadd.f32 %v2421, %v2579
  %2581 = vmatmul.f32.gmra.mxu0 %v2297
  %v2582 = vpop.f32.mrf.mxu0
  %v2583 = vadd.f32 %v2426, %v2582
  %2584 = vmatmul.f32.gmra.mxu0 %v2299
  %v2585 = vpop.f32.mrf.mxu0
  %v2586 = vadd.f32 %v2431, %v2585
  %2587 = vmatmul.f32.gmra.mxu0 %v2301
  %v2588 = vpop.f32.mrf.mxu0
  %v2589 = vadd.f32 %v2436, %v2588
  %2590 = vmatmul.f32.gmra.mxu0 %v2303
  %v2591 = vpop.f32.mrf.mxu0
  %v2592 = vadd.f32 %v2441, %v2591
  %2593 = vmatmul.f32.gmra.mxu0 %v2305
  %v2594 = vpop.f32.mrf.mxu0
  %v2595 = vadd.f32 %v2446, %v2594
  %2596 = vmatmul.f32.gmra.mxu0 %v2307
  %v2597 = vpop.f32.mrf.mxu0
  %v2598 = vadd.f32 %v2451, %v2597
  %2599 = vdwg.mxu0
  %2600 = vmatpush.msra.mxu0 0.0
  %2601 = vmatpush.msra.mxu0 0.0
  %2602 = vmatpush.msra.mxu0 0.0
  %2603 = vmatpush.msra.mxu0 0.0
  %2604 = vmatpush.msra.mxu0 0.0
  %2605 = vmatpush.msra.mxu0 0.0
  %2606 = vmatpush.msra.mxu0 0.0
  %2607 = vmatpush.msra.mxu0 0.0
  %2608 = vmatpush.msra.mxu0 0.0
  %2609 = vmatpush.msra.mxu0 0.0
  %2610 = vmatpush.msra.mxu0 0.0
  %2611 = vmatpush.msra.mxu0 0.0
  %2612 = vmatpush.msra.mxu0 0.0
  %2613 = vmatpush.msra.mxu0 0.0
  %2614 = vmatpush.msra.mxu0 %v2404
  %2615 = vmatpush.msra.mxu0 %v2403
  %2616 = vmatmul.f32.gmra.mxu0 %v2454
  %v2617 = vpop.f32.mrf.mxu0
  %v2618 = vadd.f32 %v2577, %v2617
  %2619 = vmatmul.f32.gmra.mxu0 %v2457
  %v2620 = vpop.f32.mrf.mxu0
  %v2621 = vadd.f32 %v2580, %v2620
  %2622 = vmatmul.f32.gmra.mxu0 %v2460
  %v2623 = vpop.f32.mrf.mxu0
  %v2624 = vadd.f32 %v2583, %v2623
  %2625 = vmatmul.f32.gmra.mxu0 %v2463
  %v2626 = vpop.f32.mrf.mxu0
  %v2627 = vadd.f32 %v2586, %v2626
  %2628 = vmatmul.f32.gmra.mxu0 %v2466
  %v2629 = vpop.f32.mrf.mxu0
  %v2630 = vadd.f32 %v2589, %v2629
  %2631 = vmatmul.f32.gmra.mxu0 %v2469
  %v2632 = vpop.f32.mrf.mxu0
  %v2633 = vadd.f32 %v2592, %v2632
  %2634 = vmatmul.f32.gmra.mxu0 %v2472
  %v2635 = vpop.f32.mrf.mxu0
  %v2636 = vadd.f32 %v2595, %v2635
  %2637 = vmatmul.f32.gmra.mxu0 %v2475
  %v2638 = vpop.f32.mrf.mxu0
  %v2639 = vadd.f32 %v2598, %v2638
  %2640 = vdwg.mxu0
  %v2641 = vmax.f32 %v2536, 0.0
  %v2642 = vmax.f32 %v2618, 0.0
  %v2643 = vmax.f32 %v2539, 0.0
  %v2644 = vmax.f32 %v2621, 0.0
  %v2645 = vmax.f32 %v2542, 0.0
  %v2646 = vmax.f32 %v2624, 0.0
  %v2647 = vmax.f32 %v2545, 0.0
  %v2648 = vmax.f32 %v2627, 0.0
  %v2649 = vld [vmem:[%s2 + $0x180] sm:$0xff]
  %v2650 = vld [vmem:[%s2 + $0x190] sm:$0xff]
  %v2651 = vld [vmem:[%s2 + $0x1a0] sm:$0xff]
  %v2652 = vld [vmem:[%s2 + $0x1b0] sm:$0xff]
  %v2653 = vld [vmem:[%s2 + $0x1c0] sm:$0xff]
  %v2654 = vld [vmem:[%s2 + $0x1d0] sm:$0xff]
  %v2655 = vld [vmem:[%s2 + $0x1e0] sm:$0xff]
  %v2656 = vld [vmem:[%s2 + $0x1f0] sm:$0xff]
  %v2657 = vunpack.c.0.s8 %v2649
  %v2658 = vunpack.c.1.s8 %v2649
  %v2659 = vunpack.c.2.s8 %v2649
  %v2660 = vunpack.c.3.s8 %v2649
  %v2661 = vunpack.c.0.s8 %v2650
  %v2662 = vunpack.c.1.s8 %v2650
  %v2663 = vunpack.c.2.s8 %v2650
  %v2664 = vunpack.c.3.s8 %v2650
  %v2665 = vunpack.c.0.s8 %v2651
  %v2666 = vunpack.c.1.s8 %v2651
  %v2667 = vunpack.c.2.s8 %v2651
  %v2668 = vunpack.c.3.s8 %v2651
  %v2669 = vunpack.c.0.s8 %v2652
  %v2670 = vunpack.c.1.s8 %v2652
  %v2671 = vunpack.c.2.s8 %v2652
  %v2672 = vunpack.c.3.s8 %v2652
  %v2673 = vunpack.c.0.s8 %v2653
  %v2674 = vunpack.c.1.s8 %v2653
  %v2675 = vunpack.c.2.s8 %v2653
  %v2676 = vunpack.c.3.s8 %v2653
  %v2677 = vunpack.c.0.s8 %v2654
  %v2678 = vunpack.c.1.s8 %v2654
  %v2679 = vunpack.c.2.s8 %v2654
  %v2680 = vunpack.c.3.s8 %v2654
  %v2681 = vunpack.c.0.s8 %v2655
  %v2682 = vunpack.c.1.s8 %v2655
  %v2683 = vunpack.c.2.s8 %v2655
  %v2684 = vunpack.c.3.s8 %v2655
  %v2685 = vunpack.c.0.s8 %v2656
  %v2686 = vunpack.c.1.s8 %v2656
  %v2687 = vunpack.c.2.s8 %v2656
  %v2688 = vunpack.c.3.s8 %v2656
  %v2689 = vcvt.s32.f32 %v2657
  %v2690 = vcvt.s32.f32 %v2658
  %v2691 = vcvt.s32.f32 %v2659
  %v2692 = vcvt.s32.f32 %v2660
  %v2693 = vcvt.s32.f32 %v2661
  %v2694 = vcvt.s32.f32 %v2662
  %v2695 = vcvt.s32.f32 %v2663
  %v2696 = vcvt.s32.f32 %v2664
  %v2697 = vcvt.s32.f32 %v2665
  %v2698 = vcvt.s32.f32 %v2666
  %v2699 = vcvt.s32.f32 %v2667
  %v2700 = vcvt.s32.f32 %v2668
  %v2701 = vcvt.s32.f32 %v2669
  %v2702 = vcvt.s32.f32 %v2670
  %v2703 = vcvt.s32.f32 %v2671
  %v2704 = vcvt.s32.f32 %v2672
  %v2705 = vcvt.s32.f32 %v2673
  %v2706 = vcvt.s32.f32 %v2674
  %v2707 = vcvt.s32.f32 %v2675
  %v2708 = vcvt.s32.f32 %v2676
  %v2709 = vcvt.s32.f32 %v2677
  %v2710 = vcvt.s32.f32 %v2678
  %v2711 = vcvt.s32.f32 %v2679
  %v2712 = vcvt.s32.f32 %v2680
  %v2713 = vcvt.s32.f32 %v2681
  %v2714 = vcvt.s32.f32 %v2682
  %v2715 = vcvt.s32.f32 %v2683
  %v2716 = vcvt.s32.f32 %v2684
  %v2717 = vcvt.s32.f32 %v2685
  %v2718 = vcvt.s32.f32 %v2686
  %v2719 = vcvt.s32.f32 %v2687
  %v2720 = vcvt.s32.f32 %v2688
  %2721 = vmatpush.msra.mxu0 %v2704
  %2722 = vmatpush.msra.mxu0 %v2703
  %2723 = vmatpush.msra.mxu0 %v2702
  %2724 = vmatpush.msra.mxu0 %v2701
  %2725 = vmatpush.msra.mxu0 %v2700
  %2726 = vmatpush.msra.mxu0 %v2699
  %2727 = vmatpush.msra.mxu0 %v2698
  %2728 = vmatpush.msra.mxu0 %v2697
  %2729 = vmatpush.msra.mxu0 %v2696
  %2730 = vmatpush.msra.mxu0 %v2695
  %2731 = vmatpush.msra.mxu0 %v2694
  %2732 = vmatpush.msra.mxu0 %v2693
  %2733 = vmatpush.msra.mxu0 %v2692
  %2734 = vmatpush.msra.mxu0 %v2691
  %2735 = vmatpush.msra.mxu0 %v2690
  %2736 = vmatpush.msra.mxu0 %v2689
  %2737 = vmatmul.f32.gmra.mxu0 %v2641
  %v2738 = vpop.f32.mrf.mxu0
  %v2739 = vadd.f32 0.0, %v2738
  %2740 = vmatmul.f32.gmra.mxu0 %v2643
  %v2741 = vpop.f32.mrf.mxu0
  %v2742 = vadd.f32 0.0, %v2741
  %2743 = vmatmul.f32.gmra.mxu0 %v2645
  %v2744 = vpop.f32.mrf.mxu0
  %v2745 = vadd.f32 0.0, %v2744
  %2746 = vmatmul.f32.gmra.mxu0 %v2647
  %v2747 = vpop.f32.mrf.mxu0
  %v2748 = vadd.f32 0.0, %v2747
  %2749 = vmatmul.f32.gmra.mxu0 %v2548
  %v2750 = vpop.f32.mrf.mxu0
  %v2751 = vadd.f32 0.0, %v2750
  %2752 = vmatmul.f32.gmra.mxu0 %v2551
  %v2753 = vpop.f32.mrf.mxu0
  %v2754 = vadd.f32 0.0, %v2753
  %2755 = vmatmul.f32.gmra.mxu0 %v2554
  %v2756 = vpop.f32.mrf.mxu0
  %v2757 = vadd.f32 0.0, %v2756
  %2758 = vmatmul.f32.gmra.mxu0 %v2557
  %v2759 = vpop.f32.mrf.mxu0
  %v2760 = vadd.f32 0.0, %v2759
  %2761 = vdwg.mxu0
  %2762 = vmatpush.msra.mxu0 %v2720
  %2763 = vmatpush.msra.mxu0 %v2719
  %2764 = vmatpush.msra.mxu0 %v2718
  %2765 = vmatpush.msra.mxu0 %v2717
  %2766 = vmatpush.msra.mxu0 %v2716
  %2767 = vmatpush.msra.mxu0 %v2715
  %2768 = vmatpush.msra.mxu0 %v2714
  %2769 = vmatpush.msra.mxu0 %v2713
  %2770 = vmatpush.msra.mxu0 %v2712
  %2771 = vmatpush.msra.mxu0 %v2711
  %2772 = vmatpush.msra.mxu0 %v2710
  %2773 = vmatpush.msra.mxu0 %v2709
  %2774 = vmatpush.msra.mxu0 %v2708
  %2775 = vmatpush.msra.mxu0 %v2707
  %2776 = vmatpush.msra.mxu0 %v2706
  %2777 = vmatpush.msra.mxu0 %v2705
  %2778 = vmatmul.f32.gmra.mxu0 %v2642
  %v2779 = vpop.f32.mrf.mxu0
  %v2780 = vadd.f32 %v2739, %v2779
  %2781 = vmatmul.f32.gmra.mxu0 %v2644
  %v2782 = vpop.f32.mrf.mxu0
  %v2783 = vadd.f32 %v2742, %v2782
  %2784 = vmatmul.f32.gmra.mxu0 %v2646
  %v2785 = vpop.f32.mrf.mxu0
  %v2786 = vadd.f32 %v2745, %v2785
  %2787 = vmatmul.f32.gmra.mxu0 %v2648
  %v2788 = vpop.f32.mrf.mxu0
  %v2789 = vadd.f32 %v2748, %v2788
  %2790 = vmatmul.f32.gmra.mxu0 %v2630
  %v2791 = vpop.f32.mrf.mxu0
  %v2792 = vadd.f32 %v2751, %v2791
  %2793 = vmatmul.f32.gmra.mxu0 %v2633
  %v2794 = vpop.f32.mrf.mxu0
  %v2795 = vadd.f32 %v2754, %v2794
  %2796 = vmatmul.f32.gmra.mxu0 %v2636
  %v2797 = vpop.f32.mrf.mxu0
  %v2798 = vadd.f32 %v2757, %v2797
  %2799 = vmatmul.f32.gmra.mxu0 %v2639
  %v2800 = vpop.f32.mrf.mxu0
  %v2801 = vadd.f32 %v2760, %v2800
  %2802 = vdwg.mxu0
  %v2803 = vld [vmem:[%s1 + $0x198] sm:$0xff]
  %v2804 = vld [vmem:[%s1 + $0x1a0] sm:$0xff]
  %v2805 = vld [vmem:[%s1 + $0x1a8] sm:$0xff]
  %v2806 = vld [vmem:[%s1 + $0x1b0] sm:$0xff]
  %v2807 = vld [vmem:[%s1 + $0x1b8] sm:$0xff]
  %v2808 = vld [vmem:[%s1 + $0x1c0] sm:$0xff]
  %v2809 = vld [vmem:[%s1 + $0x1c8] sm:$0xff]
  %v2810 = vld [vmem:[%s1 + $0x1d0] sm:$0xff]
  %v2811 = vld [vmem:[%s1 + $0x1d8] sm:$0xff]
  %v2812 = vld [vmem:[%s1 + $0x1e0] sm:$0xff]
  %v2813 = vld [vmem:[%s1 + $0x1e8] sm:$0xff]
  %v2814 = vld [vmem:[%s1 + $0x1f0] sm:$0xff]
  %2815 = vrot.lane.b32.xlu0 %v2780, 7
  %v2816 = vpop.permute.xlu0 %2815
  %2817 = vrot.lane.b32.xlu0 %v2783, 7
  %v2818 = vpop.permute.xlu0 %2817
  %2819 = vrot.lane.b32.xlu0 %v2786, 7
  %v2820 = vpop.permute.xlu0 %2819
  %2821 = vrot.lane.b32.xlu0 %v2789, 7
  %v2822 = vpop.permute.xlu0 %2821
  %2823 = vrot.lane.b32.xlu0 %v2780, 6
  %v2824 = vpop.permute.xlu0 %2823
  %2825 = vrot.lane.b32.xlu0 %v2783, 6
  %v2826 = vpop.permute.xlu0 %2825
  %2827 = vrot.lane.b32.xlu0 %v2786, 6
  %v2828 = vpop.permute.xlu0 %2827
  %2829 = vrot.lane.b32.xlu0 %v2789, 6
  %v2830 = vpop.permute.xlu0 %2829
  %2831 = vrot.lane.b32.xlu0 %v2780, 5
  %v2832 = vpop.permute.xlu0 %2831
  %2833 = vrot.lane.b32.xlu0 %v2783, 5
  %v2834 = vpop.permute.xlu0 %2833
  %2835 = vrot.lane.b32.xlu0 %v2786, 5
  %v2836 = vpop.permute.xlu0 %2835
  %2837 = vrot.lane.b32.xlu0 %v2789, 5
  %v2838 = vpop.permute.xlu0 %2837
  %2839 = vrot.lane.b32.xlu0 %v2780, 1
  %v2840 = vpop.permute.xlu0 %2839
  %2841 = vrot.lane.b32.xlu0 %v2783, 1
  %v2842 = vpop.permute.xlu0 %2841
  %2843 = vrot.lane.b32.xlu0 %v2786, 1
  %v2844 = vpop.permute.xlu0 %2843
  %2845 = vrot.lane.b32.xlu0 %v2789, 1
  %v2846 = vpop.permute.xlu0 %2845
  %2847 = vrot.lane.b32.xlu0 %v2780, 127
  %v2848 = vpop.permute.xlu0 %2847
  %2849 = vrot.lane.b32.xlu0 %v2783, 127
  %v2850 = vpop.permute.xlu0 %2849
  %2851 = vrot.lane.b32.xlu0 %v2786, 127
  %v2852 = vpop.permute.xlu0 %2851
  %2853 = vrot.lane.b32.xlu0 %v2789, 127
  %v2854 = vpop.permute.xlu0 %2853
  %2855 = vrot.lane.b32.xlu0 %v2780, 123
  %v2856 = vpop.permute.xlu0 %2855
  %2857 = vrot.lane.b32.xlu0 %v2783, 123
  %v2858 = vpop.permute.xlu0 %2857
  %2859 = vrot.lane.b32.xlu0 %v2786, 123
  %v2860 = vpop.permute.xlu0 %2859
  %2861 = vrot.lane.b32.xlu0 %v2789, 123
  %v2862 = vpop.permute.xlu0 %2861
  %2863 = vrot.lane.b32.xlu0 %v2780, 122
  %v2864 = vpop.permute.xlu0 %2863
  %2865 = vrot.lane.b32.xlu0 %v2783, 122
  %v2866 = vpop.permute.xlu0 %2865
  %2867 = vrot.lane.b32.xlu0 %v2786, 122
  %v2868 = vpop.permute.xlu0 %2867
  %2869 = vrot.lane.b32.xlu0 %v2789, 122
  %v2870 = vpop.permute.xlu0 %2869
  %2871 = vrot.lane.b32.xlu0 %v2780, 121
  %v2872 = vpop.permute.xlu0 %2871
  %2873 = vrot.lane.b32.xlu0 %v2783, 121
  %v2874 = vpop.permute.xlu0 %2873
  %2875 = vrot.lane.b32.xlu0 %v2786, 121
  %v2876 = vpop.permute.xlu0 %2875
  %2877 = vrot.lane.b32.xlu0 %v2789, 121
  %v2878 = vpop.permute.xlu0 %2877
  %2880 = vset.pattern.permute.xlu0 32
  %2881 = vperm.xlu0 %2880, %v2805
  %v2882 = vpop.permute.xlu0 %2881
  %2885 = vset.pattern.permute.xlu0 32
  %2886 = vperm.xlu0 %2885, %v2808
  %v2887 = vpop.permute.xlu0 %2886
  %2890 = vset.pattern.permute.xlu0 32
  %2891 = vperm.xlu0 %2890, %v2811
  %v2892 = vpop.permute.xlu0 %2891
  %2895 = vset.pattern.permute.xlu0 32
  %2896 = vperm.xlu0 %2895, %v2814
  %v2897 = vpop.permute.xlu0 %2896
  %vm2899 = vcmask 261120
  %v2900 = vsel %vm2899, %v2805, 0
  %v2902 = vsel %vm2899, %v2808, 0
  %v2904 = vsel %vm2899, %v2811, 0
  %v2906 = vsel %vm2899, %v2814, 0
  %2908 = vmatpush.msra.mxu0 %v2846
  %2909 = vmatpush.msra.mxu0 %v2844
  %2910 = vmatpush.msra.mxu0 %v2842
  %2911 = vmatpush.msra.mxu0 %v2840
  %2912 = vmatpush.msra.mxu0 %v2838
  %2913 = vmatpush.msra.mxu0 %v2836
  %2914 = vmatpush.msra.mxu0 %v2834
  %2915 = vmatpush.msra.mxu0 %v2832
  %2916 = vmatpush.msra.mxu0 %v2830
  %2917 = vmatpush.msra.mxu0 %v2828
  %2918 = vmatpush.msra.mxu0 %v2826
  %2919 = vmatpush.msra.mxu0 %v2824
  %2920 = vmatpush.msra.mxu0 %v2822
  %2921 = vmatpush.msra.mxu0 %v2820
  %2922 = vmatpush.msra.mxu0 %v2818
  %2923 = vmatpush.msra.mxu0 %v2816
  %2924 = vmatmul.f32.gmra.mxu0 %v2803
  %v2925 = vpop.f32.mrf.mxu0
  %v2926 = vadd.f32 %v2882, %v2925
  %2927 = vmatmul.f32.gmra.mxu0 %v2806
  %v2928 = vpop.f32.mrf.mxu0
  %v2929 = vadd.f32 %v2887, %v2928
  %2930 = vmatmul.f32.gmra.mxu0 %v2809
  %v2931 = vpop.f32.mrf.mxu0
  %v2932 = vadd.f32 %v2892, %v2931
  %2933 = vmatmul.f32.gmra.mxu0 %v2812
  %v2934 = vpop.f32.mrf.mxu0
  %v2935 = vadd.f32 %v2897, %v2934
  %2936 = vdwg.mxu0
  %2937 = vmatpush.msra.mxu0 %v2870
  %2938 = vmatpush.msra.mxu0 %v2868
  %2939 = vmatpush.msra.mxu0 %v2866
  %2940 = vmatpush.msra.mxu0 %v2864
  %2941 = vmatpush.msra.mxu0 %v2862
  %2942 = vmatpush.msra.mxu0 %v2860
  %2943 = vmatpush.msra.mxu0 %v2858
  %2944 = vmatpush.msra.mxu0 %v2856
  %2945 = vmatpush.msra.mxu0 %v2854
  %2946 = vmatpush.msra.mxu0 %v2852
  %2947 = vmatpush.msra.mxu0 %v2850
  %2948 = vmatpush.msra.mxu0 %v2848
  %2949 = vmatpush.msra.mxu0 %v2789
  %2950 = vmatpush.msra.mxu0 %v2786
  %2951 = vmatpush.msra.mxu0 %v2783
  %2952 = vmatpush.msra.mxu0 %v2780
  %2953 = vmatmul.f32.gmra.mxu0 %v2804
  %v2954 = vpop.f32.mrf.mxu0
  %v2955 = vadd.f32 %v2926, %v2954
  %2956 = vmatmul.f32.gmra.mxu0 %v2807
  %v2957 = vpop.f32.mrf.mxu0
  %v2958 = vadd.f32 %v2929, %v2957
  %2959 = vmatmul.f32.gmra.mxu0 %v2810
  %v2960 = vpop.f32.mrf.mxu0
  %v2961 = vadd.f32 %v2932, %v2960
  %2962 = vmatmul.f32.gmra.mxu0 %v2813
  %v2963 = vpop.f32.mrf.mxu0
  %v2964 = vadd.f32 %v2935, %v2963
  %2965 = vdwg.mxu0
  %2966 = vmatpush.msra.mxu0 0.0
  %2967 = vmatpush.msra.mxu0 0.0
  %2968 = vmatpush.msra.mxu0 0.0
  %2969 = vmatpush.msra.mxu0 0.0
  %2970 = vmatpush.msra.mxu0 0.0
  %2971 = vmatpush.msra.mxu0 0.0
  %2972 = vmatpush.msra.mxu0 0.0
  %2973 = vmatpush.msra.mxu0 0.0
  %2974 = vmatpush.msra.mxu0 0.0
  %2975 = vmatpush.msra.mxu0 0.0
  %2976 = vmatpush.msra.mxu0 0.0
  %2977 = vmatpush.msra.mxu0 0.0
  %2978 = vmatpush.msra.mxu0 %v2878
  %2979 = vmatpush.msra.mxu0 %v2876
  %2980 = vmatpush.msra.mxu0 %v2874
  %2981 = vmatpush.msra.mxu0 %v2872
  %2982 = vmatmul.f32.gmra.mxu0 %v2900
  %v2983 = vpop.f32.mrf.mxu0
  %v2984 = vadd.f32 %v2955, %v2983
  %2985 = vmatmul.f32.gmra.mxu0 %v2902
  %v2986 = vpop.f32.mrf.mxu0
  %v2987 = vadd.f32 %v2958, %v2986
  %2988 = vmatmul.f32.gmra.mxu0 %v2904
  %v2989 = vpop.f32.mrf.mxu0
  %v2990 = vadd.f32 %v2961, %v2989
  %2991 = vmatmul.f32.gmra.mxu0 %v2906
  %v2992 = vpop.f32.mrf.mxu0
  %v2993 = vadd.f32 %v2964, %v2992
  %2994 = vdwg.mxu0
  %v2995 = vmul.f32 %v2984, %v2292
  %v2996 = vmul.f32 %v2987, %v2292
  %v2997 = vmul.f32 %v2990, %v2292
  %v2998 = vmul.f32 %v2993, %v2292
  %v2999 = vadd.f32 %v2792, %v2995
  %v3000 = vadd.f32 %v2795, %v2996
  %v3001 = vadd.f32 %v2798, %v2997
  %v3002 = vadd.f32 %v2801, %v2998
  %v3003 = vmax.f32 %v2999, 0.0
  %v3004 = vmax.f32 %v3000, 0.0
  %v3005 = vmax.f32 %v3001, 0.0
  %v3006 = vmax.f32 %v3002, 0.0
  %v3007 = vld [vmem:[%s2 + $0x200] sm:$0xff]
  %v3008 = vld [vmem:[%s2 + $0x210] sm:$0xff]
  %v3009 = vld [vmem:[%s2 + $0x220] sm:$0xff]
  %v3010 = vld [vmem:[%s2 + $0x230] sm:$0xff]
  %v3011 = vunpack.c.0.s8 %v3007
  %v3012 = vunpack.c.1.s8 %v3007
  %v3013 = vunpack.c.2.s8 %v3007
  %v3014 = vunpack.c.3.s8 %v3007
  %v3015 = vunpack.c.0.s8 %v3008
  %v3016 = vunpack.c.1.s8 %v3008
  %v3017 = vunpack.c.2.s8 %v3008
  %v3018 = vunpack.c.3.s8 %v3008
  %v3019 = vunpack.c.0.s8 %v3009
  %v3020 = vunpack.c.1.s8 %v3009
  %v3021 = vunpack.c.2.s8 %v3009
  %v3022 = vunpack.c.3.s8 %v3009
  %v3023 = vunpack.c.0.s8 %v3010
  %v3024 = vunpack.c.1.s8 %v3010
  %v3025 = vunpack.c.2.s8 %v3010
  %v3026 = vunpack.c.3.s8 %v3010
  %v3027 = vcvt.s32.f32 %v3011
  %v3028 = vcvt.s32.f32 %v3012
  %v3029 = vcvt.s32.f32 %v3013
  %v3030 = vcvt.s32.f32 %v3014
  %v3031 = vcvt.s32.f32 %v3015
  %v3032 = vcvt.s32.f32 %v3016
  %v3033 = vcvt.s32.f32 %v3017
  %v3034 = vcvt.s32.f32 %v3018
  %v3035 = vcvt.s32.f32 %v3019
  %v3036 = vcvt.s32.f32 %v3020
  %v3037 = vcvt.s32.f32 %v3021
  %v3038 = vcvt.s32.f32 %v3022
  %v3039 = vcvt.s32.f32 %v3023
  %v3040 = vcvt.s32.f32 %v3024
  %v3041 = vcvt.s32.f32 %v3025
  %v3042 = vcvt.s32.f32 %v3026
  %3043 = vmatpush.msra.mxu0 %v3042
  %3044 = vmatpush.msra.mxu0 %v3041
  %3045 = vmatpush.msra.mxu0 %v3040
  %3046 = vmatpush.msra.mxu0 %v3039
  %3047 = vmatpush.msra.mxu0 %v3038
  %3048 = vmatpush.msra.mxu0 %v3037
  %3049 = vmatpush.msra.mxu0 %v3036
  %3050 = vmatpush.msra.mxu0 %v3035
  %3051 = vmatpush.msra.mxu0 %v3034
  %3052 = vmatpush.msra.mxu0 %v3033
  %3053 = vmatpush.msra.mxu0 %v3032
  %3054 = vmatpush.msra.mxu0 %v3031
  %3055 = vmatpush.msra.mxu0 %v3030
  %3056 = vmatpush.msra.mxu0 %v3029
  %3057 = vmatpush.msra.mxu0 %v3028
  %3058 = vmatpush.msra.mxu0 %v3027
  %3059 = vmatmul.f32.gmra.mxu0 %v3003
  %v3060 = vpop.f32.mrf.mxu0
  %v3061 = vadd.f32 0.0, %v3060
  %3062 = vmatmul.f32.gmra.mxu0 %v3004
  %v3063 = vpop.f32.mrf.mxu0
  %v3064 = vadd.f32 0.0, %v3063
  %3065 = vmatmul.f32.gmra.mxu0 %v3005
  %v3066 = vpop.f32.mrf.mxu0
  %v3067 = vadd.f32 0.0, %v3066
  %3068 = vmatmul.f32.gmra.mxu0 %v3006
  %v3069 = vpop.f32.mrf.mxu0
  %v3070 = vadd.f32 0.0, %v3069
  %3071 = vdwg.mxu0
  %v3072 = vld [vmem:[%s1 + $0x1f8] sm:$0xff]
  %v3073 = vld [vmem:[%s1 + $0x210] sm:$0xff]
  %v3074 = vld [vmem:[%s1 + $0x208] sm:$0xff]
  %v3075 = vld [vmem:[%s1 + $0x220] sm:$0xff]
  %3077 = vset.pattern.permute.xlu0 32
  %3078 = vperm.xlu0 %3077, %v3074
  %v3079 = vpop.permute.xlu0 %3078
  %3082 = vset.pattern.permute.xlu0 32
  %3083 = vperm.xlu0 %3082, %v3075
  %v3084 = vpop.permute.xlu0 %3083
  %v3087 = vsel %vm2899, %v3072, 0
  %v3090 = vsel %vm2899, %v3073, 0
  %3092 = vmatpush.msra.mxu0 0.0
  %3093 = vmatpush.msra.mxu0 0.0
  %3094 = vmatpush.msra.mxu0 0.0
  %3095 = vmatpush.msra.mxu0 0.0
  %3096 = vmatpush.msra.mxu0 0.0
  %3097 = vmatpush.msra.mxu0 0.0
  %3098 = vmatpush.msra.mxu0 0.0
  %3099 = vmatpush.msra.mxu0 0.0
  %3100 = vmatpush.msra.mxu0 0.0
  %3101 = vmatpush.msra.mxu0 0.0
  %3102 = vmatpush.msra.mxu0 0.0
  %3103 = vmatpush.msra.mxu0 0.0
  %3104 = vmatpush.msra.mxu0 %v3070
  %3105 = vmatpush.msra.mxu0 %v3067
  %3106 = vmatpush.msra.mxu0 %v3064
  %3107 = vmatpush.msra.mxu0 %v3061
  %3108 = vmatmul.f32.gmra.mxu0 %v3087
  %v3109 = vpop.f32.mrf.mxu0
  %v3110 = vadd.f32 %v3079, %v3109
  %3111 = vmatmul.f32.gmra.mxu0 %v3090
  %v3112 = vpop.f32.mrf.mxu0
  %v3113 = vadd.f32 %v3084, %v3112
  %3114 = vdwg.mxu0
  %3115 = vst [vmem:[%s3] sm:$0xff] %v3110
  %3116 = vst [vmem:[%s3 + $0x8] sm:$0xff] %v3113
  // Predicated region
  $region14: #{forward.1} parent=0 // pred_check
    _
  $region15: #{forward.1} parent=0 // pred_check_branch
    %3118 = sbr.rel (0) target = $region17
  $region16: #{forward.1} parent=0 // pred_region
    _
  $region17: #{forward.1} parent=0 // pred_fallthru
    _
  // Predicated region
  $region18: #{forward.1} parent=0 // pred_check
    _
  $region19: #{forward.1} parent=0 // pred_check_branch
    %3120 = sbr.rel (0) target = $region21
  $region20: #{forward.1} parent=0 // pred_region
    _
  $region21: #{forward.1} parent=0 // pred_fallthru
    _

</llo_original>
